<compile_context>
chip_gen: v5e
topology: v5e:2x2
jax: 0.10.0
libtpu: 0.0.40
codegen_flags: <defaults>
</compile_context>

<pallas_src>
import functools

import jax
import jax.numpy as jnp
from jax.experimental import pallas as pl
from jax.experimental.pallas import tpu as pltpu


# ----------------------------------------------------------------------------- kernel
def transformer_block_kernel(v_ref, k_ref, q_ref,
                             wv_ref, wk_ref, wq_ref,
                             wo_ref, bo_ref,
                             s1_ref, t1_ref,
                             w1_ref, b1_ref,
                             w2_ref, b2_ref,
                             s2_ref, t2_ref,
                             out_ref,
                             attn_sc,
                             *, seq_len, heads):
    """One grid step processes Bt batch elements as a (Bt*seq_len, E) row slab."""
    rows, embed = v_ref.shape                 # rows = Bt * seq_len
    bt = rows // seq_len
    d = embed // heads
    mxu_dtype = v_ref.dtype                   # bf16 (deployment) or f32 (strict-check path)

    # Fused per-head Q/K/V projections: one (rows, E) x (E, E) MXU matmul each
    # (block-diagonal weights built once in prepare_params; 1/sqrt(d) folded into Wq).
    vp = jnp.dot(v_ref[...], wv_ref[...], preferred_element_type=jnp.float32)
    kp = jnp.dot(k_ref[...], wk_ref[...], preferred_element_type=jnp.float32)
    qp = jnp.dot(q_ref[...], wq_ref[...], preferred_element_type=jnp.float32)

    qp = qp.reshape(bt, seq_len, embed)
    kp = kp.reshape(bt, seq_len, embed)
    vp = vp.reshape(bt, seq_len, embed)

    # Multi-head attention: static head loop (heads is tiny, compile-time constant);
    # each head is a batched-over-Bt contraction and lands in a VMEM scratch slab
    # (no concatenate holding all head outputs live).
    for h in range(heads):
        sl = slice(h * d, (h + 1) * d)
        qh = qp[:, :, sl].astype(mxu_dtype)                      # (Bt, S, D)
        kh = kp[:, :, sl].astype(mxu_dtype)
        vh = vp[:, :, sl].astype(mxu_dtype)
        s = jnp.einsum("bqd,bkd->bqk", qh, kh,
                       preferred_element_type=jnp.float32)       # (Bt, S, S), f32
        m = jnp.max(s, axis=-1, keepdims=True)
        e = jnp.exp(s - m)
        p = e * pl.reciprocal(jnp.sum(e, axis=-1, keepdims=True), approx=True)  # EUP
        oh = jnp.einsum("bqk,bkd->bqd", p.astype(mxu_dtype), vh,
                        preferred_element_type=jnp.float32)      # (Bt, S, D)
        attn_sc[:, sl] = oh.reshape(rows, d).astype(attn_sc.dtype)

    # fc_out over the whole (rows, E) slab.
    x = jnp.dot(attn_sc[...], wo_ref[...], preferred_element_type=jnp.float32) + bo_ref[...]

    # norm1 (LayerNorm over E) + eval-mode BatchNorm1, folded into scale/shift.
    mu = jnp.mean(x, axis=-1, keepdims=True)
    var = jnp.mean(jnp.square(x - mu), axis=-1, keepdims=True)
    x = (x - mu) * jax.lax.rsqrt(var + 1e-5) * s1_ref[...] + t1_ref[...]
    # Dropout(p=0.1): identity in eval mode.

    # feed_forward: Linear(E, 2E) -> ReLU -> Linear(2E, E); bf16 MXU inputs, f32 accumulate.
    h1 = jnp.dot(x.astype(mxu_dtype), w1_ref[...],
                 preferred_element_type=jnp.float32) + b1_ref[...]
    h1 = jnp.maximum(h1, 0.0)
    f = jnp.dot(h1.astype(mxu_dtype), w2_ref[...],
                preferred_element_type=jnp.float32) + b2_ref[...]

    # norm2 + eval-mode BatchNorm2, folded.
    mu2 = jnp.mean(f, axis=-1, keepdims=True)
    var2 = jnp.mean(jnp.square(f - mu2), axis=-1, keepdims=True)
    y = (f - mu2) * jax.lax.rsqrt(var2 + 1e-5) * s2_ref[...] + t2_ref[...]
    out_ref[...] = y.astype(out_ref.dtype)


# ----------------------------------------------------------------------------- param prep
def _fold_norms(ln_g, ln_b, bn_g, bn_b, bn_rm, bn_rv, eps=1e-5):
    """Fold LayerNorm affine + eval-mode BatchNorm into one per-feature scale/shift."""
    s_bn = bn_g / jnp.sqrt(bn_rv + eps)
    scale = ln_g * s_bn
    shift = ln_b * s_bn + (bn_b - bn_rm * s_bn)
    return scale.reshape(1, -1).astype(jnp.float32), shift.reshape(1, -1).astype(jnp.float32)


def prepare_params(params, *, heads, mxu_dtype=jnp.bfloat16):
    """One-time parameter prep, hoisted out of the forward path (cache per checkpoint):
       * per-head Q/K/V weights -> block-diagonal (E, E) so each projection is ONE matmul
         (right trade-off while head_dim << MXU K; drop once head_dim >= 128),
       * 1/sqrt(head_dim) softmax scale folded into Wq,
       * LayerNorm affine + eval-mode BatchNorm folded into a single scale/shift,
       * MXU-side weights cast to `mxu_dtype` (bf16 halves VMEM/HBM footprint)."""
    e = params["wo_t"].shape[0]
    d = params["wv_t"].shape[0]
    inv_sqrt_d = 1.0 / (d ** 0.5)
    eye_h = jnp.eye(heads, dtype=jnp.float32)
    prep = {
        "wv_bd": jnp.kron(eye_h, params["wv_t"]).astype(mxu_dtype),
        "wk_bd": jnp.kron(eye_h, params["wk_t"]).astype(mxu_dtype),
        "wq_bd": (jnp.kron(eye_h, params["wq_t"]) * inv_sqrt_d).astype(mxu_dtype),
        "wo": params["wo_t"].astype(mxu_dtype),
        "bo": params["bo"].reshape(1, e).astype(jnp.float32),
        "w1": params["w1_t"].astype(mxu_dtype),
        "b1": params["b1"].reshape(1, 2 * e).astype(jnp.float32),
        "w2": params["w2_t"].astype(mxu_dtype),
        "b2": params["b2"].reshape(1, e).astype(jnp.float32),
    }
    prep["s1"], prep["t1"] = _fold_norms(params["ln1_g"], params["ln1_b"],
                                         params["bn1_g"], params["bn1_b"],
                                         params["bn1_rm"], params["bn1_rv"])
    prep["s2"], prep["t2"] = _fold_norms(params["ln2_g"], params["ln2_b"],
                                         params["bn2_g"], params["bn2_b"],
                                         params["bn2_rm"], params["bn2_rv"])
    return prep


# ----------------------------------------------------------------------------- wrapper
def _pick_block_batch(n, s, max_rows=256):
    """Largest divisor Bt of n with Bt*s <= max_rows (MXU row target), keeping the grid
    at >= 2 steps whenever n > 1 so both v7x TensorCores get work."""
    best = 1
    for bt in range(1, n + 1):
        if bt * s > max_rows:
            break
        if n % bt:
            continue
        if n // bt >= 2 or n == 1:
            best = bt
    return best


def transformer_block_forward(value, key_, query, prep, *, heads, block_batch=None):
    n, s, e = query.shape
    bt = block_batch if block_batch is not None else _pick_block_batch(n, s)
    assert n % bt == 0, "block_batch must divide the batch size"
    rows = bt * s
    mxu_dtype = prep["wq_bd"].dtype

    # Present inputs/outputs as 2-D (N*S, E) slabs (row-dense matmuls, lane-dense stores);
    # casting activations to the MXU dtype also halves HBM->VMEM traffic when bf16.
    v2 = value.reshape(n * s, e).astype(mxu_dtype)
    k2 = key_.reshape(n * s, e).astype(mxu_dtype)
    q2 = query.reshape(n * s, e).astype(mxu_dtype)

    seq_spec = pl.BlockSpec((rows, e), lambda i: (i, 0))
    kernel = functools.partial(transformer_block_kernel, seq_len=s, heads=heads)

    def run(single_buffer_weights):
        # Grid-invariant weights: constant index_map keeps them VMEM-resident; with
        # single_buffer_weights the pointless second pipeline buffer is dropped too,
        # which matters for the v7x 64 MiB VMEM budget at large E.
        if single_buffer_weights:
            mode = pl.Buffered(1)
            def wspec(shape):
                return pl.BlockSpec(shape, lambda i: (0, 0), pipeline_mode=mode)
        else:
            def wspec(shape):
                return pl.BlockSpec(shape, lambda i: (0, 0))

        return pl.pallas_call(
            kernel,
            out_shape=jax.ShapeDtypeStruct((n * s, e), jnp.float32),
            grid=(n // bt,),
            in_specs=[
                seq_spec, seq_spec, seq_spec,                    # value, key, query slabs
                wspec((e, e)), wspec((e, e)), wspec((e, e)),     # block-diag Wv, Wk, Wq
                wspec((e, e)), wspec((1, e)),                    # fc_out W, b
                wspec((1, e)), wspec((1, e)),                    # folded norm1 scale, shift
                wspec((e, 2 * e)), wspec((1, 2 * e)),            # FFN layer 1
                wspec((2 * e, e)), wspec((1, e)),                # FFN layer 2
                wspec((1, e)), wspec((1, e)),                    # folded norm2 scale, shift
            ],
            out_specs=seq_spec,
            scratch_shapes=[pltpu.VMEM((rows, e), mxu_dtype)],   # attention output slab
            compiler_params=pltpu.CompilerParams(
                dimension_semantics=("parallel",)),              # shard grid over v7x's 2 TCs
        )(v2, k2, q2,
          prep["wv_bd"], prep["wk_bd"], prep["wq_bd"],
          prep["wo"], prep["bo"],
          prep["s1"], prep["t1"],
          prep["w1"], prep["b1"],
          prep["w2"], prep["b2"],
          prep["s2"], prep["t2"])

    try:
        out2 = run(single_buffer_weights=True)
    except Exception:
        # Fallback if this JAX version rejects pl.Buffered(1); correctness unaffected.
        out2 = run(single_buffer_weights=False)
    return out2.reshape(n, s, e)


# ----------------------------------------------------------------------------- params / reference
def init_params(key, embed_size, heads):
    E = embed_size
    D = E // heads
    ks = iter(jax.random.split(key, 24))

    def lin_w(k, fan_in, fan_out):
        bound = 1.0 / (fan_in ** 0.5)
        return jax.random.uniform(k, (fan_in, fan_out), jnp.float32, -bound, bound)

    def lin_b(k, fan_in, fan_out):
        bound = 1.0 / (fan_in ** 0.5)
        return jax.random.uniform(k, (fan_out,), jnp.float32, -bound, bound)

    p = {}
    p["wv_t"] = lin_w(next(ks), D, D)          # stored (in, out) = torch W.T
    p["wk_t"] = lin_w(next(ks), D, D)
    p["wq_t"] = lin_w(next(ks), D, D)
    p["wo_t"] = lin_w(next(ks), E, E)
    p["bo"] = lin_b(next(ks), E, E)
    p["w1_t"] = lin_w(next(ks), E, 2 * E)
    p["b1"] = lin_b(next(ks), E, 2 * E)
    p["w2_t"] = lin_w(next(ks), 2 * E, E)
    p["b2"] = lin_b(next(ks), 2 * E, E)
    # Randomized (deterministic) norm parameters so the folding is actually exercised.
    for name in ("ln1", "ln2"):
        p[name + "_g"] = 1.0 + 0.1 * jax.random.normal(next(ks), (E,), jnp.float32)
        p[name + "_b"] = 0.1 * jax.random.normal(next(ks), (E,), jnp.float32)
    for name in ("bn1", "bn2"):
        p[name + "_g"] = 1.0 + 0.1 * jax.random.normal(next(ks), (E,), jnp.float32)
        p[name + "_b"] = 0.1 * jax.random.normal(next(ks), (E,), jnp.float32)
        p[name + "_rm"] = 0.1 * jax.random.normal(next(ks), (E,), jnp.float32)
        p[name + "_rv"] = jax.random.uniform(next(ks), (E,), jnp.float32, 0.5, 1.5)
    return p


def reference_forward(value, key_, query, p, *, heads):
    """Plain-JAX eval-mode reference matching the PyTorch module."""
    N, S, E = query.shape
    D = E // heads

    def proj(x, w_t):
        return x.reshape(N, S, heads, D) @ w_t

    vr = proj(value, p["wv_t"])
    kr = proj(key_, p["wk_t"])
    qr = proj(query, p["wq_t"])
    scores = jnp.einsum("nqhd,nkhd->nhqk", qr, kr) / (D ** 0.5)
    attn = jax.nn.softmax(scores, axis=3)
    out = jnp.einsum("nhql,nlhd->nqhd", attn, vr).reshape(N, S, E)
    out = out @ p["wo_t"] + p["bo"]

    def layer_norm(x, g, b, eps=1e-5):
        mu = jnp.mean(x, -1, keepdims=True)
        var = jnp.mean(jnp.square(x - mu), -1, keepdims=True)
        return (x - mu) / jnp.sqrt(var + eps) * g + b

    def batch_norm_eval(x, g, b, rm, rv, eps=1e-5):
        return (x - rm) / jnp.sqrt(rv + eps) * g + b

    x = batch_norm_eval(layer_norm(out, p["ln1_g"], p["ln1_b"]),
                        p["bn1_g"], p["bn1_b"], p["bn1_rm"], p["bn1_rv"])
    h = jnp.maximum(x @ p["w1_t"] + p["b1"], 0.0)
    f = h @ p["w2_t"] + p["b2"]
    return batch_norm_eval(layer_norm(f, p["ln2_g"], p["ln2_b"]),
                           p["bn2_g"], p["bn2_b"], p["bn2_rm"], p["bn2_rv"])


# ----------------------------------------------------------------------------- main
if __name__ == "__main__":
    # Small toy shapes; N=4 so the auto-picked Bt=2 gives a 2-step "parallel" grid.
    N, S, E, H = 4, 8, 32, 4   # batch, seq, embed_size, heads (head_dim = 8)

    key = jax.random.PRNGKey(0)
    k_params, k_v, k_k, k_q = jax.random.split(key, 4)
    params = init_params(k_params, E, H)
    value = jax.random.normal(k_v, (N, S, E), jnp.float32)
    key_t = jax.random.normal(k_k, (N, S, E), jnp.float32)
    query = jax.random.normal(k_q, (N, S, E), jnp.float32)

    ref = reference_forward(value, key_t, query, params, heads=H)

    # 1) Strict numerics check: f32 MXU inputs (only approx-reciprocal / op-order noise).
    prep_f32 = prepare_params(params, heads=H, mxu_dtype=jnp.float32)
    out_f32 = jax.block_until_ready(
        transformer_block_forward(value, key_t, query, prep_f32, heads=H))
    assert out_f32.shape == (N, S, E)
    assert jnp.allclose(out_f32, ref, atol=2e-2, rtol=2e-2), "f32-path mismatch vs reference"

    # 2) Deployment config: bf16 MXU inputs, f32 accumulation (full-rate MXU on v5e/v6e/v7x).
    #    Two LayerNorms amplify bf16 rounding noise, so use a global relative-error check.
    prep_bf16 = prepare_params(params, heads=H, mxu_dtype=jnp.bfloat16)
    out_bf16 = jax.block_until_ready(
        transformer_block_forward(value, key_t, query, prep_bf16, heads=H))
    rel = jnp.sqrt(jnp.sum(jnp.square(out_bf16 - ref)) / jnp.sum(jnp.square(ref)))
    assert float(rel) < 5e-2, f"bf16-path relative error too large: {float(rel)}"

    print("KERNEL_OK")
</pallas_src>

<mosaic_0001>
module attributes {stable_mosaic.version = 11 : i64} {
  func.func @transformer_block_kernel(%arg0: i32, %arg1: memref<16x32xf32, #tpu.memory_space<vmem>>, %arg2: memref<16x32xf32, #tpu.memory_space<vmem>>, %arg3: memref<16x32xf32, #tpu.memory_space<vmem>>, %arg4: memref<32x32xf32, #tpu.memory_space<vmem>>, %arg5: memref<32x32xf32, #tpu.memory_space<vmem>>, %arg6: memref<32x32xf32, #tpu.memory_space<vmem>>, %arg7: memref<32x32xf32, #tpu.memory_space<vmem>>, %arg8: memref<1x32xf32, #tpu.memory_space<vmem>>, %arg9: memref<1x32xf32, #tpu.memory_space<vmem>>, %arg10: memref<1x32xf32, #tpu.memory_space<vmem>>, %arg11: memref<32x64xf32, #tpu.memory_space<vmem>>, %arg12: memref<1x64xf32, #tpu.memory_space<vmem>>, %arg13: memref<64x32xf32, #tpu.memory_space<vmem>>, %arg14: memref<1x32xf32, #tpu.memory_space<vmem>>, %arg15: memref<1x32xf32, #tpu.memory_space<vmem>>, %arg16: memref<1x32xf32, #tpu.memory_space<vmem>>, %arg17: memref<16x32xf32, #tpu.memory_space<vmem>>, %arg18: memref<16x32xf32, #tpu.memory_space<vmem>>) attributes {dimension_semantics = [#tpu.dimension_semantics<parallel>], iteration_bounds = array<i64: 2>, scalar_prefetch = 0 : i64, scratch_operands = 1 : i64, tpu.core_type = #tpu.core_type<tc>, window_params = [{transform_indices = @transform_0, window_bounds = array<i64: 16, 32>}, {transform_indices = @transform_1, window_bounds = array<i64: 16, 32>}, {transform_indices = @transform_2, window_bounds = array<i64: 16, 32>}, {pipeline_mode = #tpu.pipeline_mode<synchronous>, transform_indices = @transform_3, window_bounds = array<i64: 32, 32>}, {pipeline_mode = #tpu.pipeline_mode<synchronous>, transform_indices = @transform_4, window_bounds = array<i64: 32, 32>}, {pipeline_mode = #tpu.pipeline_mode<synchronous>, transform_indices = @transform_5, window_bounds = array<i64: 32, 32>}, {pipeline_mode = #tpu.pipeline_mode<synchronous>, transform_indices = @transform_6, window_bounds = array<i64: 32, 32>}, {pipeline_mode = #tpu.pipeline_mode<synchronous>, transform_indices = @transform_7, window_bounds = array<i64: 1, 32>}, {pipeline_mode = #tpu.pipeline_mode<synchronous>, transform_indices = @transform_8, window_bounds = array<i64: 1, 32>}, {pipeline_mode = #tpu.pipeline_mode<synchronous>, transform_indices = @transform_9, window_bounds = array<i64: 1, 32>}, {pipeline_mode = #tpu.pipeline_mode<synchronous>, transform_indices = @transform_10, window_bounds = array<i64: 32, 64>}, {pipeline_mode = #tpu.pipeline_mode<synchronous>, transform_indices = @transform_11, window_bounds = array<i64: 1, 64>}, {pipeline_mode = #tpu.pipeline_mode<synchronous>, transform_indices = @transform_12, window_bounds = array<i64: 64, 32>}, {pipeline_mode = #tpu.pipeline_mode<synchronous>, transform_indices = @transform_13, window_bounds = array<i64: 1, 32>}, {pipeline_mode = #tpu.pipeline_mode<synchronous>, transform_indices = @transform_14, window_bounds = array<i64: 1, 32>}, {pipeline_mode = #tpu.pipeline_mode<synchronous>, transform_indices = @transform_15, window_bounds = array<i64: 1, 32>}, {transform_indices = @transform_16, window_bounds = array<i64: 16, 32>}]} {
    %c0 = arith.constant 0 : index
    %c0_0 = arith.constant 0 : index
    %0 = vector.load %arg1[%c0, %c0_0] : memref<16x32xf32, #tpu.memory_space<vmem>>, vector<16x32xf32>
    %c0_1 = arith.constant 0 : index
    %c0_2 = arith.constant 0 : index
    %1 = vector.load %arg4[%c0_1, %c0_2] : memref<32x32xf32, #tpu.memory_space<vmem>>, vector<32x32xf32>
    %cst = arith.constant dense<0.000000e+00> : vector<16x32xf32>
    %2 = tpu.matmul %0, %1, %cst {dimension_numbers = #tpu.dot_dimension_numbers<[1], [0], [0], [1], [0, 0, 1, 1], [], []>} : vector<16x32xf32>, vector<32x32xf32>, vector<16x32xf32> -> vector<16x32xf32>
    %c0_3 = arith.constant 0 : index
    %c0_4 = arith.constant 0 : index
    %3 = vector.load %arg2[%c0_3, %c0_4] : memref<16x32xf32, #tpu.memory_space<vmem>>, vector<16x32xf32>
    %c0_5 = arith.constant 0 : index
    %c0_6 = arith.constant 0 : index
    %4 = vector.load %arg5[%c0_5, %c0_6] : memref<32x32xf32, #tpu.memory_space<vmem>>, vector<32x32xf32>
    %cst_7 = arith.constant dense<0.000000e+00> : vector<16x32xf32>
    %5 = tpu.matmul %3, %4, %cst_7 {dimension_numbers = #tpu.dot_dimension_numbers<[1], [0], [0], [1], [0, 0, 1, 1], [], []>} : vector<16x32xf32>, vector<32x32xf32>, vector<16x32xf32> -> vector<16x32xf32>
    %c0_8 = arith.constant 0 : index
    %c0_9 = arith.constant 0 : index
    %6 = vector.load %arg3[%c0_8, %c0_9] : memref<16x32xf32, #tpu.memory_space<vmem>>, vector<16x32xf32>
    %c0_10 = arith.constant 0 : index
    %c0_11 = arith.constant 0 : index
    %7 = vector.load %arg6[%c0_10, %c0_11] : memref<32x32xf32, #tpu.memory_space<vmem>>, vector<32x32xf32>
    %cst_12 = arith.constant dense<0.000000e+00> : vector<16x32xf32>
    %8 = tpu.matmul %6, %7, %cst_12 {dimension_numbers = #tpu.dot_dimension_numbers<[1], [0], [0], [1], [0, 0, 1, 1], [], []>} : vector<16x32xf32>, vector<32x32xf32>, vector<16x32xf32> -> vector<16x32xf32>
    %9 = vector.shape_cast %8 : vector<16x32xf32> to vector<2x8x32xf32>
    %10 = vector.shape_cast %5 : vector<16x32xf32> to vector<2x8x32xf32>
    %11 = vector.shape_cast %2 : vector<16x32xf32> to vector<2x8x32xf32>
    %12 = vector.extract_strided_slice %9 {offsets = [0, 0, 0], sizes = [2, 8, 8], strides = [1, 1, 1]} : vector<2x8x32xf32> to vector<2x8x8xf32>
    %13 = vector.extract_strided_slice %10 {offsets = [0, 0, 0], sizes = [2, 8, 8], strides = [1, 1, 1]} : vector<2x8x32xf32> to vector<2x8x8xf32>
    %14 = vector.extract_strided_slice %11 {offsets = [0, 0, 0], sizes = [2, 8, 8], strides = [1, 1, 1]} : vector<2x8x32xf32> to vector<2x8x8xf32>
    "tpu.trace_start"() <{level = 10 : i32, message = "bqd,bkd->bqk"}> : () -> ()
    %cst_13 = arith.constant dense<0.000000e+00> : vector<2x8x8xf32>
    %15 = tpu.matmul %12, %13, %cst_13 {dimension_numbers = #tpu.dot_dimension_numbers<[2], [2], [1], [1], [0, 0, 0, 1, 1, 1], [0], [0]>} : vector<2x8x8xf32>, vector<2x8x8xf32>, vector<2x8x8xf32> -> vector<2x8x8xf32>
    "tpu.trace_stop"() : () -> ()
    %cst_14 = arith.constant dense<0xFF800000> : vector<2x8xf32>
    %16 = vector.multi_reduction <maximumf>, %15, %cst_14 [2] : vector<2x8x8xf32> to vector<2x8xf32>
    %17 = vector.shape_cast %16 : vector<2x8xf32> to vector<2x8x1xf32>
    %18 = vector.broadcast %17 : vector<2x8x1xf32> to vector<2x8x8xf32>
    %19 = arith.subf %15, %18 : vector<2x8x8xf32>
    %20 = math.exp %19 : vector<2x8x8xf32>
    %cst_15 = arith.constant dense<0.000000e+00> : vector<2x8xf32>
    %21 = vector.multi_reduction <add>, %20, %cst_15 [2] : vector<2x8x8xf32> to vector<2x8xf32>
    %22 = vector.shape_cast %21 : vector<2x8xf32> to vector<2x8x1xf32>
    %23 = tpu.reciprocal %22 {approx = true} : vector<2x8x1xf32> -> vector<2x8x1xf32>
    %24 = vector.broadcast %23 : vector<2x8x1xf32> to vector<2x8x8xf32>
    %25 = arith.mulf %20, %24 : vector<2x8x8xf32>
    "tpu.trace_start"() <{level = 10 : i32, message = "bqk,bkd->bqd"}> : () -> ()
    %cst_16 = arith.constant dense<0.000000e+00> : vector<2x8x8xf32>
    %26 = tpu.matmul %25, %14, %cst_16 {dimension_numbers = #tpu.dot_dimension_numbers<[2], [1], [1], [2], [0, 0, 0, 1, 1, 2], [0], [0]>} : vector<2x8x8xf32>, vector<2x8x8xf32>, vector<2x8x8xf32> -> vector<2x8x8xf32>
    "tpu.trace_stop"() : () -> ()
    %27 = vector.shape_cast %26 : vector<2x8x8xf32> to vector<16x8xf32>
    %c0_17 = arith.constant 0 : index
    %c0_18 = arith.constant 0 : index
    %28 = vector.load %arg18[%c0_17, %c0_18] : memref<16x32xf32, #tpu.memory_space<vmem>>, vector<16x8xf32>
    tpu.vector_store %arg18[%c0_17, %c0_18], %27 {strides = array<i32>} : memref<16x32xf32, #tpu.memory_space<vmem>>, vector<16x8xf32>,
    %29 = vector.extract_strided_slice %9 {offsets = [0, 0, 8], sizes = [2, 8, 8], strides = [1, 1, 1]} : vector<2x8x32xf32> to vector<2x8x8xf32>
    %30 = vector.extract_strided_slice %10 {offsets = [0, 0, 8], sizes = [2, 8, 8], strides = [1, 1, 1]} : vector<2x8x32xf32> to vector<2x8x8xf32>
    %31 = vector.extract_strided_slice %11 {offsets = [0, 0, 8], sizes = [2, 8, 8], strides = [1, 1, 1]} : vector<2x8x32xf32> to vector<2x8x8xf32>
    "tpu.trace_start"() <{level = 10 : i32, message = "bqd,bkd->bqk"}> : () -> ()
    %cst_19 = arith.constant dense<0.000000e+00> : vector<2x8x8xf32>
    %32 = tpu.matmul %29, %30, %cst_19 {dimension_numbers = #tpu.dot_dimension_numbers<[2], [2], [1], [1], [0, 0, 0, 1, 1, 1], [0], [0]>} : vector<2x8x8xf32>, vector<2x8x8xf32>, vector<2x8x8xf32> -> vector<2x8x8xf32>
    "tpu.trace_stop"() : () -> ()
    %cst_20 = arith.constant dense<0xFF800000> : vector<2x8xf32>
    %33 = vector.multi_reduction <maximumf>, %32, %cst_20 [2] : vector<2x8x8xf32> to vector<2x8xf32>
    %34 = vector.shape_cast %33 : vector<2x8xf32> to vector<2x8x1xf32>
    %35 = vector.broadcast %34 : vector<2x8x1xf32> to vector<2x8x8xf32>
    %36 = arith.subf %32, %35 : vector<2x8x8xf32>
    %37 = math.exp %36 : vector<2x8x8xf32>
    %cst_21 = arith.constant dense<0.000000e+00> : vector<2x8xf32>
    %38 = vector.multi_reduction <add>, %37, %cst_21 [2] : vector<2x8x8xf32> to vector<2x8xf32>
    %39 = vector.shape_cast %38 : vector<2x8xf32> to vector<2x8x1xf32>
    %40 = tpu.reciprocal %39 {approx = true} : vector<2x8x1xf32> -> vector<2x8x1xf32>
    %41 = vector.broadcast %40 : vector<2x8x1xf32> to vector<2x8x8xf32>
    %42 = arith.mulf %37, %41 : vector<2x8x8xf32>
    "tpu.trace_start"() <{level = 10 : i32, message = "bqk,bkd->bqd"}> : () -> ()
    %cst_22 = arith.constant dense<0.000000e+00> : vector<2x8x8xf32>
    %43 = tpu.matmul %42, %31, %cst_22 {dimension_numbers = #tpu.dot_dimension_numbers<[2], [1], [1], [2], [0, 0, 0, 1, 1, 2], [0], [0]>} : vector<2x8x8xf32>, vector<2x8x8xf32>, vector<2x8x8xf32> -> vector<2x8x8xf32>
    "tpu.trace_stop"() : () -> ()
    %44 = vector.shape_cast %43 : vector<2x8x8xf32> to vector<16x8xf32>
    %c0_23 = arith.constant 0 : index
    %c8 = arith.constant 8 : index
    %45 = vector.load %arg18[%c0_23, %c8] : memref<16x32xf32, #tpu.memory_space<vmem>>, vector<16x8xf32>
    tpu.vector_store %arg18[%c0_23, %c8], %44 {strides = array<i32>} : memref<16x32xf32, #tpu.memory_space<vmem>>, vector<16x8xf32>,
    %46 = vector.extract_strided_slice %9 {offsets = [0, 0, 16], sizes = [2, 8, 8], strides = [1, 1, 1]} : vector<2x8x32xf32> to vector<2x8x8xf32>
    %47 = vector.extract_strided_slice %10 {offsets = [0, 0, 16], sizes = [2, 8, 8], strides = [1, 1, 1]} : vector<2x8x32xf32> to vector<2x8x8xf32>
    %48 = vector.extract_strided_slice %11 {offsets = [0, 0, 16], sizes = [2, 8, 8], strides = [1, 1, 1]} : vector<2x8x32xf32> to vector<2x8x8xf32>
    "tpu.trace_start"() <{level = 10 : i32, message = "bqd,bkd->bqk"}> : () -> ()
    %cst_24 = arith.constant dense<0.000000e+00> : vector<2x8x8xf32>
    %49 = tpu.matmul %46, %47, %cst_24 {dimension_numbers = #tpu.dot_dimension_numbers<[2], [2], [1], [1], [0, 0, 0, 1, 1, 1], [0], [0]>} : vector<2x8x8xf32>, vector<2x8x8xf32>, vector<2x8x8xf32> -> vector<2x8x8xf32>
    "tpu.trace_stop"() : () -> ()
    %cst_25 = arith.constant dense<0xFF800000> : vector<2x8xf32>
    %50 = vector.multi_reduction <maximumf>, %49, %cst_25 [2] : vector<2x8x8xf32> to vector<2x8xf32>
    %51 = vector.shape_cast %50 : vector<2x8xf32> to vector<2x8x1xf32>
    %52 = vector.broadcast %51 : vector<2x8x1xf32> to vector<2x8x8xf32>
    %53 = arith.subf %49, %52 : vector<2x8x8xf32>
    %54 = math.exp %53 : vector<2x8x8xf32>
    %cst_26 = arith.constant dense<0.000000e+00> : vector<2x8xf32>
    %55 = vector.multi_reduction <add>, %54, %cst_26 [2] : vector<2x8x8xf32> to vector<2x8xf32>
    %56 = vector.shape_cast %55 : vector<2x8xf32> to vector<2x8x1xf32>
    %57 = tpu.reciprocal %56 {approx = true} : vector<2x8x1xf32> -> vector<2x8x1xf32>
    %58 = vector.broadcast %57 : vector<2x8x1xf32> to vector<2x8x8xf32>
    %59 = arith.mulf %54, %58 : vector<2x8x8xf32>
    "tpu.trace_start"() <{level = 10 : i32, message = "bqk,bkd->bqd"}> : () -> ()
    %cst_27 = arith.constant dense<0.000000e+00> : vector<2x8x8xf32>
    %60 = tpu.matmul %59, %48, %cst_27 {dimension_numbers = #tpu.dot_dimension_numbers<[2], [1], [1], [2], [0, 0, 0, 1, 1, 2], [0], [0]>} : vector<2x8x8xf32>, vector<2x8x8xf32>, vector<2x8x8xf32> -> vector<2x8x8xf32>
    "tpu.trace_stop"() : () -> ()
    %61 = vector.shape_cast %60 : vector<2x8x8xf32> to vector<16x8xf32>
    %c0_28 = arith.constant 0 : index
    %c16 = arith.constant 16 : index
    %62 = vector.load %arg18[%c0_28, %c16] : memref<16x32xf32, #tpu.memory_space<vmem>>, vector<16x8xf32>
    tpu.vector_store %arg18[%c0_28, %c16], %61 {strides = array<i32>} : memref<16x32xf32, #tpu.memory_space<vmem>>, vector<16x8xf32>,
    %63 = vector.extract_strided_slice %9 {offsets = [0, 0, 24], sizes = [2, 8, 8], strides = [1, 1, 1]} : vector<2x8x32xf32> to vector<2x8x8xf32>
    %64 = vector.extract_strided_slice %10 {offsets = [0, 0, 24], sizes = [2, 8, 8], strides = [1, 1, 1]} : vector<2x8x32xf32> to vector<2x8x8xf32>
    %65 = vector.extract_strided_slice %11 {offsets = [0, 0, 24], sizes = [2, 8, 8], strides = [1, 1, 1]} : vector<2x8x32xf32> to vector<2x8x8xf32>
    "tpu.trace_start"() <{level = 10 : i32, message = "bqd,bkd->bqk"}> : () -> ()
    %cst_29 = arith.constant dense<0.000000e+00> : vector<2x8x8xf32>
    %66 = tpu.matmul %63, %64, %cst_29 {dimension_numbers = #tpu.dot_dimension_numbers<[2], [2], [1], [1], [0, 0, 0, 1, 1, 1], [0], [0]>} : vector<2x8x8xf32>, vector<2x8x8xf32>, vector<2x8x8xf32> -> vector<2x8x8xf32>
    "tpu.trace_stop"() : () -> ()
    %cst_30 = arith.constant dense<0xFF800000> : vector<2x8xf32>
    %67 = vector.multi_reduction <maximumf>, %66, %cst_30 [2] : vector<2x8x8xf32> to vector<2x8xf32>
    %68 = vector.shape_cast %67 : vector<2x8xf32> to vector<2x8x1xf32>
    %69 = vector.broadcast %68 : vector<2x8x1xf32> to vector<2x8x8xf32>
    %70 = arith.subf %66, %69 : vector<2x8x8xf32>
    %71 = math.exp %70 : vector<2x8x8xf32>
    %cst_31 = arith.constant dense<0.000000e+00> : vector<2x8xf32>
    %72 = vector.multi_reduction <add>, %71, %cst_31 [2] : vector<2x8x8xf32> to vector<2x8xf32>
    %73 = vector.shape_cast %72 : vector<2x8xf32> to vector<2x8x1xf32>
    %74 = tpu.reciprocal %73 {approx = true} : vector<2x8x1xf32> -> vector<2x8x1xf32>
    %75 = vector.broadcast %74 : vector<2x8x1xf32> to vector<2x8x8xf32>
    %76 = arith.mulf %71, %75 : vector<2x8x8xf32>
    "tpu.trace_start"() <{level = 10 : i32, message = "bqk,bkd->bqd"}> : () -> ()
    %cst_32 = arith.constant dense<0.000000e+00> : vector<2x8x8xf32>
    %77 = tpu.matmul %76, %65, %cst_32 {dimension_numbers = #tpu.dot_dimension_numbers<[2], [1], [1], [2], [0, 0, 0, 1, 1, 2], [0], [0]>} : vector<2x8x8xf32>, vector<2x8x8xf32>, vector<2x8x8xf32> -> vector<2x8x8xf32>
    "tpu.trace_stop"() : () -> ()
    %78 = vector.shape_cast %77 : vector<2x8x8xf32> to vector<16x8xf32>
    %c0_33 = arith.constant 0 : index
    %c24 = arith.constant 24 : index
    %79 = vector.load %arg18[%c0_33, %c24] : memref<16x32xf32, #tpu.memory_space<vmem>>, vector<16x8xf32>
    tpu.vector_store %arg18[%c0_33, %c24], %78 {strides = array<i32>} : memref<16x32xf32, #tpu.memory_space<vmem>>, vector<16x8xf32>,
    %c0_34 = arith.constant 0 : index
    %c0_35 = arith.constant 0 : index
    %80 = vector.load %arg18[%c0_34, %c0_35] : memref<16x32xf32, #tpu.memory_space<vmem>>, vector<16x32xf32>
    %c0_36 = arith.constant 0 : index
    %c0_37 = arith.constant 0 : index
    %81 = vector.load %arg7[%c0_36, %c0_37] : memref<32x32xf32, #tpu.memory_space<vmem>>, vector<32x32xf32>
    %cst_38 = arith.constant dense<0.000000e+00> : vector<16x32xf32>
    %82 = tpu.matmul %80, %81, %cst_38 {dimension_numbers = #tpu.dot_dimension_numbers<[1], [0], [0], [1], [0, 0, 1, 1], [], []>} : vector<16x32xf32>, vector<32x32xf32>, vector<16x32xf32> -> vector<16x32xf32>
    %c0_39 = arith.constant 0 : index
    %c0_40 = arith.constant 0 : index
    %83 = vector.load %arg8[%c0_39, %c0_40] : memref<1x32xf32, #tpu.memory_space<vmem>>, vector<1x32xf32>
    %84 = vector.broadcast %83 : vector<1x32xf32> to vector<16x32xf32>
    %85 = arith.addf %82, %84 : vector<16x32xf32>
    %cst_41 = arith.constant dense<0.000000e+00> : vector<16xf32>
    %86 = vector.multi_reduction <add>, %85, %cst_41 [1] : vector<16x32xf32> to vector<16xf32>
    %87 = vector.shape_cast %86 : vector<16xf32> to vector<16x1xf32>
    %cst_42 = arith.constant 3.200000e+01 : f32
    %88 = vector.broadcast %cst_42 : f32 to vector<16x1xf32>
    %89 = arith.divf %87, %88 : vector<16x1xf32>
    %90 = vector.broadcast %89 : vector<16x1xf32> to vector<16x32xf32>
    %91 = arith.subf %85, %90 : vector<16x32xf32>
    %92 = arith.mulf %91, %91 : vector<16x32xf32>
    %cst_43 = arith.constant dense<0.000000e+00> : vector<16xf32>
    %93 = vector.multi_reduction <add>, %92, %cst_43 [1] : vector<16x32xf32> to vector<16xf32>
    %94 = vector.shape_cast %93 : vector<16xf32> to vector<16x1xf32>
    %cst_44 = arith.constant 3.200000e+01 : f32
    %95 = vector.broadcast %cst_44 : f32 to vector<16x1xf32>
    %96 = arith.divf %94, %95 : vector<16x1xf32>
    %97 = vector.broadcast %89 : vector<16x1xf32> to vector<16x32xf32>
    %98 = arith.subf %85, %97 : vector<16x32xf32>
    %cst_45 = arith.constant 9.99999974E-6 : f32
    %99 = vector.broadcast %cst_45 : f32 to vector<16x1xf32>
    %100 = arith.addf %96, %99 : vector<16x1xf32>
    %101 = math.rsqrt %100 : vector<16x1xf32>
    %102 = vector.broadcast %101 : vector<16x1xf32> to vector<16x32xf32>
    %103 = arith.mulf %98, %102 : vector<16x32xf32>
    %c0_46 = arith.constant 0 : index
    %c0_47 = arith.constant 0 : index
    %104 = vector.load %arg9[%c0_46, %c0_47] : memref<1x32xf32, #tpu.memory_space<vmem>>, vector<1x32xf32>
    %105 = vector.broadcast %104 : vector<1x32xf32> to vector<16x32xf32>
    %106 = arith.mulf %103, %105 : vector<16x32xf32>
    %c0_48 = arith.constant 0 : index
    %c0_49 = arith.constant 0 : index
    %107 = vector.load %arg10[%c0_48, %c0_49] : memref<1x32xf32, #tpu.memory_space<vmem>>, vector<1x32xf32>
    %108 = vector.broadcast %107 : vector<1x32xf32> to vector<16x32xf32>
    %109 = arith.addf %106, %108 : vector<16x32xf32>
    %c0_50 = arith.constant 0 : index
    %c0_51 = arith.constant 0 : index
    %110 = vector.load %arg11[%c0_50, %c0_51] : memref<32x64xf32, #tpu.memory_space<vmem>>, vector<32x64xf32>
    %cst_52 = arith.constant dense<0.000000e+00> : vector<16x64xf32>
    %111 = tpu.matmul %109, %110, %cst_52 {dimension_numbers = #tpu.dot_dimension_numbers<[1], [0], [0], [1], [0, 0, 1, 1], [], []>} : vector<16x32xf32>, vector<32x64xf32>, vector<16x64xf32> -> vector<16x64xf32>
    %c0_53 = arith.constant 0 : index
    %c0_54 = arith.constant 0 : index
    %112 = vector.load %arg12[%c0_53, %c0_54] : memref<1x64xf32, #tpu.memory_space<vmem>>, vector<1x64xf32>
    %113 = vector.broadcast %112 : vector<1x64xf32> to vector<16x64xf32>
    %114 = arith.addf %111, %113 : vector<16x64xf32>
    %cst_55 = arith.constant 0.000000e+00 : f32
    %115 = vector.broadcast %cst_55 : f32 to vector<16x64xf32>
    %116 = arith.maximumf %114, %115 : vector<16x64xf32>
    %c0_56 = arith.constant 0 : index
    %c0_57 = arith.constant 0 : index
    %117 = vector.load %arg13[%c0_56, %c0_57] : memref<64x32xf32, #tpu.memory_space<vmem>>, vector<64x32xf32>
    %cst_58 = arith.constant dense<0.000000e+00> : vector<16x32xf32>
    %118 = tpu.matmul %116, %117, %cst_58 {dimension_numbers = #tpu.dot_dimension_numbers<[1], [0], [0], [1], [0, 0, 1, 1], [], []>} : vector<16x64xf32>, vector<64x32xf32>, vector<16x32xf32> -> vector<16x32xf32>
    %c0_59 = arith.constant 0 : index
    %c0_60 = arith.constant 0 : index
    %119 = vector.load %arg14[%c0_59, %c0_60] : memref<1x32xf32, #tpu.memory_space<vmem>>, vector<1x32xf32>
    %120 = vector.broadcast %119 : vector<1x32xf32> to vector<16x32xf32>
    %121 = arith.addf %118, %120 : vector<16x32xf32>
    %cst_61 = arith.constant dense<0.000000e+00> : vector<16xf32>
    %122 = vector.multi_reduction <add>, %121, %cst_61 [1] : vector<16x32xf32> to vector<16xf32>
    %123 = vector.shape_cast %122 : vector<16xf32> to vector<16x1xf32>
    %cst_62 = arith.constant 3.200000e+01 : f32
    %124 = vector.broadcast %cst_62 : f32 to vector<16x1xf32>
    %125 = arith.divf %123, %124 : vector<16x1xf32>
    %126 = vector.broadcast %125 : vector<16x1xf32> to vector<16x32xf32>
    %127 = arith.subf %121, %126 : vector<16x32xf32>
    %128 = arith.mulf %127, %127 : vector<16x32xf32>
    %cst_63 = arith.constant dense<0.000000e+00> : vector<16xf32>
    %129 = vector.multi_reduction <add>, %128, %cst_63 [1] : vector<16x32xf32> to vector<16xf32>
    %130 = vector.shape_cast %129 : vector<16xf32> to vector<16x1xf32>
    %cst_64 = arith.constant 3.200000e+01 : f32
    %131 = vector.broadcast %cst_64 : f32 to vector<16x1xf32>
    %132 = arith.divf %130, %131 : vector<16x1xf32>
    %133 = vector.broadcast %125 : vector<16x1xf32> to vector<16x32xf32>
    %134 = arith.subf %121, %133 : vector<16x32xf32>
    %cst_65 = arith.constant 9.99999974E-6 : f32
    %135 = vector.broadcast %cst_65 : f32 to vector<16x1xf32>
    %136 = arith.addf %132, %135 : vector<16x1xf32>
    %137 = math.rsqrt %136 : vector<16x1xf32>
    %138 = vector.broadcast %137 : vector<16x1xf32> to vector<16x32xf32>
    %139 = arith.mulf %134, %138 : vector<16x32xf32>
    %c0_66 = arith.constant 0 : index
    %c0_67 = arith.constant 0 : index
    %140 = vector.load %arg15[%c0_66, %c0_67] : memref<1x32xf32, #tpu.memory_space<vmem>>, vector<1x32xf32>
    %141 = vector.broadcast %140 : vector<1x32xf32> to vector<16x32xf32>
    %142 = arith.mulf %139, %141 : vector<16x32xf32>
    %c0_68 = arith.constant 0 : index
    %c0_69 = arith.constant 0 : index
    %143 = vector.load %arg16[%c0_68, %c0_69] : memref<1x32xf32, #tpu.memory_space<vmem>>, vector<1x32xf32>
    %144 = vector.broadcast %143 : vector<1x32xf32> to vector<16x32xf32>
    %145 = arith.addf %142, %144 : vector<16x32xf32>
    %c0_70 = arith.constant 0 : index
    %c0_71 = arith.constant 0 : index
    %146 = vector.load %arg17[%c0_70, %c0_71] : memref<16x32xf32, #tpu.memory_space<vmem>>, vector<16x32xf32>
    tpu.vector_store %arg17[%c0_70, %c0_71], %145 {strides = array<i32>} : memref<16x32xf32, #tpu.memory_space<vmem>>, vector<16x32xf32>,
    return
  }
  func.func @transform_0(%arg0: i32) -> (i32, i32) {
    %c0_i32 = arith.constant 0 : i32
    %c0_i32_0 = arith.constant 0 : i32
    return %arg0, %c0_i32 : i32, i32
  }
  func.func @transform_1(%arg0: i32) -> (i32, i32) {
    %c0_i32 = arith.constant 0 : i32
    %c0_i32_0 = arith.constant 0 : i32
    return %arg0, %c0_i32 : i32, i32
  }
  func.func @transform_2(%arg0: i32) -> (i32, i32) {
    %c0_i32 = arith.constant 0 : i32
    %c0_i32_0 = arith.constant 0 : i32
    return %arg0, %c0_i32 : i32, i32
  }
  func.func @transform_3(%arg0: i32) -> (i32, i32) {
    %c0_i32 = arith.constant 0 : i32
    %c0_i32_0 = arith.constant 0 : i32
    %c0_i32_1 = arith.constant 0 : i32
    return %c0_i32, %c0_i32_0 : i32, i32
  }
  func.func @transform_4(%arg0: i32) -> (i32, i32) {
    %c0_i32 = arith.constant 0 : i32
    %c0_i32_0 = arith.constant 0 : i32
    %c0_i32_1 = arith.constant 0 : i32
    return %c0_i32, %c0_i32_0 : i32, i32
  }
  func.func @transform_5(%arg0: i32) -> (i32, i32) {
    %c0_i32 = arith.constant 0 : i32
    %c0_i32_0 = arith.constant 0 : i32
    %c0_i32_1 = arith.constant 0 : i32
    return %c0_i32, %c0_i32_0 : i32, i32
  }
  func.func @transform_6(%arg0: i32) -> (i32, i32) {
    %c0_i32 = arith.constant 0 : i32
    %c0_i32_0 = arith.constant 0 : i32
    %c0_i32_1 = arith.constant 0 : i32
    return %c0_i32, %c0_i32_0 : i32, i32
  }
  func.func @transform_7(%arg0: i32) -> (i32, i32) {
    %c0_i32 = arith.constant 0 : i32
    %c0_i32_0 = arith.constant 0 : i32
    %c0_i32_1 = arith.constant 0 : i32
    return %c0_i32, %c0_i32_0 : i32, i32
  }
  func.func @transform_8(%arg0: i32) -> (i32, i32) {
    %c0_i32 = arith.constant 0 : i32
    %c0_i32_0 = arith.constant 0 : i32
    %c0_i32_1 = arith.constant 0 : i32
    return %c0_i32, %c0_i32_0 : i32, i32
  }
  func.func @transform_9(%arg0: i32) -> (i32, i32) {
    %c0_i32 = arith.constant 0 : i32
    %c0_i32_0 = arith.constant 0 : i32
    %c0_i32_1 = arith.constant 0 : i32
    return %c0_i32, %c0_i32_0 : i32, i32
  }
  func.func @transform_10(%arg0: i32) -> (i32, i32) {
    %c0_i32 = arith.constant 0 : i32
    %c0_i32_0 = arith.constant 0 : i32
    %c0_i32_1 = arith.constant 0 : i32
    return %c0_i32, %c0_i32_0 : i32, i32
  }
  func.func @transform_11(%arg0: i32) -> (i32, i32) {
    %c0_i32 = arith.constant 0 : i32
    %c0_i32_0 = arith.constant 0 : i32
    %c0_i32_1 = arith.constant 0 : i32
    return %c0_i32, %c0_i32_0 : i32, i32
  }
  func.func @transform_12(%arg0: i32) -> (i32, i32) {
    %c0_i32 = arith.constant 0 : i32
    %c0_i32_0 = arith.constant 0 : i32
    %c0_i32_1 = arith.constant 0 : i32
    return %c0_i32, %c0_i32_0 : i32, i32
  }
  func.func @transform_13(%arg0: i32) -> (i32, i32) {
    %c0_i32 = arith.constant 0 : i32
    %c0_i32_0 = arith.constant 0 : i32
    %c0_i32_1 = arith.constant 0 : i32
    return %c0_i32, %c0_i32_0 : i32, i32
  }
  func.func @transform_14(%arg0: i32) -> (i32, i32) {
    %c0_i32 = arith.constant 0 : i32
    %c0_i32_0 = arith.constant 0 : i32
    %c0_i32_1 = arith.constant 0 : i32
    return %c0_i32, %c0_i32_0 : i32, i32
  }
  func.func @transform_15(%arg0: i32) -> (i32, i32) {
    %c0_i32 = arith.constant 0 : i32
    %c0_i32_0 = arith.constant 0 : i32
    %c0_i32_1 = arith.constant 0 : i32
    return %c0_i32, %c0_i32_0 : i32, i32
  }
  func.func @transform_16(%arg0: i32) -> (i32, i32) {
    %c0_i32 = arith.constant 0 : i32
    %c0_i32_0 = arith.constant 0 : i32
    return %arg0, %c0_i32 : i32, i32
  }
}

module attributes {stable_mosaic.version = 11 : i64} {
  func.func @transformer_block_kernel(%arg0: i32, %arg1: memref<16x32xf32, #tpu.memory_space<vmem>>, %arg2: memref<16x32xf32, #tpu.memory_space<vmem>>, %arg3: memref<16x32xf32, #tpu.memory_space<vmem>>, %arg4: memref<32x32xf32, #tpu.memory_space<vmem>>, %arg5: memref<32x32xf32, #tpu.memory_space<vmem>>, %arg6: memref<32x32xf32, #tpu.memory_space<vmem>>, %arg7: memref<32x32xf32, #tpu.memory_space<vmem>>, %arg8: memref<1x32xf32, #tpu.memory_space<vmem>>, %arg9: memref<1x32xf32, #tpu.memory_space<vmem>>, %arg10: memref<1x32xf32, #tpu.memory_space<vmem>>, %arg11: memref<32x64xf32, #tpu.memory_space<vmem>>, %arg12: memref<1x64xf32, #tpu.memory_space<vmem>>, %arg13: memref<64x32xf32, #tpu.memory_space<vmem>>, %arg14: memref<1x32xf32, #tpu.memory_space<vmem>>, %arg15: memref<1x32xf32, #tpu.memory_space<vmem>>, %arg16: memref<1x32xf32, #tpu.memory_space<vmem>>, %arg17: memref<16x32xf32, #tpu.memory_space<vmem>>, %arg18: memref<16x32xf32, #tpu.memory_space<vmem>>) attributes {dimension_semantics = [#tpu.dimension_semantics<parallel>], iteration_bounds = array<i64: 2>, scalar_prefetch = 0 : i64, scratch_operands = 1 : i64, tpu.core_type = #tpu.core_type<tc>, window_params = [{transform_indices = @transform_0, window_bounds = array<i64: 16, 32>}, {transform_indices = @transform_1, window_bounds = array<i64: 16, 32>}, {transform_indices = @transform_2, window_bounds = array<i64: 16, 32>}, {pipeline_mode = #tpu.pipeline_mode<synchronous>, transform_indices = @transform_3, window_bounds = array<i64: 32, 32>}, {pipeline_mode = #tpu.pipeline_mode<synchronous>, transform_indices = @transform_4, window_bounds = array<i64: 32, 32>}, {pipeline_mode = #tpu.pipeline_mode<synchronous>, transform_indices = @transform_5, window_bounds = array<i64: 32, 32>}, {pipeline_mode = #tpu.pipeline_mode<synchronous>, transform_indices = @transform_6, window_bounds = array<i64: 32, 32>}, {pipeline_mode = #tpu.pipeline_mode<synchronous>, transform_indices = @transform_7, window_bounds = array<i64: 1, 32>}, {pipeline_mode = #tpu.pipeline_mode<synchronous>, transform_indices = @transform_8, window_bounds = array<i64: 1, 32>}, {pipeline_mode = #tpu.pipeline_mode<synchronous>, transform_indices = @transform_9, window_bounds = array<i64: 1, 32>}, {pipeline_mode = #tpu.pipeline_mode<synchronous>, transform_indices = @transform_10, window_bounds = array<i64: 32, 64>}, {pipeline_mode = #tpu.pipeline_mode<synchronous>, transform_indices = @transform_11, window_bounds = array<i64: 1, 64>}, {pipeline_mode = #tpu.pipeline_mode<synchronous>, transform_indices = @transform_12, window_bounds = array<i64: 64, 32>}, {pipeline_mode = #tpu.pipeline_mode<synchronous>, transform_indices = @transform_13, window_bounds = array<i64: 1, 32>}, {pipeline_mode = #tpu.pipeline_mode<synchronous>, transform_indices = @transform_14, window_bounds = array<i64: 1, 32>}, {pipeline_mode = #tpu.pipeline_mode<synchronous>, transform_indices = @transform_15, window_bounds = array<i64: 1, 32>}, {transform_indices = @transform_16, window_bounds = array<i64: 16, 32>}]} {
    %c0 = arith.constant 0 : index
    %c0_0 = arith.constant 0 : index
    %0 = vector.load %arg1[%c0, %c0_0] : memref<16x32xf32, #tpu.memory_space<vmem>>, vector<16x32xf32>
    %c0_1 = arith.constant 0 : index
    %c0_2 = arith.constant 0 : index
    %1 = vector.load %arg4[%c0_1, %c0_2] : memref<32x32xf32, #tpu.memory_space<vmem>>, vector<32x32xf32>
    %cst = arith.constant dense<0.000000e+00> : vector<16x32xf32>
    %2 = tpu.matmul %0, %1, %cst {dimension_numbers = #tpu.dot_dimension_numbers<[1], [0], [0], [1], [0, 0, 1, 1], [], []>} : vector<16x32xf32>, vector<32x32xf32>, vector<16x32xf32> -> vector<16x32xf32>
    %c0_3 = arith.constant 0 : index
    %c0_4 = arith.constant 0 : index
    %3 = vector.load %arg2[%c0_3, %c0_4] : memref<16x32xf32, #tpu.memory_space<vmem>>, vector<16x32xf32>
    %c0_5 = arith.constant 0 : index
    %c0_6 = arith.constant 0 : index
    %4 = vector.load %arg5[%c0_5, %c0_6] : memref<32x32xf32, #tpu.memory_space<vmem>>, vector<32x32xf32>
    %cst_7 = arith.constant dense<0.000000e+00> : vector<16x32xf32>
    %5 = tpu.matmul %3, %4, %cst_7 {dimension_numbers = #tpu.dot_dimension_numbers<[1], [0], [0], [1], [0, 0, 1, 1], [], []>} : vector<16x32xf32>, vector<32x32xf32>, vector<16x32xf32> -> vector<16x32xf32>
    %c0_8 = arith.constant 0 : index
    %c0_9 = arith.constant 0 : index
    %6 = vector.load %arg3[%c0_8, %c0_9] : memref<16x32xf32, #tpu.memory_space<vmem>>, vector<16x32xf32>
    %c0_10 = arith.constant 0 : index
    %c0_11 = arith.constant 0 : index
    %7 = vector.load %arg6[%c0_10, %c0_11] : memref<32x32xf32, #tpu.memory_space<vmem>>, vector<32x32xf32>
    %cst_12 = arith.constant dense<0.000000e+00> : vector<16x32xf32>
    %8 = tpu.matmul %6, %7, %cst_12 {dimension_numbers = #tpu.dot_dimension_numbers<[1], [0], [0], [1], [0, 0, 1, 1], [], []>} : vector<16x32xf32>, vector<32x32xf32>, vector<16x32xf32> -> vector<16x32xf32>
    %9 = vector.shape_cast %8 : vector<16x32xf32> to vector<2x8x32xf32>
    %10 = vector.shape_cast %5 : vector<16x32xf32> to vector<2x8x32xf32>
    %11 = vector.shape_cast %2 : vector<16x32xf32> to vector<2x8x32xf32>
    %12 = vector.extract_strided_slice %9 {offsets = [0, 0, 0], sizes = [2, 8, 8], strides = [1, 1, 1]} : vector<2x8x32xf32> to vector<2x8x8xf32>
    %13 = vector.extract_strided_slice %10 {offsets = [0, 0, 0], sizes = [2, 8, 8], strides = [1, 1, 1]} : vector<2x8x32xf32> to vector<2x8x8xf32>
    %14 = vector.extract_strided_slice %11 {offsets = [0, 0, 0], sizes = [2, 8, 8], strides = [1, 1, 1]} : vector<2x8x32xf32> to vector<2x8x8xf32>
    "tpu.trace_start"() <{level = 10 : i32, message = "bqd,bkd->bqk"}> : () -> ()
    %cst_13 = arith.constant dense<0.000000e+00> : vector<2x8x8xf32>
    %15 = tpu.matmul %12, %13, %cst_13 {dimension_numbers = #tpu.dot_dimension_numbers<[2], [2], [1], [1], [0, 0, 0, 1, 1, 1], [0], [0]>} : vector<2x8x8xf32>, vector<2x8x8xf32>, vector<2x8x8xf32> -> vector<2x8x8xf32>
    "tpu.trace_stop"() : () -> ()
    %cst_14 = arith.constant dense<0xFF800000> : vector<2x8xf32>
    %16 = vector.multi_reduction <maximumf>, %15, %cst_14 [2] : vector<2x8x8xf32> to vector<2x8xf32>
    %17 = vector.shape_cast %16 : vector<2x8xf32> to vector<2x8x1xf32>
    %18 = vector.broadcast %17 : vector<2x8x1xf32> to vector<2x8x8xf32>
    %19 = arith.subf %15, %18 : vector<2x8x8xf32>
    %20 = math.exp %19 : vector<2x8x8xf32>
    %cst_15 = arith.constant dense<0.000000e+00> : vector<2x8xf32>
    %21 = vector.multi_reduction <add>, %20, %cst_15 [2] : vector<2x8x8xf32> to vector<2x8xf32>
    %22 = vector.shape_cast %21 : vector<2x8xf32> to vector<2x8x1xf32>
    %23 = tpu.reciprocal %22 {approx = true} : vector<2x8x1xf32> -> vector<2x8x1xf32>
    %24 = vector.broadcast %23 : vector<2x8x1xf32> to vector<2x8x8xf32>
    %25 = arith.mulf %20, %24 : vector<2x8x8xf32>
    "tpu.trace_start"() <{level = 10 : i32, message = "bqk,bkd->bqd"}> : () -> ()
    %cst_16 = arith.constant dense<0.000000e+00> : vector<2x8x8xf32>
    %26 = tpu.matmul %25, %14, %cst_16 {dimension_numbers = #tpu.dot_dimension_numbers<[2], [1], [1], [2], [0, 0, 0, 1, 1, 2], [0], [0]>} : vector<2x8x8xf32>, vector<2x8x8xf32>, vector<2x8x8xf32> -> vector<2x8x8xf32>
    "tpu.trace_stop"() : () -> ()
    %27 = vector.shape_cast %26 : vector<2x8x8xf32> to vector<16x8xf32>
    %c0_17 = arith.constant 0 : index
    %c0_18 = arith.constant 0 : index
    %28 = vector.load %arg18[%c0_17, %c0_18] : memref<16x32xf32, #tpu.memory_space<vmem>>, vector<16x8xf32>
    tpu.vector_store %arg18[%c0_17, %c0_18], %27 {strides = array<i32>} : memref<16x32xf32, #tpu.memory_space<vmem>>, vector<16x8xf32>,
    %29 = vector.extract_strided_slice %9 {offsets = [0, 0, 8], sizes = [2, 8, 8], strides = [1, 1, 1]} : vector<2x8x32xf32> to vector<2x8x8xf32>
    %30 = vector.extract_strided_slice %10 {offsets = [0, 0, 8], sizes = [2, 8, 8], strides = [1, 1, 1]} : vector<2x8x32xf32> to vector<2x8x8xf32>
    %31 = vector.extract_strided_slice %11 {offsets = [0, 0, 8], sizes = [2, 8, 8], strides = [1, 1, 1]} : vector<2x8x32xf32> to vector<2x8x8xf32>
    "tpu.trace_start"() <{level = 10 : i32, message = "bqd,bkd->bqk"}> : () -> ()
    %cst_19 = arith.constant dense<0.000000e+00> : vector<2x8x8xf32>
    %32 = tpu.matmul %29, %30, %cst_19 {dimension_numbers = #tpu.dot_dimension_numbers<[2], [2], [1], [1], [0, 0, 0, 1, 1, 1], [0], [0]>} : vector<2x8x8xf32>, vector<2x8x8xf32>, vector<2x8x8xf32> -> vector<2x8x8xf32>
    "tpu.trace_stop"() : () -> ()
    %cst_20 = arith.constant dense<0xFF800000> : vector<2x8xf32>
    %33 = vector.multi_reduction <maximumf>, %32, %cst_20 [2] : vector<2x8x8xf32> to vector<2x8xf32>
    %34 = vector.shape_cast %33 : vector<2x8xf32> to vector<2x8x1xf32>
    %35 = vector.broadcast %34 : vector<2x8x1xf32> to vector<2x8x8xf32>
    %36 = arith.subf %32, %35 : vector<2x8x8xf32>
    %37 = math.exp %36 : vector<2x8x8xf32>
    %cst_21 = arith.constant dense<0.000000e+00> : vector<2x8xf32>
    %38 = vector.multi_reduction <add>, %37, %cst_21 [2] : vector<2x8x8xf32> to vector<2x8xf32>
    %39 = vector.shape_cast %38 : vector<2x8xf32> to vector<2x8x1xf32>
    %40 = tpu.reciprocal %39 {approx = true} : vector<2x8x1xf32> -> vector<2x8x1xf32>
    %41 = vector.broadcast %40 : vector<2x8x1xf32> to vector<2x8x8xf32>
    %42 = arith.mulf %37, %41 : vector<2x8x8xf32>
    "tpu.trace_start"() <{level = 10 : i32, message = "bqk,bkd->bqd"}> : () -> ()
    %cst_22 = arith.constant dense<0.000000e+00> : vector<2x8x8xf32>
    %43 = tpu.matmul %42, %31, %cst_22 {dimension_numbers = #tpu.dot_dimension_numbers<[2], [1], [1], [2], [0, 0, 0, 1, 1, 2], [0], [0]>} : vector<2x8x8xf32>, vector<2x8x8xf32>, vector<2x8x8xf32> -> vector<2x8x8xf32>
    "tpu.trace_stop"() : () -> ()
    %44 = vector.shape_cast %43 : vector<2x8x8xf32> to vector<16x8xf32>
    %c0_23 = arith.constant 0 : index
    %c8 = arith.constant 8 : index
    %45 = vector.load %arg18[%c0_23, %c8] : memref<16x32xf32, #tpu.memory_space<vmem>>, vector<16x8xf32>
    tpu.vector_store %arg18[%c0_23, %c8], %44 {strides = array<i32>} : memref<16x32xf32, #tpu.memory_space<vmem>>, vector<16x8xf32>,
    %46 = vector.extract_strided_slice %9 {offsets = [0, 0, 16], sizes = [2, 8, 8], strides = [1, 1, 1]} : vector<2x8x32xf32> to vector<2x8x8xf32>
    %47 = vector.extract_strided_slice %10 {offsets = [0, 0, 16], sizes = [2, 8, 8], strides = [1, 1, 1]} : vector<2x8x32xf32> to vector<2x8x8xf32>
    %48 = vector.extract_strided_slice %11 {offsets = [0, 0, 16], sizes = [2, 8, 8], strides = [1, 1, 1]} : vector<2x8x32xf32> to vector<2x8x8xf32>
    "tpu.trace_start"() <{level = 10 : i32, message = "bqd,bkd->bqk"}> : () -> ()
    %cst_24 = arith.constant dense<0.000000e+00> : vector<2x8x8xf32>
    %49 = tpu.matmul %46, %47, %cst_24 {dimension_numbers = #tpu.dot_dimension_numbers<[2], [2], [1], [1], [0, 0, 0, 1, 1, 1], [0], [0]>} : vector<2x8x8xf32>, vector<2x8x8xf32>, vector<2x8x8xf32> -> vector<2x8x8xf32>
    "tpu.trace_stop"() : () -> ()
    %cst_25 = arith.constant dense<0xFF800000> : vector<2x8xf32>
    %50 = vector.multi_reduction <maximumf>, %49, %cst_25 [2] : vector<2x8x8xf32> to vector<2x8xf32>
    %51 = vector.shape_cast %50 : vector<2x8xf32> to vector<2x8x1xf32>
    %52 = vector.broadcast %51 : vector<2x8x1xf32> to vector<2x8x8xf32>
    %53 = arith.subf %49, %52 : vector<2x8x8xf32>
    %54 = math.exp %53 : vector<2x8x8xf32>
    %cst_26 = arith.constant dense<0.000000e+00> : vector<2x8xf32>
    %55 = vector.multi_reduction <add>, %54, %cst_26 [2] : vector<2x8x8xf32> to vector<2x8xf32>
    %56 = vector.shape_cast %55 : vector<2x8xf32> to vector<2x8x1xf32>
    %57 = tpu.reciprocal %56 {approx = true} : vector<2x8x1xf32> -> vector<2x8x1xf32>
    %58 = vector.broadcast %57 : vector<2x8x1xf32> to vector<2x8x8xf32>
    %59 = arith.mulf %54, %58 : vector<2x8x8xf32>
    "tpu.trace_start"() <{level = 10 : i32, message = "bqk,bkd->bqd"}> : () -> ()
    %cst_27 = arith.constant dense<0.000000e+00> : vector<2x8x8xf32>
    %60 = tpu.matmul %59, %48, %cst_27 {dimension_numbers = #tpu.dot_dimension_numbers<[2], [1], [1], [2], [0, 0, 0, 1, 1, 2], [0], [0]>} : vector<2x8x8xf32>, vector<2x8x8xf32>, vector<2x8x8xf32> -> vector<2x8x8xf32>
    "tpu.trace_stop"() : () -> ()
    %61 = vector.shape_cast %60 : vector<2x8x8xf32> to vector<16x8xf32>
    %c0_28 = arith.constant 0 : index
    %c16 = arith.constant 16 : index
    %62 = vector.load %arg18[%c0_28, %c16] : memref<16x32xf32, #tpu.memory_space<vmem>>, vector<16x8xf32>
    tpu.vector_store %arg18[%c0_28, %c16], %61 {strides = array<i32>} : memref<16x32xf32, #tpu.memory_space<vmem>>, vector<16x8xf32>,
    %63 = vector.extract_strided_slice %9 {offsets = [0, 0, 24], sizes = [2, 8, 8], strides = [1, 1, 1]} : vector<2x8x32xf32> to vector<2x8x8xf32>
    %64 = vector.extract_strided_slice %10 {offsets = [0, 0, 24], sizes = [2, 8, 8], strides = [1, 1, 1]} : vector<2x8x32xf32> to vector<2x8x8xf32>
    %65 = vector.extract_strided_slice %11 {offsets = [0, 0, 24], sizes = [2, 8, 8], strides = [1, 1, 1]} : vector<2x8x32xf32> to vector<2x8x8xf32>
    "tpu.trace_start"() <{level = 10 : i32, message = "bqd,bkd->bqk"}> : () -> ()
    %cst_29 = arith.constant dense<0.000000e+00> : vector<2x8x8xf32>
    %66 = tpu.matmul %63, %64, %cst_29 {dimension_numbers = #tpu.dot_dimension_numbers<[2], [2], [1], [1], [0, 0, 0, 1, 1, 1], [0], [0]>} : vector<2x8x8xf32>, vector<2x8x8xf32>, vector<2x8x8xf32> -> vector<2x8x8xf32>
    "tpu.trace_stop"() : () -> ()
    %cst_30 = arith.constant dense<0xFF800000> : vector<2x8xf32>
    %67 = vector.multi_reduction <maximumf>, %66, %cst_30 [2] : vector<2x8x8xf32> to vector<2x8xf32>
    %68 = vector.shape_cast %67 : vector<2x8xf32> to vector<2x8x1xf32>
    %69 = vector.broadcast %68 : vector<2x8x1xf32> to vector<2x8x8xf32>
    %70 = arith.subf %66, %69 : vector<2x8x8xf32>
    %71 = math.exp %70 : vector<2x8x8xf32>
    %cst_31 = arith.constant dense<0.000000e+00> : vector<2x8xf32>
    %72 = vector.multi_reduction <add>, %71, %cst_31 [2] : vector<2x8x8xf32> to vector<2x8xf32>
    %73 = vector.shape_cast %72 : vector<2x8xf32> to vector<2x8x1xf32>
    %74 = tpu.reciprocal %73 {approx = true} : vector<2x8x1xf32> -> vector<2x8x1xf32>
    %75 = vector.broadcast %74 : vector<2x8x1xf32> to vector<2x8x8xf32>
    %76 = arith.mulf %71, %75 : vector<2x8x8xf32>
    "tpu.trace_start"() <{level = 10 : i32, message = "bqk,bkd->bqd"}> : () -> ()
    %cst_32 = arith.constant dense<0.000000e+00> : vector<2x8x8xf32>
    %77 = tpu.matmul %76, %65, %cst_32 {dimension_numbers = #tpu.dot_dimension_numbers<[2], [1], [1], [2], [0, 0, 0, 1, 1, 2], [0], [0]>} : vector<2x8x8xf32>, vector<2x8x8xf32>, vector<2x8x8xf32> -> vector<2x8x8xf32>
    "tpu.trace_stop"() : () -> ()
    %78 = vector.shape_cast %77 : vector<2x8x8xf32> to vector<16x8xf32>
    %c0_33 = arith.constant 0 : index
    %c24 = arith.constant 24 : index
    %79 = vector.load %arg18[%c0_33, %c24] : memref<16x32xf32, #tpu.memory_space<vmem>>, vector<16x8xf32>
    tpu.vector_store %arg18[%c0_33, %c24], %78 {strides = array<i32>} : memref<16x32xf32, #tpu.memory_space<vmem>>, vector<16x8xf32>,
    %c0_34 = arith.constant 0 : index
    %c0_35 = arith.constant 0 : index
    %80 = vector.load %arg18[%c0_34, %c0_35] : memref<16x32xf32, #tpu.memory_space<vmem>>, vector<16x32xf32>
    %c0_36 = arith.constant 0 : index
    %c0_37 = arith.constant 0 : index
    %81 = vector.load %arg7[%c0_36, %c0_37] : memref<32x32xf32, #tpu.memory_space<vmem>>, vector<32x32xf32>
    %cst_38 = arith.constant dense<0.000000e+00> : vector<16x32xf32>
    %82 = tpu.matmul %80, %81, %cst_38 {dimension_numbers = #tpu.dot_dimension_numbers<[1], [0], [0], [1], [0, 0, 1, 1], [], []>} : vector<16x32xf32>, vector<32x32xf32>, vector<16x32xf32> -> vector<16x32xf32>
    %c0_39 = arith.constant 0 : index
    %c0_40 = arith.constant 0 : index
    %83 = vector.load %arg8[%c0_39, %c0_40] : memref<1x32xf32, #tpu.memory_space<vmem>>, vector<1x32xf32>
    %84 = vector.broadcast %83 : vector<1x32xf32> to vector<16x32xf32>
    %85 = arith.addf %82, %84 : vector<16x32xf32>
    %cst_41 = arith.constant dense<0.000000e+00> : vector<16xf32>
    %86 = vector.multi_reduction <add>, %85, %cst_41 [1] : vector<16x32xf32> to vector<16xf32>
    %87 = vector.shape_cast %86 : vector<16xf32> to vector<16x1xf32>
    %cst_42 = arith.constant 3.200000e+01 : f32
    %88 = vector.broadcast %cst_42 : f32 to vector<16x1xf32>
    %89 = arith.divf %87, %88 : vector<16x1xf32>
    %90 = vector.broadcast %89 : vector<16x1xf32> to vector<16x32xf32>
    %91 = arith.subf %85, %90 : vector<16x32xf32>
    %92 = arith.mulf %91, %91 : vector<16x32xf32>
    %cst_43 = arith.constant dense<0.000000e+00> : vector<16xf32>
    %93 = vector.multi_reduction <add>, %92, %cst_43 [1] : vector<16x32xf32> to vector<16xf32>
    %94 = vector.shape_cast %93 : vector<16xf32> to vector<16x1xf32>
    %cst_44 = arith.constant 3.200000e+01 : f32
    %95 = vector.broadcast %cst_44 : f32 to vector<16x1xf32>
    %96 = arith.divf %94, %95 : vector<16x1xf32>
    %97 = vector.broadcast %89 : vector<16x1xf32> to vector<16x32xf32>
    %98 = arith.subf %85, %97 : vector<16x32xf32>
    %cst_45 = arith.constant 9.99999974E-6 : f32
    %99 = vector.broadcast %cst_45 : f32 to vector<16x1xf32>
    %100 = arith.addf %96, %99 : vector<16x1xf32>
    %101 = math.rsqrt %100 : vector<16x1xf32>
    %102 = vector.broadcast %101 : vector<16x1xf32> to vector<16x32xf32>
    %103 = arith.mulf %98, %102 : vector<16x32xf32>
    %c0_46 = arith.constant 0 : index
    %c0_47 = arith.constant 0 : index
    %104 = vector.load %arg9[%c0_46, %c0_47] : memref<1x32xf32, #tpu.memory_space<vmem>>, vector<1x32xf32>
    %105 = vector.broadcast %104 : vector<1x32xf32> to vector<16x32xf32>
    %106 = arith.mulf %103, %105 : vector<16x32xf32>
    %c0_48 = arith.constant 0 : index
    %c0_49 = arith.constant 0 : index
    %107 = vector.load %arg10[%c0_48, %c0_49] : memref<1x32xf32, #tpu.memory_space<vmem>>, vector<1x32xf32>
    %108 = vector.broadcast %107 : vector<1x32xf32> to vector<16x32xf32>
    %109 = arith.addf %106, %108 : vector<16x32xf32>
    %c0_50 = arith.constant 0 : index
    %c0_51 = arith.constant 0 : index
    %110 = vector.load %arg11[%c0_50, %c0_51] : memref<32x64xf32, #tpu.memory_space<vmem>>, vector<32x64xf32>
    %cst_52 = arith.constant dense<0.000000e+00> : vector<16x64xf32>
    %111 = tpu.matmul %109, %110, %cst_52 {dimension_numbers = #tpu.dot_dimension_numbers<[1], [0], [0], [1], [0, 0, 1, 1], [], []>} : vector<16x32xf32>, vector<32x64xf32>, vector<16x64xf32> -> vector<16x64xf32>
    %c0_53 = arith.constant 0 : index
    %c0_54 = arith.constant 0 : index
    %112 = vector.load %arg12[%c0_53, %c0_54] : memref<1x64xf32, #tpu.memory_space<vmem>>, vector<1x64xf32>
    %113 = vector.broadcast %112 : vector<1x64xf32> to vector<16x64xf32>
    %114 = arith.addf %111, %113 : vector<16x64xf32>
    %cst_55 = arith.constant 0.000000e+00 : f32
    %115 = vector.broadcast %cst_55 : f32 to vector<16x64xf32>
    %116 = arith.maximumf %114, %115 : vector<16x64xf32>
    %c0_56 = arith.constant 0 : index
    %c0_57 = arith.constant 0 : index
    %117 = vector.load %arg13[%c0_56, %c0_57] : memref<64x32xf32, #tpu.memory_space<vmem>>, vector<64x32xf32>
    %cst_58 = arith.constant dense<0.000000e+00> : vector<16x32xf32>
    %118 = tpu.matmul %116, %117, %cst_58 {dimension_numbers = #tpu.dot_dimension_numbers<[1], [0], [0], [1], [0, 0, 1, 1], [], []>} : vector<16x64xf32>, vector<64x32xf32>, vector<16x32xf32> -> vector<16x32xf32>
    %c0_59 = arith.constant 0 : index
    %c0_60 = arith.constant 0 : index
    %119 = vector.load %arg14[%c0_59, %c0_60] : memref<1x32xf32, #tpu.memory_space<vmem>>, vector<1x32xf32>
    %120 = vector.broadcast %119 : vector<1x32xf32> to vector<16x32xf32>
    %121 = arith.addf %118, %120 : vector<16x32xf32>
    %cst_61 = arith.constant dense<0.000000e+00> : vector<16xf32>
    %122 = vector.multi_reduction <add>, %121, %cst_61 [1] : vector<16x32xf32> to vector<16xf32>
    %123 = vector.shape_cast %122 : vector<16xf32> to vector<16x1xf32>
    %cst_62 = arith.constant 3.200000e+01 : f32
    %124 = vector.broadcast %cst_62 : f32 to vector<16x1xf32>
    %125 = arith.divf %123, %124 : vector<16x1xf32>
    %126 = vector.broadcast %125 : vector<16x1xf32> to vector<16x32xf32>
    %127 = arith.subf %121, %126 : vector<16x32xf32>
    %128 = arith.mulf %127, %127 : vector<16x32xf32>
    %cst_63 = arith.constant dense<0.000000e+00> : vector<16xf32>
    %129 = vector.multi_reduction <add>, %128, %cst_63 [1] : vector<16x32xf32> to vector<16xf32>
    %130 = vector.shape_cast %129 : vector<16xf32> to vector<16x1xf32>
    %cst_64 = arith.constant 3.200000e+01 : f32
    %131 = vector.broadcast %cst_64 : f32 to vector<16x1xf32>
    %132 = arith.divf %130, %131 : vector<16x1xf32>
    %133 = vector.broadcast %125 : vector<16x1xf32> to vector<16x32xf32>
    %134 = arith.subf %121, %133 : vector<16x32xf32>
    %cst_65 = arith.constant 9.99999974E-6 : f32
    %135 = vector.broadcast %cst_65 : f32 to vector<16x1xf32>
    %136 = arith.addf %132, %135 : vector<16x1xf32>
    %137 = math.rsqrt %136 : vector<16x1xf32>
    %138 = vector.broadcast %137 : vector<16x1xf32> to vector<16x32xf32>
    %139 = arith.mulf %134, %138 : vector<16x32xf32>
    %c0_66 = arith.constant 0 : index
    %c0_67 = arith.constant 0 : index
    %140 = vector.load %arg15[%c0_66, %c0_67] : memref<1x32xf32, #tpu.memory_space<vmem>>, vector<1x32xf32>
    %141 = vector.broadcast %140 : vector<1x32xf32> to vector<16x32xf32>
    %142 = arith.mulf %139, %141 : vector<16x32xf32>
    %c0_68 = arith.constant 0 : index
    %c0_69 = arith.constant 0 : index
    %143 = vector.load %arg16[%c0_68, %c0_69] : memref<1x32xf32, #tpu.memory_space<vmem>>, vector<1x32xf32>
    %144 = vector.broadcast %143 : vector<1x32xf32> to vector<16x32xf32>
    %145 = arith.addf %142, %144 : vector<16x32xf32>
    %c0_70 = arith.constant 0 : index
    %c0_71 = arith.constant 0 : index
    %146 = vector.load %arg17[%c0_70, %c0_71] : memref<16x32xf32, #tpu.memory_space<vmem>>, vector<16x32xf32>
    tpu.vector_store %arg17[%c0_70, %c0_71], %145 {strides = array<i32>} : memref<16x32xf32, #tpu.memory_space<vmem>>, vector<16x32xf32>,
    return
  }
  func.func @transform_0(%arg0: i32) -> (i32, i32) {
    %c0_i32 = arith.constant 0 : i32
    %c0_i32_0 = arith.constant 0 : i32
    return %arg0, %c0_i32 : i32, i32
  }
  func.func @transform_1(%arg0: i32) -> (i32, i32) {
    %c0_i32 = arith.constant 0 : i32
    %c0_i32_0 = arith.constant 0 : i32
    return %arg0, %c0_i32 : i32, i32
  }
  func.func @transform_2(%arg0: i32) -> (i32, i32) {
    %c0_i32 = arith.constant 0 : i32
    %c0_i32_0 = arith.constant 0 : i32
    return %arg0, %c0_i32 : i32, i32
  }
  func.func @transform_3(%arg0: i32) -> (i32, i32) {
    %c0_i32 = arith.constant 0 : i32
    %c0_i32_0 = arith.constant 0 : i32
    %c0_i32_1 = arith.constant 0 : i32
    return %c0_i32, %c0_i32_0 : i32, i32
  }
  func.func @transform_4(%arg0: i32) -> (i32, i32) {
    %c0_i32 = arith.constant 0 : i32
    %c0_i32_0 = arith.constant 0 : i32
    %c0_i32_1 = arith.constant 0 : i32
    return %c0_i32, %c0_i32_0 : i32, i32
  }
  func.func @transform_5(%arg0: i32) -> (i32, i32) {
    %c0_i32 = arith.constant 0 : i32
    %c0_i32_0 = arith.constant 0 : i32
    %c0_i32_1 = arith.constant 0 : i32
    return %c0_i32, %c0_i32_0 : i32, i32
  }
  func.func @transform_6(%arg0: i32) -> (i32, i32) {
    %c0_i32 = arith.constant 0 : i32
    %c0_i32_0 = arith.constant 0 : i32
    %c0_i32_1 = arith.constant 0 : i32
    return %c0_i32, %c0_i32_0 : i32, i32
  }
  func.func @transform_7(%arg0: i32) -> (i32, i32) {
    %c0_i32 = arith.constant 0 : i32
    %c0_i32_0 = arith.constant 0 : i32
    %c0_i32_1 = arith.constant 0 : i32
    return %c0_i32, %c0_i32_0 : i32, i32
  }
  func.func @transform_8(%arg0: i32) -> (i32, i32) {
    %c0_i32 = arith.constant 0 : i32
    %c0_i32_0 = arith.constant 0 : i32
    %c0_i32_1 = arith.constant 0 : i32
    return %c0_i32, %c0_i32_0 : i32, i32
  }
  func.func @transform_9(%arg0: i32) -> (i32, i32) {
    %c0_i32 = arith.constant 0 : i32
    %c0_i32_0 = arith.constant 0 : i32
    %c0_i32_1 = arith.constant 0 : i32
    return %c0_i32, %c0_i32_0 : i32, i32
  }
  func.func @transform_10(%arg0: i32) -> (i32, i32) {
    %c0_i32 = arith.constant 0 : i32
    %c0_i32_0 = arith.constant 0 : i32
    %c0_i32_1 = arith.constant 0 : i32
    return %c0_i32, %c0_i32_0 : i32, i32
  }
  func.func @transform_11(%arg0: i32) -> (i32, i32) {
    %c0_i32 = arith.constant 0 : i32
    %c0_i32_0 = arith.constant 0 : i32
    %c0_i32_1 = arith.constant 0 : i32
    return %c0_i32, %c0_i32_0 : i32, i32
  }
  func.func @transform_12(%arg0: i32) -> (i32, i32) {
    %c0_i32 = arith.constant 0 : i32
    %c0_i32_0 = arith.constant 0 : i32
    %c0_i32_1 = arith.constant 0 : i32
    return %c0_i32, %c0_i32_0 : i32, i32
  }
  func.func @transform_13(%arg0: i32) -> (i32, i32) {
    %c0_i32 = arith.constant 0 : i32
    %c0_i32_0 = arith.constant 0 : i32
    %c0_i32_1 = arith.constant 0 : i32
    return %c0_i32, %c0_i32_0 : i32, i32
  }
  func.func @transform_14(%arg0: i32) -> (i32, i32) {
    %c0_i32 = arith.constant 0 : i32
    %c0_i32_0 = arith.constant 0 : i32
    %c0_i32_1 = arith.constant 0 : i32
    return %c0_i32, %c0_i32_0 : i32, i32
  }
  func.func @transform_15(%arg0: i32) -> (i32, i32) {
    %c0_i32 = arith.constant 0 : i32
    %c0_i32_0 = arith.constant 0 : i32
    %c0_i32_1 = arith.constant 0 : i32
    return %c0_i32, %c0_i32_0 : i32, i32
  }
  func.func @transform_16(%arg0: i32) -> (i32, i32) {
    %c0_i32 = arith.constant 0 : i32
    %c0_i32_0 = arith.constant 0 : i32
    return %arg0, %c0_i32 : i32, i32
  }
}

</mosaic_0001>

<llo_original>
// kernel: tpu_custom_call.1
$region0: #{tpu_custom_call.1}
  #allocation0 [shape = 'u32[]', space=smem, size = 0x4, offset = 0x4, fixed_abs, tag = 'smem constant byte address 0x4 - core index']
  #allocation1 [shape = 'u32[72,128]{1,0:T(1,128)}', space=vmem, size = 0x9000, scoped, tag = 'internal scratch']
  #allocation2 [shape = 'f32[16,32]{1,0:T(8,128)}', space=vmem, size = 0x2000, scoped, tag = 'scratch operand']
  %s0 = inlined_call_operand.vmem [shape: f32[32,32], index: 0, kind: input, shape index: {}]
  %s1 = inlined_call_operand.vmem [shape: f32[32,32], index: 1, kind: input, shape index: {}]
  %s2 = inlined_call_operand.vmem [shape: f32[32,32], index: 2, kind: input, shape index: {}]
  %s3 = inlined_call_operand.hbm [shape: f32[32,32], index: 3, kind: input, shape index: {}]
  %s4 = inlined_call_operand.hbm [shape: f32[32,32], index: 4, kind: input, shape index: {}]
  %s5 = inlined_call_operand.hbm [shape: f32[32,32], index: 5, kind: input, shape index: {}]
  %s6 = inlined_call_operand.hbm [shape: f32[32,32], index: 6, kind: input, shape index: {}]
  %s7 = inlined_call_operand.vmem [shape: f32[1,32], index: 7, kind: input, shape index: {}]
  %s8 = inlined_call_operand.vmem [shape: f32[1,32], index: 8, kind: input, shape index: {}]
  %s9 = inlined_call_operand.vmem [shape: f32[1,32], index: 9, kind: input, shape index: {}]
  %s10 = inlined_call_operand.hbm [shape: f32[32,64], index: 10, kind: input, shape index: {}]
  %s11 = inlined_call_operand.vmem [shape: f32[1,64], index: 11, kind: input, shape index: {}]
  %s12 = inlined_call_operand.vmem [shape: f32[64,32], index: 12, kind: input, shape index: {}]
  %s13 = inlined_call_operand.vmem [shape: f32[1,32], index: 13, kind: input, shape index: {}]
  %s14 = inlined_call_operand.vmem [shape: f32[1,32], index: 14, kind: input, shape index: {}]
  %s15 = inlined_call_operand.vmem [shape: f32[1,32], index: 15, kind: input, shape index: {}]
  %s16 = inlined_call_operand.hbm [shape: f32[32,32], index: 16, kind: output, shape index: {}]
  %s17 = sld [smem:[#allocation0]]
  $region117: #{tpu_custom_call.1} parent=0
    _
  %s19 = ssub.s32 1, %s17
  %s20 = scalar_select 0, %s19, %s17
  $region1: #{tpu_custom_call.1} parent=0
    #allocation3 [shape = 'u8[16384]{0}', space=vmem, size = 0x4000, scoped, tag = 'input window, operand 3, single buffered']
    #allocation4 [shape = 's32[2]{0}', space=sflag, size = 0x8, scoped, tag = 'scoped memory for tpu_custom_call.1']
    #allocation5 [shape = 's32[2]{0}', space=sflag, size = 0x8, scoped, tag = 'scoped memory for tpu_custom_call.1']
    #allocation6 [shape = 'u8[16384]{0}', space=vmem, size = 0x4000, scoped, tag = 'input window, operand 4, single buffered']
    #allocation7 [shape = 's32[1]{0}', space=sflag, size = 0x4, scoped, tag = 'scoped memory for tpu_custom_call.1']
    #allocation8 [shape = 'u8[16384]{0}', space=vmem, size = 0x4000, scoped, tag = 'input window, operand 5, single buffered']
    #allocation9 [shape = 'u8[16384]{0}', space=vmem, size = 0x4000, scoped, tag = 'input window, operand 6, single buffered']
    #allocation10 [shape = 's32[1]{0}', space=sflag, size = 0x4, scoped, tag = 'scoped memory for tpu_custom_call.1']
    #allocation11 [shape = 'u8[16384]{0}', space=vmem, size = 0x4000, scoped, tag = 'input window, operand 10, single buffered']
    #allocation12 [shape = 'u8[16384]{0}', space=vmem, size = 0x4000, scoped, tag = 'output window, operand 0']
    %21 = vsyncpa [#allocation4], 0
    %22 = vsyncpa [#allocation7], 0
    %23 = vsyncpa [#allocation10], 0
    %24 = vsyncpa [#allocation5], 0
    %s25 = scalar_lea.sflag [#allocation5], 1
    %26 = vsyncpa %s25, 0
    loop: start=0, step=1, limit=4
    $region2: #{tpu_custom_call.1} parent=1 // loop_pre_header
      _
    $region3: #{tpu_custom_call.1} parent=1 // loop_header
      %s28 = sphi 0, %s32
      %p29 = scmp.ge.s32.totalorder %s28, 4
      %s38 = sphi 0, %s40
      %s41 = sphi 0, %s38
      %s42 = sphi 0, %s41
      %s58 = sphi 0, %s42
      %s64 = sphi 0, %s66
      %s67 = sphi 0, %s64
      %s68 = sphi 0, %s67
      %s84 = sphi 0, %s68
      %s90 = sphi 0, %s92
      %s93 = sphi 0, %s90
      %s94 = sphi 0, %s93
      %s110 = sphi 0, %s94
      %s114 = sphi 0, %s114
      %s116 = sphi 0, %s114
      %s117 = sphi 0, %s116
      %s131 = sphi 0, %s117
      %s135 = sphi 0, %s135
      %s137 = sphi 0, %s135
      %s138 = sphi 0, %s137
      %s152 = sphi 0, %s138
      %s156 = sphi 0, %s156
      %s158 = sphi 0, %s156
      %s159 = sphi 0, %s158
      %s173 = sphi 0, %s159
      %s177 = sphi 0, %s177
      %s179 = sphi 0, %s177
      %s180 = sphi 0, %s179
      %s194 = sphi 0, %s180
      %s198 = sphi 0, %s198
      %s200 = sphi 0, %s198
      %s201 = sphi 0, %s200
      %s215 = sphi 0, %s201
      %s219 = sphi 0, %s219
      %s221 = sphi 0, %s219
      %s222 = sphi 0, %s221
      %s236 = sphi 0, %s222
      %s240 = sphi 0, %s240
      %s242 = sphi 0, %s240
      %s243 = sphi 0, %s242
      %s257 = sphi 0, %s243
      %s261 = sphi 0, %s261
      %s263 = sphi 0, %s261
      %s264 = sphi 0, %s263
      %s278 = sphi 0, %s264
      %s282 = sphi 0, %s282
      %s284 = sphi 0, %s282
      %s285 = sphi 0, %s284
      %s299 = sphi 0, %s285
      %s303 = sphi 0, %s303
      %s305 = sphi 0, %s303
      %s306 = sphi 0, %s305
      %s320 = sphi 0, %s306
      %s324 = sphi 0, %s324
      %s326 = sphi 0, %s324
      %s327 = sphi 0, %s326
      %s341 = sphi 0, %s327
      %s345 = sphi 0, %s345
      %s347 = sphi 0, %s345
      %s348 = sphi 0, %s347
      %s362 = sphi 0, %s348
      %s366 = sphi 0, %s366
      %s368 = sphi 0, %s366
      %s369 = sphi 0, %s368
      %s383 = sphi 0, %s369
      %s389 = sphi 0, %s391
      %s392 = sphi 0, %s389
      %s393 = sphi 0, %s392
      %s409 = sphi 0, %s393
    $region4: #{tpu_custom_call.1} parent=1 // loop_header_branch
      %31 = sbr.rel (%p29) target = $region8
    $region5: #{tpu_custom_call.1} parent=1 // loop_body
      %s33 = ssub.s32 %s28, 1
      %s34 = ssub.s32 %s28, 2
      %s35 = sadd.s32 %s28, 1
      %s36 = ssub.s32 %s28, %s35
      %p37 = scmp.eq.s32.totalorder %s36, 0
      %s39 = sadd.s32 %s38, 1
      %s40 = scalar_select %p37, %s38, %s39
      %p43 = pneg %p37
      %p44 = scmp.eq.s32.totalorder %s28, 1
      %p45 = por %p43, %p44
      %p46 = scmp.ne.s32.totalorder %s38, %s41
      %p47 = scmp.eq.s32.totalorder %s28, 0
      %p48 = por %p46, %p47
      %p49 = scmp.ne.s32.totalorder %s38, %s41
      %p50 = scmp.eq.s32.totalorder %s33, 1
      %p51 = por %p49, %p50
      %p52 = scmp.ne.s32.totalorder %s41, %s42
      %p53 = scmp.eq.s32.totalorder %s33, 0
      %p54 = por %p52, %p53
      %p55 = scmp.ne.s32.totalorder %s41, %s42
      %p56 = scmp.eq.s32.totalorder %s34, 1
      %p57 = por %p55, %p56
      %p59 = scmp.ne.s32.totalorder %s42, %s58
      %p60 = scmp.eq.s32.totalorder %s34, 0
      %p61 = por %p59, %p60
      %s62 = ssub.s32 %s28, %s35
      %p63 = scmp.eq.s32.totalorder %s62, 0
      %s65 = sadd.s32 %s64, 1
      %s66 = scalar_select %p63, %s64, %s65
      %p69 = pneg %p63
      %p70 = scmp.eq.s32.totalorder %s28, 1
      %p71 = por %p69, %p70
      %p72 = scmp.ne.s32.totalorder %s64, %s67
      %p73 = scmp.eq.s32.totalorder %s28, 0
      %p74 = por %p72, %p73
      %p75 = scmp.ne.s32.totalorder %s64, %s67
      %p76 = scmp.eq.s32.totalorder %s33, 1
      %p77 = por %p75, %p76
      %p78 = scmp.ne.s32.totalorder %s67, %s68
      %p79 = scmp.eq.s32.totalorder %s33, 0
      %p80 = por %p78, %p79
      %p81 = scmp.ne.s32.totalorder %s67, %s68
      %p82 = scmp.eq.s32.totalorder %s34, 1
      %p83 = por %p81, %p82
      %p85 = scmp.ne.s32.totalorder %s68, %s84
      %p86 = scmp.eq.s32.totalorder %s34, 0
      %p87 = por %p85, %p86
      %s88 = ssub.s32 %s28, %s35
      %p89 = scmp.eq.s32.totalorder %s88, 0
      %s91 = sadd.s32 %s90, 1
      %s92 = scalar_select %p89, %s90, %s91
      %p95 = pneg %p89
      %p96 = scmp.eq.s32.totalorder %s28, 1
      %p97 = por %p95, %p96
      %p98 = scmp.ne.s32.totalorder %s90, %s93
      %p99 = scmp.eq.s32.totalorder %s28, 0
      %p100 = por %p98, %p99
      %p101 = scmp.ne.s32.totalorder %s90, %s93
      %p102 = scmp.eq.s32.totalorder %s33, 1
      %p103 = por %p101, %p102
      %p104 = scmp.ne.s32.totalorder %s93, %s94
      %p105 = scmp.eq.s32.totalorder %s33, 0
      %p106 = por %p104, %p105
      %p107 = scmp.ne.s32.totalorder %s93, %s94
      %p108 = scmp.eq.s32.totalorder %s34, 1
      %p109 = por %p107, %p108
      %p111 = scmp.ne.s32.totalorder %s94, %s110
      %p112 = scmp.eq.s32.totalorder %s34, 0
      %p113 = por %p111, %p112
      %s115 = sadd.s32 %s114, 1
      %p118 = scmp.eq.s32.totalorder %s28, 1
      %p119 = scmp.ne.s32.totalorder %s114, %s116
      %p120 = scmp.eq.s32.totalorder %s28, 0
      %p121 = por %p119, %p120
      %p122 = scmp.ne.s32.totalorder %s114, %s116
      %p123 = scmp.eq.s32.totalorder %s33, 1
      %p124 = por %p122, %p123
      %p125 = scmp.ne.s32.totalorder %s116, %s117
      %p126 = scmp.eq.s32.totalorder %s33, 0
      %p127 = por %p125, %p126
      %p128 = scmp.ne.s32.totalorder %s116, %s117
      %p129 = scmp.eq.s32.totalorder %s34, 1
      %p130 = por %p128, %p129
      %p132 = scmp.ne.s32.totalorder %s117, %s131
      %p133 = scmp.eq.s32.totalorder %s34, 0
      %p134 = por %p132, %p133
      %s136 = sadd.s32 %s135, 1
      %p139 = scmp.eq.s32.totalorder %s28, 1
      %p140 = scmp.ne.s32.totalorder %s135, %s137
      %p141 = scmp.eq.s32.totalorder %s28, 0
      %p142 = por %p140, %p141
      %p143 = scmp.ne.s32.totalorder %s135, %s137
      %p144 = scmp.eq.s32.totalorder %s33, 1
      %p145 = por %p143, %p144
      %p146 = scmp.ne.s32.totalorder %s137, %s138
      %p147 = scmp.eq.s32.totalorder %s33, 0
      %p148 = por %p146, %p147
      %p149 = scmp.ne.s32.totalorder %s137, %s138
      %p150 = scmp.eq.s32.totalorder %s34, 1
      %p151 = por %p149, %p150
      %p153 = scmp.ne.s32.totalorder %s138, %s152
      %p154 = scmp.eq.s32.totalorder %s34, 0
      %p155 = por %p153, %p154
      %s157 = sadd.s32 %s156, 1
      %p160 = scmp.eq.s32.totalorder %s28, 1
      %p161 = scmp.ne.s32.totalorder %s156, %s158
      %p162 = scmp.eq.s32.totalorder %s28, 0
      %p163 = por %p161, %p162
      %p164 = scmp.ne.s32.totalorder %s156, %s158
      %p165 = scmp.eq.s32.totalorder %s33, 1
      %p166 = por %p164, %p165
      %p167 = scmp.ne.s32.totalorder %s158, %s159
      %p168 = scmp.eq.s32.totalorder %s33, 0
      %p169 = por %p167, %p168
      %p170 = scmp.ne.s32.totalorder %s158, %s159
      %p171 = scmp.eq.s32.totalorder %s34, 1
      %p172 = por %p170, %p171
      %p174 = scmp.ne.s32.totalorder %s159, %s173
      %p175 = scmp.eq.s32.totalorder %s34, 0
      %p176 = por %p174, %p175
      %s178 = sadd.s32 %s177, 1
      %p181 = scmp.eq.s32.totalorder %s28, 1
      %p182 = scmp.ne.s32.totalorder %s177, %s179
      %p183 = scmp.eq.s32.totalorder %s28, 0
      %p184 = por %p182, %p183
      %p185 = scmp.ne.s32.totalorder %s177, %s179
      %p186 = scmp.eq.s32.totalorder %s33, 1
      %p187 = por %p185, %p186
      %p188 = scmp.ne.s32.totalorder %s179, %s180
      %p189 = scmp.eq.s32.totalorder %s33, 0
      %p190 = por %p188, %p189
      %p191 = scmp.ne.s32.totalorder %s179, %s180
      %p192 = scmp.eq.s32.totalorder %s34, 1
      %p193 = por %p191, %p192
      %p195 = scmp.ne.s32.totalorder %s180, %s194
      %p196 = scmp.eq.s32.totalorder %s34, 0
      %p197 = por %p195, %p196
      %s199 = sadd.s32 %s198, 1
      %p202 = scmp.eq.s32.totalorder %s28, 1
      %p203 = scmp.ne.s32.totalorder %s198, %s200
      %p204 = scmp.eq.s32.totalorder %s28, 0
      %p205 = por %p203, %p204
      %p206 = scmp.ne.s32.totalorder %s198, %s200
      %p207 = scmp.eq.s32.totalorder %s33, 1
      %p208 = por %p206, %p207
      %p209 = scmp.ne.s32.totalorder %s200, %s201
      %p210 = scmp.eq.s32.totalorder %s33, 0
      %p211 = por %p209, %p210
      %p212 = scmp.ne.s32.totalorder %s200, %s201
      %p213 = scmp.eq.s32.totalorder %s34, 1
      %p214 = por %p212, %p213
      %p216 = scmp.ne.s32.totalorder %s201, %s215
      %p217 = scmp.eq.s32.totalorder %s34, 0
      %p218 = por %p216, %p217
      %s220 = sadd.s32 %s219, 1
      %p223 = scmp.eq.s32.totalorder %s28, 1
      %p224 = scmp.ne.s32.totalorder %s219, %s221
      %p225 = scmp.eq.s32.totalorder %s28, 0
      %p226 = por %p224, %p225
      %p227 = scmp.ne.s32.totalorder %s219, %s221
      %p228 = scmp.eq.s32.totalorder %s33, 1
      %p229 = por %p227, %p228
      %p230 = scmp.ne.s32.totalorder %s221, %s222
      %p231 = scmp.eq.s32.totalorder %s33, 0
      %p232 = por %p230, %p231
      %p233 = scmp.ne.s32.totalorder %s221, %s222
      %p234 = scmp.eq.s32.totalorder %s34, 1
      %p235 = por %p233, %p234
      %p237 = scmp.ne.s32.totalorder %s222, %s236
      %p238 = scmp.eq.s32.totalorder %s34, 0
      %p239 = por %p237, %p238
      %s241 = sadd.s32 %s240, 1
      %p244 = scmp.eq.s32.totalorder %s28, 1
      %p245 = scmp.ne.s32.totalorder %s240, %s242
      %p246 = scmp.eq.s32.totalorder %s28, 0
      %p247 = por %p245, %p246
      %p248 = scmp.ne.s32.totalorder %s240, %s242
      %p249 = scmp.eq.s32.totalorder %s33, 1
      %p250 = por %p248, %p249
      %p251 = scmp.ne.s32.totalorder %s242, %s243
      %p252 = scmp.eq.s32.totalorder %s33, 0
      %p253 = por %p251, %p252
      %p254 = scmp.ne.s32.totalorder %s242, %s243
      %p255 = scmp.eq.s32.totalorder %s34, 1
      %p256 = por %p254, %p255
      %p258 = scmp.ne.s32.totalorder %s243, %s257
      %p259 = scmp.eq.s32.totalorder %s34, 0
      %p260 = por %p258, %p259
      %s262 = sadd.s32 %s261, 1
      %p265 = scmp.eq.s32.totalorder %s28, 1
      %p266 = scmp.ne.s32.totalorder %s261, %s263
      %p267 = scmp.eq.s32.totalorder %s28, 0
      %p268 = por %p266, %p267
      %p269 = scmp.ne.s32.totalorder %s261, %s263
      %p270 = scmp.eq.s32.totalorder %s33, 1
      %p271 = por %p269, %p270
      %p272 = scmp.ne.s32.totalorder %s263, %s264
      %p273 = scmp.eq.s32.totalorder %s33, 0
      %p274 = por %p272, %p273
      %p275 = scmp.ne.s32.totalorder %s263, %s264
      %p276 = scmp.eq.s32.totalorder %s34, 1
      %p277 = por %p275, %p276
      %p279 = scmp.ne.s32.totalorder %s264, %s278
      %p280 = scmp.eq.s32.totalorder %s34, 0
      %p281 = por %p279, %p280
      %s283 = sadd.s32 %s282, 1
      %p286 = scmp.eq.s32.totalorder %s28, 1
      %p287 = scmp.ne.s32.totalorder %s282, %s284
      %p288 = scmp.eq.s32.totalorder %s28, 0
      %p289 = por %p287, %p288
      %p290 = scmp.ne.s32.totalorder %s282, %s284
      %p291 = scmp.eq.s32.totalorder %s33, 1
      %p292 = por %p290, %p291
      %p293 = scmp.ne.s32.totalorder %s284, %s285
      %p294 = scmp.eq.s32.totalorder %s33, 0
      %p295 = por %p293, %p294
      %p296 = scmp.ne.s32.totalorder %s284, %s285
      %p297 = scmp.eq.s32.totalorder %s34, 1
      %p298 = por %p296, %p297
      %p300 = scmp.ne.s32.totalorder %s285, %s299
      %p301 = scmp.eq.s32.totalorder %s34, 0
      %p302 = por %p300, %p301
      %s304 = sadd.s32 %s303, 1
      %p307 = scmp.eq.s32.totalorder %s28, 1
      %p308 = scmp.ne.s32.totalorder %s303, %s305
      %p309 = scmp.eq.s32.totalorder %s28, 0
      %p310 = por %p308, %p309
      %p311 = scmp.ne.s32.totalorder %s303, %s305
      %p312 = scmp.eq.s32.totalorder %s33, 1
      %p313 = por %p311, %p312
      %p314 = scmp.ne.s32.totalorder %s305, %s306
      %p315 = scmp.eq.s32.totalorder %s33, 0
      %p316 = por %p314, %p315
      %p317 = scmp.ne.s32.totalorder %s305, %s306
      %p318 = scmp.eq.s32.totalorder %s34, 1
      %p319 = por %p317, %p318
      %p321 = scmp.ne.s32.totalorder %s306, %s320
      %p322 = scmp.eq.s32.totalorder %s34, 0
      %p323 = por %p321, %p322
      %s325 = sadd.s32 %s324, 1
      %p328 = scmp.eq.s32.totalorder %s28, 1
      %p329 = scmp.ne.s32.totalorder %s324, %s326
      %p330 = scmp.eq.s32.totalorder %s28, 0
      %p331 = por %p329, %p330
      %p332 = scmp.ne.s32.totalorder %s324, %s326
      %p333 = scmp.eq.s32.totalorder %s33, 1
      %p334 = por %p332, %p333
      %p335 = scmp.ne.s32.totalorder %s326, %s327
      %p336 = scmp.eq.s32.totalorder %s33, 0
      %p337 = por %p335, %p336
      %p338 = scmp.ne.s32.totalorder %s326, %s327
      %p339 = scmp.eq.s32.totalorder %s34, 1
      %p340 = por %p338, %p339
      %p342 = scmp.ne.s32.totalorder %s327, %s341
      %p343 = scmp.eq.s32.totalorder %s34, 0
      %p344 = por %p342, %p343
      %s346 = sadd.s32 %s345, 1
      %p349 = scmp.eq.s32.totalorder %s28, 1
      %p350 = scmp.ne.s32.totalorder %s345, %s347
      %p351 = scmp.eq.s32.totalorder %s28, 0
      %p352 = por %p350, %p351
      %p353 = scmp.ne.s32.totalorder %s345, %s347
      %p354 = scmp.eq.s32.totalorder %s33, 1
      %p355 = por %p353, %p354
      %p356 = scmp.ne.s32.totalorder %s347, %s348
      %p357 = scmp.eq.s32.totalorder %s33, 0
      %p358 = por %p356, %p357
      %p359 = scmp.ne.s32.totalorder %s347, %s348
      %p360 = scmp.eq.s32.totalorder %s34, 1
      %p361 = por %p359, %p360
      %p363 = scmp.ne.s32.totalorder %s348, %s362
      %p364 = scmp.eq.s32.totalorder %s34, 0
      %p365 = por %p363, %p364
      %s367 = sadd.s32 %s366, 1
      %p370 = scmp.eq.s32.totalorder %s28, 1
      %p371 = scmp.ne.s32.totalorder %s366, %s368
      %p372 = scmp.eq.s32.totalorder %s28, 0
      %p373 = por %p371, %p372
      %p374 = scmp.ne.s32.totalorder %s366, %s368
      %p375 = scmp.eq.s32.totalorder %s33, 1
      %p376 = por %p374, %p375
      %p377 = scmp.ne.s32.totalorder %s368, %s369
      %p378 = scmp.eq.s32.totalorder %s33, 0
      %p379 = por %p377, %p378
      %p380 = scmp.ne.s32.totalorder %s368, %s369
      %p381 = scmp.eq.s32.totalorder %s34, 1
      %p382 = por %p380, %p381
      %p384 = scmp.ne.s32.totalorder %s369, %s383
      %p385 = scmp.eq.s32.totalorder %s34, 0
      %p386 = por %p384, %p385
      %s387 = ssub.s32 %s28, %s35
      %p388 = scmp.eq.s32.totalorder %s387, 0
      %s390 = sadd.s32 %s389, 1
      %s391 = scalar_select %p388, %s389, %s390
      %p394 = pneg %p388
      %p395 = scmp.eq.s32.totalorder %s28, 1
      %p396 = por %p394, %p395
      %p397 = scmp.ne.s32.totalorder %s389, %s392
      %p398 = scmp.eq.s32.totalorder %s28, 0
      %p399 = por %p397, %p398
      %p400 = scmp.ne.s32.totalorder %s389, %s392
      %p401 = scmp.eq.s32.totalorder %s33, 1
      %p402 = por %p400, %p401
      %p403 = scmp.ne.s32.totalorder %s392, %s393
      %p404 = scmp.eq.s32.totalorder %s33, 0
      %p405 = por %p403, %p404
      %p406 = scmp.ne.s32.totalorder %s392, %s393
      %p407 = scmp.eq.s32.totalorder %s34, 1
      %p408 = por %p406, %p407
      %p410 = scmp.ne.s32.totalorder %s393, %s409
      %p411 = scmp.eq.s32.totalorder %s34, 0
      %p412 = por %p410, %p411
      %p413 = scmp.le.s32.totalorder 1, %s28
      %p414 = scmp.lt.s32.totalorder %s28, 3
      %p415 = pnand %p413, %p414
      %p416 = pneg %p415
      // Predicated region
      $region9: #{tpu_custom_call.1} parent=5 // pred_check
        _
      $region10: #{tpu_custom_call.1} parent=5 // pred_check_branch
        %418 = sbr.rel (%p415) target = $region12
      $region11: #{tpu_custom_call.1} parent=5 // pred_region
        %s419 = ssub.s32 %s28, 1
        // Predicated region
        $region13: #{tpu_custom_call.1} parent=11 // pred_check
          %p420 = pneg %p127
        $region14: #{tpu_custom_call.1} parent=11 // pred_check_branch
          %422 = sbr.rel (%p420) target = $region16
        $region15: #{tpu_custom_call.1} parent=11 // pred_region
          %424 = vsyncadd [#allocation4], 0
          %s425 = sshll.u32 %s3, 4
          %s426 = int_to_ptr.hbm [resolvable:$true] %s425
          %s427 = sshll.u32 [#allocation3], 4
          %s428 = int_to_ptr.vmem [resolvable:$true] %s427
          %433 = dma.hbm_to_vmem [thread:$0]  %s426, 512, %s428, [#allocation4], 128, 128, 8
        $region16: #{tpu_custom_call.1} parent=11 // pred_fallthru
          _
        // Predicated region
        $region17: #{tpu_custom_call.1} parent=11 // pred_check
          %p434 = pneg %p148
        $region18: #{tpu_custom_call.1} parent=11 // pred_check_branch
          %436 = sbr.rel (%p434) target = $region20
        $region19: #{tpu_custom_call.1} parent=11 // pred_region
          %438 = vsyncadd [#allocation7], 0
          %s439 = sshll.u32 %s4, 4
          %s440 = int_to_ptr.hbm [resolvable:$true] %s439
          %s441 = sshll.u32 [#allocation6], 4
          %s442 = int_to_ptr.vmem [resolvable:$true] %s441
          %447 = dma.hbm_to_vmem [thread:$0]  %s440, 512, %s442, [#allocation7], 128, 128, 8
        $region20: #{tpu_custom_call.1} parent=11 // pred_fallthru
          _
        // Predicated region
        $region21: #{tpu_custom_call.1} parent=11 // pred_check
          %p448 = pneg %p169
        $region22: #{tpu_custom_call.1} parent=11 // pred_check_branch
          %450 = sbr.rel (%p448) target = $region24
        $region23: #{tpu_custom_call.1} parent=11 // pred_region
          %452 = vsyncadd [#allocation7], 0
          %s453 = sshll.u32 %s5, 4
          %s454 = int_to_ptr.hbm [resolvable:$true] %s453
          %s455 = sshll.u32 [#allocation8], 4
          %s456 = int_to_ptr.vmem [resolvable:$true] %s455
          %461 = dma.hbm_to_vmem [thread:$0]  %s454, 512, %s456, [#allocation7], 128, 128, 8
        $region24: #{tpu_custom_call.1} parent=11 // pred_fallthru
          _
        // Predicated region
        $region25: #{tpu_custom_call.1} parent=11 // pred_check
          %p462 = pneg %p190
        $region26: #{tpu_custom_call.1} parent=11 // pred_check_branch
          %464 = sbr.rel (%p462) target = $region28
        $region27: #{tpu_custom_call.1} parent=11 // pred_region
          %466 = vsyncadd [#allocation10], 0
          %s467 = sshll.u32 %s6, 4
          %s468 = int_to_ptr.hbm [resolvable:$true] %s467
          %s469 = sshll.u32 [#allocation9], 4
          %s470 = int_to_ptr.vmem [resolvable:$true] %s469
          %475 = dma.hbm_to_vmem [thread:$0]  %s468, 512, %s470, [#allocation10], 128, 128, 8
        $region28: #{tpu_custom_call.1} parent=11 // pred_fallthru
          _
        // Predicated region
        $region29: #{tpu_custom_call.1} parent=11 // pred_check
          %p476 = pneg %p211
        $region30: #{tpu_custom_call.1} parent=11 // pred_check_branch
          %478 = sbr.rel (%p476) target = $region32
        $region31: #{tpu_custom_call.1} parent=11 // pred_region
          _
        $region32: #{tpu_custom_call.1} parent=11 // pred_fallthru
          _
        // Predicated region
        $region33: #{tpu_custom_call.1} parent=11 // pred_check
          %p479 = pneg %p232
        $region34: #{tpu_custom_call.1} parent=11 // pred_check_branch
          %481 = sbr.rel (%p479) target = $region36
        $region35: #{tpu_custom_call.1} parent=11 // pred_region
          _
        $region36: #{tpu_custom_call.1} parent=11 // pred_fallthru
          _
        // Predicated region
        $region37: #{tpu_custom_call.1} parent=11 // pred_check
          %p482 = pneg %p253
        $region38: #{tpu_custom_call.1} parent=11 // pred_check_branch
          %484 = sbr.rel (%p482) target = $region40
        $region39: #{tpu_custom_call.1} parent=11 // pred_region
          _
        $region40: #{tpu_custom_call.1} parent=11 // pred_fallthru
          _
        // Predicated region
        $region41: #{tpu_custom_call.1} parent=11 // pred_check
          %p485 = pneg %p274
        $region42: #{tpu_custom_call.1} parent=11 // pred_check_branch
          %487 = sbr.rel (%p485) target = $region44
        $region43: #{tpu_custom_call.1} parent=11 // pred_region
          %489 = vsyncadd [#allocation10], 0
          %s490 = sshll.u32 %s10, 4
          %s491 = int_to_ptr.hbm [resolvable:$true] %s490
          %s492 = sshll.u32 [#allocation11], 4
          %s493 = int_to_ptr.vmem [resolvable:$true] %s492
          %498 = dma.hbm_to_vmem [thread:$0]  %s491, 512, %s493, [#allocation10], 128, 128, 8
        $region44: #{tpu_custom_call.1} parent=11 // pred_fallthru
          _
        // Predicated region
        $region45: #{tpu_custom_call.1} parent=11 // pred_check
          %p499 = pneg %p295
        $region46: #{tpu_custom_call.1} parent=11 // pred_check_branch
          %501 = sbr.rel (%p499) target = $region48
        $region47: #{tpu_custom_call.1} parent=11 // pred_region
          _
        $region48: #{tpu_custom_call.1} parent=11 // pred_fallthru
          _
        // Predicated region
        $region49: #{tpu_custom_call.1} parent=11 // pred_check
          %p502 = pneg %p316
        $region50: #{tpu_custom_call.1} parent=11 // pred_check_branch
          %504 = sbr.rel (%p502) target = $region52
        $region51: #{tpu_custom_call.1} parent=11 // pred_region
          _
        $region52: #{tpu_custom_call.1} parent=11 // pred_fallthru
          _
        // Predicated region
        $region53: #{tpu_custom_call.1} parent=11 // pred_check
          %p505 = pneg %p337
        $region54: #{tpu_custom_call.1} parent=11 // pred_check_branch
          %507 = sbr.rel (%p505) target = $region56
        $region55: #{tpu_custom_call.1} parent=11 // pred_region
          _
        $region56: #{tpu_custom_call.1} parent=11 // pred_fallthru
          _
        // Predicated region
        $region57: #{tpu_custom_call.1} parent=11 // pred_check
          %p508 = pneg %p358
        $region58: #{tpu_custom_call.1} parent=11 // pred_check_branch
          %510 = sbr.rel (%p508) target = $region60
        $region59: #{tpu_custom_call.1} parent=11 // pred_region
          _
        $region60: #{tpu_custom_call.1} parent=11 // pred_fallthru
          _
        // Predicated region
        $region61: #{tpu_custom_call.1} parent=11 // pred_check
          %p511 = pneg %p379
        $region62: #{tpu_custom_call.1} parent=11 // pred_check_branch
          %513 = sbr.rel (%p511) target = $region64
        $region63: #{tpu_custom_call.1} parent=11 // pred_region
          _
        $region64: #{tpu_custom_call.1} parent=11 // pred_fallthru
          _
      $region12: #{tpu_custom_call.1} parent=5 // pred_fallthru
        _
      %p514 = scmp.lt.s32.totalorder %s28, 2
      // Predicated region
      $region65: #{tpu_custom_call.1} parent=5 // pred_check
        %p515 = pneg %p514
      $region66: #{tpu_custom_call.1} parent=5 // pred_check_branch
        %517 = sbr.rel (%p515) target = $region68
      $region67: #{tpu_custom_call.1} parent=5 // pred_region
        // Predicated region
        $region69: #{tpu_custom_call.1} parent=67 // pred_check
          %p518 = pneg %p48
        $region70: #{tpu_custom_call.1} parent=67 // pred_check_branch
          %520 = sbr.rel (%p518) target = $region72
        $region71: #{tpu_custom_call.1} parent=67 // pred_region
          %s521 = smul.u32 2, %s28
          %p522 = scmp.lt.s32.totalorder %s521, 3
          %s523 = scalar_select %p522, %s521, 3
          %s524 = smul.addr %s523, 8
          %s525 = scalar_lea.vmem %s0, %s524
          %s526 = smul.u32 2, %s28
        $region72: #{tpu_custom_call.1} parent=67 // pred_fallthru
          _
        // Predicated region
        $region73: #{tpu_custom_call.1} parent=67 // pred_check
          %p527 = pneg %p74
        $region74: #{tpu_custom_call.1} parent=67 // pred_check_branch
          %529 = sbr.rel (%p527) target = $region76
        $region75: #{tpu_custom_call.1} parent=67 // pred_region
          %s530 = smul.u32 2, %s28
          %p531 = scmp.lt.s32.totalorder %s530, 3
          %s532 = scalar_select %p531, %s530, 3
          %s533 = smul.addr %s532, 8
          %s534 = scalar_lea.vmem %s1, %s533
          %s535 = smul.u32 2, %s28
        $region76: #{tpu_custom_call.1} parent=67 // pred_fallthru
          _
        // Predicated region
        $region77: #{tpu_custom_call.1} parent=67 // pred_check
          %p536 = pneg %p100
        $region78: #{tpu_custom_call.1} parent=67 // pred_check_branch
          %538 = sbr.rel (%p536) target = $region80
        $region79: #{tpu_custom_call.1} parent=67 // pred_region
          %s539 = smul.u32 2, %s28
          %p540 = scmp.lt.s32.totalorder %s539, 3
          %s541 = scalar_select %p540, %s539, 3
          %s542 = smul.addr %s541, 8
          %s543 = scalar_lea.vmem %s2, %s542
          %s544 = smul.u32 2, %s28
        $region80: #{tpu_custom_call.1} parent=67 // pred_fallthru
          _
      $region68: #{tpu_custom_call.1} parent=5 // pred_fallthru
        _
      %p545 = scmp.le.s32.totalorder 1, %s28
      %p546 = scmp.lt.s32.totalorder %s28, 3
      %p547 = pnand %p545, %p546
      %p548 = pneg %p547
      // Predicated region
      $region81: #{tpu_custom_call.1} parent=5 // pred_check
        _
      $region82: #{tpu_custom_call.1} parent=5 // pred_check_branch
        %550 = sbr.rel (%p547) target = $region84
      $region83: #{tpu_custom_call.1} parent=5 // pred_region
        %s551 = ssub.s32 %s28, 1
        // Predicated region
        $region85: #{tpu_custom_call.1} parent=83 // pred_check
          %p552 = pneg %p127
        $region86: #{tpu_custom_call.1} parent=83 // pred_check_branch
          %554 = sbr.rel (%p552) target = $region88
        $region87: #{tpu_custom_call.1} parent=83 // pred_region
          %556 = dma.done [#allocation4], 512
        $region88: #{tpu_custom_call.1} parent=83 // pred_fallthru
          _
        // Predicated region
        $region89: #{tpu_custom_call.1} parent=83 // pred_check
          %p557 = pneg %p148
        $region90: #{tpu_custom_call.1} parent=83 // pred_check_branch
          %559 = sbr.rel (%p557) target = $region92
        $region91: #{tpu_custom_call.1} parent=83 // pred_region
          %561 = dma.done [#allocation7], 512
        $region92: #{tpu_custom_call.1} parent=83 // pred_fallthru
          _
        // Predicated region
        $region93: #{tpu_custom_call.1} parent=83 // pred_check
          %p562 = pneg %p169
        $region94: #{tpu_custom_call.1} parent=83 // pred_check_branch
          %564 = sbr.rel (%p562) target = $region96
        $region95: #{tpu_custom_call.1} parent=83 // pred_region
          %566 = dma.done [#allocation7], 512
        $region96: #{tpu_custom_call.1} parent=83 // pred_fallthru
          _
        // Predicated region
        $region97: #{tpu_custom_call.1} parent=83 // pred_check
          %p567 = pneg %p190
        $region98: #{tpu_custom_call.1} parent=83 // pred_check_branch
          %569 = sbr.rel (%p567) target = $region100
        $region99: #{tpu_custom_call.1} parent=83 // pred_region
          %571 = dma.done [#allocation10], 512
        $region100: #{tpu_custom_call.1} parent=83 // pred_fallthru
          _
        // Predicated region
        $region101: #{tpu_custom_call.1} parent=83 // pred_check
          %p572 = pneg %p274
        $region102: #{tpu_custom_call.1} parent=83 // pred_check_branch
          %574 = sbr.rel (%p572) target = $region104
        $region103: #{tpu_custom_call.1} parent=83 // pred_region
          %576 = dma.done [#allocation10], 512
        $region104: #{tpu_custom_call.1} parent=83 // pred_fallthru
          _
        %s577 = smul.u32 2, %s33
        %p578 = scmp.lt.s32.totalorder %s577, 3
        %s579 = scalar_select %p578, %s577, 3
        %s580 = smul.addr %s579, 8
        %s581 = scalar_lea.vmem %s0, %s580
        %p582 = pneg %p54
        %p583 = pneg %p51
        %s584 = smul.u32 2, %s33
        %p585 = scmp.lt.s32.totalorder %s584, 3
        %s586 = scalar_select %p585, %s584, 3
        %s587 = smul.addr %s586, 8
        %s588 = scalar_lea.vmem %s1, %s587
        %p589 = pneg %p80
        %p590 = pneg %p77
        %s591 = smul.u32 2, %s33
        %p592 = scmp.lt.s32.totalorder %s591, 3
        %s593 = scalar_select %p592, %s591, 3
        %s594 = smul.addr %s593, 8
        %s595 = scalar_lea.vmem %s2, %s594
        %p596 = pneg %p106
        %p597 = pneg %p103
        %p598 = pneg %p127
        %p599 = pneg %p124
        %p600 = pneg %p148
        %p601 = pneg %p145
        %p602 = pneg %p169
        %p603 = pneg %p166
        %p604 = pneg %p190
        %p605 = pneg %p187
        %p606 = pneg %p211
        %p607 = pneg %p208
        %p608 = pneg %p232
        %p609 = pneg %p229
        %p610 = pneg %p253
        %p611 = pneg %p250
        %p612 = pneg %p274
        %p613 = pneg %p271
        %p614 = pneg %p295
        %p615 = pneg %p292
        %p616 = pneg %p316
        %p617 = pneg %p313
        %p618 = pneg %p337
        %p619 = pneg %p334
        %p620 = pneg %p358
        %p621 = pneg %p355
        %p622 = pneg %p379
        %p623 = pneg %p376
        %p624 = pneg %p405
        %p625 = pneg %p402
        %s626 = sand.u32 %s392, 1
        %s627 = scalar_lea.sflag [#allocation5], %s626
        %s628 = sand.u32 %s392, 1
        %s629 = smul.addr %s628, 16
        %s630 = scalar_lea.vmem [#allocation12], %s629
        %s631 = smul.u32 2, %s33
        %p632 = scmp.lt.s32.totalorder %s631, 3
        %s633 = scalar_select %p632, %s631, 3
        %s634 = smul.addr %s633, 8
        %s635 = scalar_lea.vmem %s0, %s634
        %s636 = smul.u32 2, %s33
        %s637 = smul.u32 2, %s33
        %p638 = scmp.lt.s32.totalorder %s637, 3
        %s639 = scalar_select %p638, %s637, 3
        %s640 = smul.addr %s639, 8
        %s641 = scalar_lea.vmem %s1, %s640
        %s642 = smul.u32 2, %s33
        %s643 = smul.u32 2, %s33
        %p644 = scmp.lt.s32.totalorder %s643, 3
        %s645 = scalar_select %p644, %s643, 3
        %s646 = smul.addr %s645, 8
        %s647 = scalar_lea.vmem %s2, %s646
        %s648 = smul.u32 2, %s33
        %s649 = smul.u32 2, %s33
        %v650 = vld [vmem:[%s635] sm:$0xff]
        %v651 = vld [vmem:[%s635 + $0x8] sm:$0xff]
        %v652 = vld [vmem:[#allocation3] sm:$0xff]
        %v653 = vld [vmem:[#allocation3 + $0x8] sm:$0xff]
        %v654 = vld [vmem:[#allocation3 + $0x10] sm:$0xff]
        %v655 = vld [vmem:[#allocation3 + $0x18] sm:$0xff]
        %vm656 = vcmask 261120
        %v658 = vsel %vm656, %v650, 0
        %v661 = vsel %vm656, %v651, 0
        %663 = vmatpush.msra.mxu0 0.0
        %664 = vmatpush.msra.mxu0 0.0
        %665 = vmatpush.msra.mxu0 0.0
        %666 = vmatpush.msra.mxu0 0.0
        %667 = vmatpush.msra.mxu0 0.0
        %668 = vmatpush.msra.mxu0 0.0
        %669 = vmatpush.msra.mxu0 0.0
        %670 = vmatpush.msra.mxu0 0.0
        %671 = vmatpush.msra.mxu0 0.0
        %672 = vmatpush.msra.mxu0 0.0
        %673 = vmatpush.msra.mxu0 0.0
        %674 = vmatpush.msra.mxu0 0.0
        %675 = vmatpush.msra.mxu0 %v655
        %676 = vmatpush.msra.mxu0 %v654
        %677 = vmatpush.msra.mxu0 %v653
        %678 = vmatpush.msra.mxu0 %v652
        %679 = vmatmul.f32.gmra.mxu0 %v658
        %v680 = vpop.f32.mrf.mxu0
        %v681 = vadd.f32 0.0, %v680
        %682 = vmatmul.f32.gmra.mxu0 %v661
        %v683 = vpop.f32.mrf.mxu0
        %v684 = vadd.f32 0.0, %v683
        %685 = vdwg.mxu0
        %v686 = vld [vmem:[%s641] sm:$0xff]
        %v687 = vld [vmem:[%s641 + $0x8] sm:$0xff]
        %v688 = vld [vmem:[#allocation6] sm:$0xff]
        %v689 = vld [vmem:[#allocation6 + $0x8] sm:$0xff]
        %v690 = vld [vmem:[#allocation6 + $0x10] sm:$0xff]
        %v691 = vld [vmem:[#allocation6 + $0x18] sm:$0xff]
        %v693 = vsel %vm656, %v686, 0
        %v696 = vsel %vm656, %v687, 0
        %698 = vmatpush.msra.mxu0 0.0
        %699 = vmatpush.msra.mxu0 0.0
        %700 = vmatpush.msra.mxu0 0.0
        %701 = vmatpush.msra.mxu0 0.0
        %702 = vmatpush.msra.mxu0 0.0
        %703 = vmatpush.msra.mxu0 0.0
        %704 = vmatpush.msra.mxu0 0.0
        %705 = vmatpush.msra.mxu0 0.0
        %706 = vmatpush.msra.mxu0 0.0
        %707 = vmatpush.msra.mxu0 0.0
        %708 = vmatpush.msra.mxu0 0.0
        %709 = vmatpush.msra.mxu0 0.0
        %710 = vmatpush.msra.mxu0 %v691
        %711 = vmatpush.msra.mxu0 %v690
        %712 = vmatpush.msra.mxu0 %v689
        %713 = vmatpush.msra.mxu0 %v688
        %714 = vmatmul.f32.gmra.mxu0 %v693
        %v715 = vpop.f32.mrf.mxu0
        %v716 = vadd.f32 0.0, %v715
        %717 = vmatmul.f32.gmra.mxu0 %v696
        %v718 = vpop.f32.mrf.mxu0
        %v719 = vadd.f32 0.0, %v718
        %720 = vdwg.mxu0
        %v721 = vld [vmem:[%s647] sm:$0xff]
        %v722 = vld [vmem:[%s647 + $0x8] sm:$0xff]
        %v723 = vld [vmem:[#allocation8] sm:$0xff]
        %v724 = vld [vmem:[#allocation8 + $0x8] sm:$0xff]
        %v725 = vld [vmem:[#allocation8 + $0x10] sm:$0xff]
        %v726 = vld [vmem:[#allocation8 + $0x18] sm:$0xff]
        %v728 = vsel %vm656, %v721, 0
        %v731 = vsel %vm656, %v722, 0
        %733 = vmatpush.msra.mxu0 0.0
        %734 = vmatpush.msra.mxu0 0.0
        %735 = vmatpush.msra.mxu0 0.0
        %736 = vmatpush.msra.mxu0 0.0
        %737 = vmatpush.msra.mxu0 0.0
        %738 = vmatpush.msra.mxu0 0.0
        %739 = vmatpush.msra.mxu0 0.0
        %740 = vmatpush.msra.mxu0 0.0
        %741 = vmatpush.msra.mxu0 0.0
        %742 = vmatpush.msra.mxu0 0.0
        %743 = vmatpush.msra.mxu0 0.0
        %744 = vmatpush.msra.mxu0 0.0
        %745 = vmatpush.msra.mxu0 %v726
        %746 = vmatpush.msra.mxu0 %v725
        %747 = vmatpush.msra.mxu0 %v724
        %748 = vmatpush.msra.mxu0 %v723
        %749 = vmatmul.f32.gmra.mxu0 %v728
        %v750 = vpop.f32.mrf.mxu0
        %v751 = vadd.f32 0.0, %v750
        %752 = vmatmul.f32.gmra.mxu0 %v731
        %v753 = vpop.f32.mrf.mxu0
        %v754 = vadd.f32 0.0, %v753
        %755 = vdwg.mxu0
        %vm756 = vcmask 64512
        %v758 = vsel %vm756, %v751, 0
        %v761 = vsel %vm756, %v716, 0
        %763 = vmatpush.xpose.msra.mxu0 0.0
        %764 = vmatpush.xpose.msra.mxu0 0.0
        %765 = vmatpush.xpose.msra.mxu0 0.0
        %766 = vmatpush.xpose.msra.mxu0 0.0
        %767 = vmatpush.xpose.msra.mxu0 0.0
        %768 = vmatpush.xpose.msra.mxu0 0.0
        %769 = vmatpush.xpose.msra.mxu0 0.0
        %770 = vmatpush.xpose.msra.mxu0 0.0
        %771 = vmatpush.xpose.msra.mxu0 0.0
        %772 = vmatpush.xpose.msra.mxu0 0.0
        %773 = vmatpush.xpose.msra.mxu0 0.0
        %774 = vmatpush.xpose.msra.mxu0 0.0
        %775 = vmatpush.xpose.msra.mxu0 0.0
        %776 = vmatpush.xpose.msra.mxu0 0.0
        %777 = vmatpush.xpose.msra.mxu0 0.0
        %778 = vmatpush.xpose.msra.mxu0 %v761
        %779 = vmatmul.f32.gmra.mxu0 %v758
        %v780 = vpop.f32.mrf.mxu0
        %v781 = vadd.f32 0.0, %v780
        %782 = vdwg.mxu0
        %v784 = vsel %vm756, %v754, 0
        %v787 = vsel %vm756, %v719, 0
        %789 = vmatpush.xpose.msra.mxu0 0.0
        %790 = vmatpush.xpose.msra.mxu0 0.0
        %791 = vmatpush.xpose.msra.mxu0 0.0
        %792 = vmatpush.xpose.msra.mxu0 0.0
        %793 = vmatpush.xpose.msra.mxu0 0.0
        %794 = vmatpush.xpose.msra.mxu0 0.0
        %795 = vmatpush.xpose.msra.mxu0 0.0
        %796 = vmatpush.xpose.msra.mxu0 0.0
        %797 = vmatpush.xpose.msra.mxu0 0.0
        %798 = vmatpush.xpose.msra.mxu0 0.0
        %799 = vmatpush.xpose.msra.mxu0 0.0
        %800 = vmatpush.xpose.msra.mxu0 0.0
        %801 = vmatpush.xpose.msra.mxu0 0.0
        %802 = vmatpush.xpose.msra.mxu0 0.0
        %803 = vmatpush.xpose.msra.mxu0 0.0
        %804 = vmatpush.xpose.msra.mxu0 %v787
        %805 = vmatmul.f32.gmra.mxu0 %v784
        %v806 = vpop.f32.mrf.mxu0
        %v807 = vadd.f32 0.0, %v806
        %808 = vdwg.mxu0
        %v809 = vsel %vm756, %v781, -inf
        %810 = vmax.xlane.f32.xlu0 %v809
        %v811 = vpop.xlane.xlu0 %810
        %v812 = vsel %vm756, %v807, -inf
        %813 = vmax.xlane.f32.xlu0 %v812
        %v814 = vpop.xlane.xlu0 %813
        %v815 = vsub.f32 %v781, %v811
        %v816 = vsub.f32 %v807, %v814
        %v817 = vmul.f32 %v815, 1.442695
        %v818 = vpow.pop %v817
        %v819 = vmul.f32 %v816, 1.442695
        %v820 = vpow.pop %v819
        %v821 = vsel %vm756, %v818, 0.0
        %822 = vadd.xlane.f32.xlu0 %v821
        %v823 = vpop.xlane.xlu0 %822
        %v824 = vsel %vm756, %v820, 0.0
        %825 = vadd.xlane.f32.xlu0 %v824
        %v826 = vpop.xlane.xlu0 %825
        %v827 = vrcp.pop %v823
        %v828 = vrcp.pop %v826
        %v829 = vmul.f32 %v818, %v827
        %v830 = vmul.f32 %v820, %v828
        %v832 = vsel %vm756, %v829, 0
        %834 = vmatpush.msra.mxu0 0.0
        %835 = vmatpush.msra.mxu0 0.0
        %836 = vmatpush.msra.mxu0 0.0
        %837 = vmatpush.msra.mxu0 0.0
        %838 = vmatpush.msra.mxu0 0.0
        %839 = vmatpush.msra.mxu0 0.0
        %840 = vmatpush.msra.mxu0 0.0
        %841 = vmatpush.msra.mxu0 0.0
        %842 = vmatpush.msra.mxu0 0.0
        %843 = vmatpush.msra.mxu0 0.0
        %844 = vmatpush.msra.mxu0 0.0
        %845 = vmatpush.msra.mxu0 0.0
        %846 = vmatpush.msra.mxu0 0.0
        %847 = vmatpush.msra.mxu0 0.0
        %848 = vmatpush.msra.mxu0 0.0
        %849 = vmatpush.msra.mxu0 %v681
        %850 = vmatmul.f32.gmra.mxu0 %v832
        %v851 = vpop.f32.mrf.mxu0
        %v852 = vadd.f32 0.0, %v851
        %853 = vdwg.mxu0
        %v855 = vsel %vm756, %v830, 0
        %857 = vmatpush.msra.mxu0 0.0
        %858 = vmatpush.msra.mxu0 0.0
        %859 = vmatpush.msra.mxu0 0.0
        %860 = vmatpush.msra.mxu0 0.0
        %861 = vmatpush.msra.mxu0 0.0
        %862 = vmatpush.msra.mxu0 0.0
        %863 = vmatpush.msra.mxu0 0.0
        %864 = vmatpush.msra.mxu0 0.0
        %865 = vmatpush.msra.mxu0 0.0
        %866 = vmatpush.msra.mxu0 0.0
        %867 = vmatpush.msra.mxu0 0.0
        %868 = vmatpush.msra.mxu0 0.0
        %869 = vmatpush.msra.mxu0 0.0
        %870 = vmatpush.msra.mxu0 0.0
        %871 = vmatpush.msra.mxu0 0.0
        %872 = vmatpush.msra.mxu0 %v684
        %873 = vmatmul.f32.gmra.mxu0 %v855
        %v874 = vpop.f32.mrf.mxu0
        %v875 = vadd.f32 0.0, %v874
        %876 = vdwg.mxu0
        %877 = vst.msk [vmem:[#allocation2] sm:$0xff] %vm756, %v852
        %878 = vst.msk [vmem:[#allocation2 + $0x8] sm:$0xff] %vm756, %v875
        %879 = vrot.lane.b32.xlu0 %v751, 120
        %v880 = vpop.permute.xlu0 %879
        %881 = vrot.lane.b32.xlu0 %v716, 120
        %v882 = vpop.permute.xlu0 %881
        %v883 = vsel %vm756, %v880, 0
        %v885 = vsel %vm756, %v882, 0
        %887 = vmatpush.xpose.msra.mxu0 0.0
        %888 = vmatpush.xpose.msra.mxu0 0.0
        %889 = vmatpush.xpose.msra.mxu0 0.0
        %890 = vmatpush.xpose.msra.mxu0 0.0
        %891 = vmatpush.xpose.msra.mxu0 0.0
        %892 = vmatpush.xpose.msra.mxu0 0.0
        %893 = vmatpush.xpose.msra.mxu0 0.0
        %894 = vmatpush.xpose.msra.mxu0 0.0
        %895 = vmatpush.xpose.msra.mxu0 0.0
        %896 = vmatpush.xpose.msra.mxu0 0.0
        %897 = vmatpush.xpose.msra.mxu0 0.0
        %898 = vmatpush.xpose.msra.mxu0 0.0
        %899 = vmatpush.xpose.msra.mxu0 0.0
        %900 = vmatpush.xpose.msra.mxu0 0.0
        %901 = vmatpush.xpose.msra.mxu0 0.0
        %902 = vmatpush.xpose.msra.mxu0 %v885
        %903 = vmatmul.f32.gmra.mxu0 %v883
        %v904 = vpop.f32.mrf.mxu0
        %v905 = vadd.f32 0.0, %v904
        %906 = vdwg.mxu0
        %907 = vrot.lane.b32.xlu0 %v754, 120
        %v908 = vpop.permute.xlu0 %907
        %909 = vrot.lane.b32.xlu0 %v719, 120
        %v910 = vpop.permute.xlu0 %909
        %v911 = vsel %vm756, %v908, 0
        %v913 = vsel %vm756, %v910, 0
        %915 = vmatpush.xpose.msra.mxu0 0.0
        %916 = vmatpush.xpose.msra.mxu0 0.0
        %917 = vmatpush.xpose.msra.mxu0 0.0
        %918 = vmatpush.xpose.msra.mxu0 0.0
        %919 = vmatpush.xpose.msra.mxu0 0.0
        %920 = vmatpush.xpose.msra.mxu0 0.0
        %921 = vmatpush.xpose.msra.mxu0 0.0
        %922 = vmatpush.xpose.msra.mxu0 0.0
        %923 = vmatpush.xpose.msra.mxu0 0.0
        %924 = vmatpush.xpose.msra.mxu0 0.0
        %925 = vmatpush.xpose.msra.mxu0 0.0
        %926 = vmatpush.xpose.msra.mxu0 0.0
        %927 = vmatpush.xpose.msra.mxu0 0.0
        %928 = vmatpush.xpose.msra.mxu0 0.0
        %929 = vmatpush.xpose.msra.mxu0 0.0
        %930 = vmatpush.xpose.msra.mxu0 %v913
        %931 = vmatmul.f32.gmra.mxu0 %v911
        %v932 = vpop.f32.mrf.mxu0
        %v933 = vadd.f32 0.0, %v932
        %934 = vdwg.mxu0
        %v935 = vsel %vm756, %v905, -inf
        %936 = vmax.xlane.f32.xlu0 %v935
        %v937 = vpop.xlane.xlu0 %936
        %v938 = vsel %vm756, %v933, -inf
        %939 = vmax.xlane.f32.xlu0 %v938
        %v940 = vpop.xlane.xlu0 %939
        %v941 = vsub.f32 %v905, %v937
        %v942 = vsub.f32 %v933, %v940
        %v943 = vmul.f32 %v941, 1.442695
        %v944 = vpow.pop %v943
        %v945 = vmul.f32 %v942, 1.442695
        %v946 = vpow.pop %v945
        %v947 = vsel %vm756, %v944, 0.0
        %948 = vadd.xlane.f32.xlu0 %v947
        %v949 = vpop.xlane.xlu0 %948
        %v950 = vsel %vm756, %v946, 0.0
        %951 = vadd.xlane.f32.xlu0 %v950
        %v952 = vpop.xlane.xlu0 %951
        %v953 = vrcp.pop %v949
        %v954 = vrcp.pop %v952
        %v955 = vmul.f32 %v944, %v953
        %v956 = vmul.f32 %v946, %v954
        %958 = vrot.lane.b32.xlu0 %v681, 120
        %v959 = vpop.permute.xlu0 %958
        %v962 = vsel %vm756, %v955, 0
        %964 = vmatpush.msra.mxu0 0.0
        %965 = vmatpush.msra.mxu0 0.0
        %966 = vmatpush.msra.mxu0 0.0
        %967 = vmatpush.msra.mxu0 0.0
        %968 = vmatpush.msra.mxu0 0.0
        %969 = vmatpush.msra.mxu0 0.0
        %970 = vmatpush.msra.mxu0 0.0
        %971 = vmatpush.msra.mxu0 0.0
        %972 = vmatpush.msra.mxu0 0.0
        %973 = vmatpush.msra.mxu0 0.0
        %974 = vmatpush.msra.mxu0 0.0
        %975 = vmatpush.msra.mxu0 0.0
        %976 = vmatpush.msra.mxu0 0.0
        %977 = vmatpush.msra.mxu0 0.0
        %978 = vmatpush.msra.mxu0 0.0
        %979 = vmatpush.msra.mxu0 %v959
        %980 = vmatmul.f32.gmra.mxu0 %v962
        %v981 = vpop.f32.mrf.mxu0
        %v982 = vadd.f32 0.0, %v981
        %983 = vdwg.mxu0
        %985 = vrot.lane.b32.xlu0 %v684, 120
        %v986 = vpop.permute.xlu0 %985
        %v989 = vsel %vm756, %v956, 0
        %991 = vmatpush.msra.mxu0 0.0
        %992 = vmatpush.msra.mxu0 0.0
        %993 = vmatpush.msra.mxu0 0.0
        %994 = vmatpush.msra.mxu0 0.0
        %995 = vmatpush.msra.mxu0 0.0
        %996 = vmatpush.msra.mxu0 0.0
        %997 = vmatpush.msra.mxu0 0.0
        %998 = vmatpush.msra.mxu0 0.0
        %999 = vmatpush.msra.mxu0 0.0
        %1000 = vmatpush.msra.mxu0 0.0
        %1001 = vmatpush.msra.mxu0 0.0
        %1002 = vmatpush.msra.mxu0 0.0
        %1003 = vmatpush.msra.mxu0 0.0
        %1004 = vmatpush.msra.mxu0 0.0
        %1005 = vmatpush.msra.mxu0 0.0
        %1006 = vmatpush.msra.mxu0 %v986
        %1007 = vmatmul.f32.gmra.mxu0 %v989
        %v1008 = vpop.f32.mrf.mxu0
        %v1009 = vadd.f32 0.0, %v1008
        %1010 = vdwg.mxu0
        %1013 = vrot.lane.b32.xlu0 %v982, 8
        %v1014 = vpop.permute.xlu0 %1013
        %1015 = vrot.lane.b32.xlu0 %v1009, 8
        %v1016 = vpop.permute.xlu0 %1015
        %vm1019 = vcmask 130112
        %1020 = vst.msk [vmem:[#allocation2] sm:$0xff] %vm1019, %v1014
        %1021 = vst.msk [vmem:[#allocation2 + $0x8] sm:$0xff] %vm1019, %v1016
        %1022 = vrot.lane.b32.xlu0 %v751, 112
        %v1023 = vpop.permute.xlu0 %1022
        %1024 = vrot.lane.b32.xlu0 %v716, 112
        %v1025 = vpop.permute.xlu0 %1024
        %v1026 = vsel %vm756, %v1023, 0
        %v1028 = vsel %vm756, %v1025, 0
        %1030 = vmatpush.xpose.msra.mxu0 0.0
        %1031 = vmatpush.xpose.msra.mxu0 0.0
        %1032 = vmatpush.xpose.msra.mxu0 0.0
        %1033 = vmatpush.xpose.msra.mxu0 0.0
        %1034 = vmatpush.xpose.msra.mxu0 0.0
        %1035 = vmatpush.xpose.msra.mxu0 0.0
        %1036 = vmatpush.xpose.msra.mxu0 0.0
        %1037 = vmatpush.xpose.msra.mxu0 0.0
        %1038 = vmatpush.xpose.msra.mxu0 0.0
        %1039 = vmatpush.xpose.msra.mxu0 0.0
        %1040 = vmatpush.xpose.msra.mxu0 0.0
        %1041 = vmatpush.xpose.msra.mxu0 0.0
        %1042 = vmatpush.xpose.msra.mxu0 0.0
        %1043 = vmatpush.xpose.msra.mxu0 0.0
        %1044 = vmatpush.xpose.msra.mxu0 0.0
        %1045 = vmatpush.xpose.msra.mxu0 %v1028
        %1046 = vmatmul.f32.gmra.mxu0 %v1026
        %v1047 = vpop.f32.mrf.mxu0
        %v1048 = vadd.f32 0.0, %v1047
        %1049 = vdwg.mxu0
        %1050 = vrot.lane.b32.xlu0 %v754, 112
        %v1051 = vpop.permute.xlu0 %1050
        %1052 = vrot.lane.b32.xlu0 %v719, 112
        %v1053 = vpop.permute.xlu0 %1052
        %v1054 = vsel %vm756, %v1051, 0
        %v1056 = vsel %vm756, %v1053, 0
        %1058 = vmatpush.xpose.msra.mxu0 0.0
        %1059 = vmatpush.xpose.msra.mxu0 0.0
        %1060 = vmatpush.xpose.msra.mxu0 0.0
        %1061 = vmatpush.xpose.msra.mxu0 0.0
        %1062 = vmatpush.xpose.msra.mxu0 0.0
        %1063 = vmatpush.xpose.msra.mxu0 0.0
        %1064 = vmatpush.xpose.msra.mxu0 0.0
        %1065 = vmatpush.xpose.msra.mxu0 0.0
        %1066 = vmatpush.xpose.msra.mxu0 0.0
        %1067 = vmatpush.xpose.msra.mxu0 0.0
        %1068 = vmatpush.xpose.msra.mxu0 0.0
        %1069 = vmatpush.xpose.msra.mxu0 0.0
        %1070 = vmatpush.xpose.msra.mxu0 0.0
        %1071 = vmatpush.xpose.msra.mxu0 0.0
        %1072 = vmatpush.xpose.msra.mxu0 0.0
        %1073 = vmatpush.xpose.msra.mxu0 %v1056
        %1074 = vmatmul.f32.gmra.mxu0 %v1054
        %v1075 = vpop.f32.mrf.mxu0
        %v1076 = vadd.f32 0.0, %v1075
        %1077 = vdwg.mxu0
        %v1078 = vsel %vm756, %v1048, -inf
        %1079 = vmax.xlane.f32.xlu0 %v1078
        %v1080 = vpop.xlane.xlu0 %1079
        %v1081 = vsel %vm756, %v1076, -inf
        %1082 = vmax.xlane.f32.xlu0 %v1081
        %v1083 = vpop.xlane.xlu0 %1082
        %v1084 = vsub.f32 %v1048, %v1080
        %v1085 = vsub.f32 %v1076, %v1083
        %v1086 = vmul.f32 %v1084, 1.442695
        %v1087 = vpow.pop %v1086
        %v1088 = vmul.f32 %v1085, 1.442695
        %v1089 = vpow.pop %v1088
        %v1090 = vsel %vm756, %v1087, 0.0
        %1091 = vadd.xlane.f32.xlu0 %v1090
        %v1092 = vpop.xlane.xlu0 %1091
        %v1093 = vsel %vm756, %v1089, 0.0
        %1094 = vadd.xlane.f32.xlu0 %v1093
        %v1095 = vpop.xlane.xlu0 %1094
        %v1096 = vrcp.pop %v1092
        %v1097 = vrcp.pop %v1095
        %v1098 = vmul.f32 %v1087, %v1096
        %v1099 = vmul.f32 %v1089, %v1097
        %1100 = vrot.lane.b32.xlu0 %v681, 112
        %v1101 = vpop.permute.xlu0 %1100
        %v1104 = vsel %vm756, %v1098, 0
        %1106 = vmatpush.msra.mxu0 0.0
        %1107 = vmatpush.msra.mxu0 0.0
        %1108 = vmatpush.msra.mxu0 0.0
        %1109 = vmatpush.msra.mxu0 0.0
        %1110 = vmatpush.msra.mxu0 0.0
        %1111 = vmatpush.msra.mxu0 0.0
        %1112 = vmatpush.msra.mxu0 0.0
        %1113 = vmatpush.msra.mxu0 0.0
        %1114 = vmatpush.msra.mxu0 0.0
        %1115 = vmatpush.msra.mxu0 0.0
        %1116 = vmatpush.msra.mxu0 0.0
        %1117 = vmatpush.msra.mxu0 0.0
        %1118 = vmatpush.msra.mxu0 0.0
        %1119 = vmatpush.msra.mxu0 0.0
        %1120 = vmatpush.msra.mxu0 0.0
        %1121 = vmatpush.msra.mxu0 %v1101
        %1122 = vmatmul.f32.gmra.mxu0 %v1104
        %v1123 = vpop.f32.mrf.mxu0
        %v1124 = vadd.f32 0.0, %v1123
        %1125 = vdwg.mxu0
        %1126 = vrot.lane.b32.xlu0 %v684, 112
        %v1127 = vpop.permute.xlu0 %1126
        %v1130 = vsel %vm756, %v1099, 0
        %1132 = vmatpush.msra.mxu0 0.0
        %1133 = vmatpush.msra.mxu0 0.0
        %1134 = vmatpush.msra.mxu0 0.0
        %1135 = vmatpush.msra.mxu0 0.0
        %1136 = vmatpush.msra.mxu0 0.0
        %1137 = vmatpush.msra.mxu0 0.0
        %1138 = vmatpush.msra.mxu0 0.0
        %1139 = vmatpush.msra.mxu0 0.0
        %1140 = vmatpush.msra.mxu0 0.0
        %1141 = vmatpush.msra.mxu0 0.0
        %1142 = vmatpush.msra.mxu0 0.0
        %1143 = vmatpush.msra.mxu0 0.0
        %1144 = vmatpush.msra.mxu0 0.0
        %1145 = vmatpush.msra.mxu0 0.0
        %1146 = vmatpush.msra.mxu0 0.0
        %1147 = vmatpush.msra.mxu0 %v1127
        %1148 = vmatmul.f32.gmra.mxu0 %v1130
        %v1149 = vpop.f32.mrf.mxu0
        %v1150 = vadd.f32 0.0, %v1149
        %1151 = vdwg.mxu0
        %1154 = vrot.lane.b32.xlu0 %v1124, 16
        %v1155 = vpop.permute.xlu0 %1154
        %1156 = vrot.lane.b32.xlu0 %v1150, 16
        %v1157 = vpop.permute.xlu0 %1156
        %vm1160 = vcmask 195712
        %1161 = vst.msk [vmem:[#allocation2] sm:$0xff] %vm1160, %v1155
        %1162 = vst.msk [vmem:[#allocation2 + $0x8] sm:$0xff] %vm1160, %v1157
        %1163 = vrot.lane.b32.xlu0 %v751, 104
        %v1164 = vpop.permute.xlu0 %1163
        %1165 = vrot.lane.b32.xlu0 %v716, 104
        %v1166 = vpop.permute.xlu0 %1165
        %v1167 = vsel %vm756, %v1164, 0
        %v1169 = vsel %vm756, %v1166, 0
        %1171 = vmatpush.xpose.msra.mxu0 0.0
        %1172 = vmatpush.xpose.msra.mxu0 0.0
        %1173 = vmatpush.xpose.msra.mxu0 0.0
        %1174 = vmatpush.xpose.msra.mxu0 0.0
        %1175 = vmatpush.xpose.msra.mxu0 0.0
        %1176 = vmatpush.xpose.msra.mxu0 0.0
        %1177 = vmatpush.xpose.msra.mxu0 0.0
        %1178 = vmatpush.xpose.msra.mxu0 0.0
        %1179 = vmatpush.xpose.msra.mxu0 0.0
        %1180 = vmatpush.xpose.msra.mxu0 0.0
        %1181 = vmatpush.xpose.msra.mxu0 0.0
        %1182 = vmatpush.xpose.msra.mxu0 0.0
        %1183 = vmatpush.xpose.msra.mxu0 0.0
        %1184 = vmatpush.xpose.msra.mxu0 0.0
        %1185 = vmatpush.xpose.msra.mxu0 0.0
        %1186 = vmatpush.xpose.msra.mxu0 %v1169
        %1187 = vmatmul.f32.gmra.mxu0 %v1167
        %v1188 = vpop.f32.mrf.mxu0
        %v1189 = vadd.f32 0.0, %v1188
        %1190 = vdwg.mxu0
        %1191 = vrot.lane.b32.xlu0 %v754, 104
        %v1192 = vpop.permute.xlu0 %1191
        %1193 = vrot.lane.b32.xlu0 %v719, 104
        %v1194 = vpop.permute.xlu0 %1193
        %v1195 = vsel %vm756, %v1192, 0
        %v1197 = vsel %vm756, %v1194, 0
        %1199 = vmatpush.xpose.msra.mxu0 0.0
        %1200 = vmatpush.xpose.msra.mxu0 0.0
        %1201 = vmatpush.xpose.msra.mxu0 0.0
        %1202 = vmatpush.xpose.msra.mxu0 0.0
        %1203 = vmatpush.xpose.msra.mxu0 0.0
        %1204 = vmatpush.xpose.msra.mxu0 0.0
        %1205 = vmatpush.xpose.msra.mxu0 0.0
        %1206 = vmatpush.xpose.msra.mxu0 0.0
        %1207 = vmatpush.xpose.msra.mxu0 0.0
        %1208 = vmatpush.xpose.msra.mxu0 0.0
        %1209 = vmatpush.xpose.msra.mxu0 0.0
        %1210 = vmatpush.xpose.msra.mxu0 0.0
        %1211 = vmatpush.xpose.msra.mxu0 0.0
        %1212 = vmatpush.xpose.msra.mxu0 0.0
        %1213 = vmatpush.xpose.msra.mxu0 0.0
        %1214 = vmatpush.xpose.msra.mxu0 %v1197
        %1215 = vmatmul.f32.gmra.mxu0 %v1195
        %v1216 = vpop.f32.mrf.mxu0
        %v1217 = vadd.f32 0.0, %v1216
        %1218 = vdwg.mxu0
        %v1219 = vsel %vm756, %v1189, -inf
        %1220 = vmax.xlane.f32.xlu0 %v1219
        %v1221 = vpop.xlane.xlu0 %1220
        %v1222 = vsel %vm756, %v1217, -inf
        %1223 = vmax.xlane.f32.xlu0 %v1222
        %v1224 = vpop.xlane.xlu0 %1223
        %v1225 = vsub.f32 %v1189, %v1221
        %v1226 = vsub.f32 %v1217, %v1224
        %v1227 = vmul.f32 %v1225, 1.442695
        %v1228 = vpow.pop %v1227
        %v1229 = vmul.f32 %v1226, 1.442695
        %v1230 = vpow.pop %v1229
        %v1231 = vsel %vm756, %v1228, 0.0
        %1232 = vadd.xlane.f32.xlu0 %v1231
        %v1233 = vpop.xlane.xlu0 %1232
        %v1234 = vsel %vm756, %v1230, 0.0
        %1235 = vadd.xlane.f32.xlu0 %v1234
        %v1236 = vpop.xlane.xlu0 %1235
        %v1237 = vrcp.pop %v1233
        %v1238 = vrcp.pop %v1236
        %v1239 = vmul.f32 %v1228, %v1237
        %v1240 = vmul.f32 %v1230, %v1238
        %1241 = vrot.lane.b32.xlu0 %v681, 104
        %v1242 = vpop.permute.xlu0 %1241
        %v1245 = vsel %vm756, %v1239, 0
        %1247 = vmatpush.msra.mxu0 0.0
        %1248 = vmatpush.msra.mxu0 0.0
        %1249 = vmatpush.msra.mxu0 0.0
        %1250 = vmatpush.msra.mxu0 0.0
        %1251 = vmatpush.msra.mxu0 0.0
        %1252 = vmatpush.msra.mxu0 0.0
        %1253 = vmatpush.msra.mxu0 0.0
        %1254 = vmatpush.msra.mxu0 0.0
        %1255 = vmatpush.msra.mxu0 0.0
        %1256 = vmatpush.msra.mxu0 0.0
        %1257 = vmatpush.msra.mxu0 0.0
        %1258 = vmatpush.msra.mxu0 0.0
        %1259 = vmatpush.msra.mxu0 0.0
        %1260 = vmatpush.msra.mxu0 0.0
        %1261 = vmatpush.msra.mxu0 0.0
        %1262 = vmatpush.msra.mxu0 %v1242
        %1263 = vmatmul.f32.gmra.mxu0 %v1245
        %v1264 = vpop.f32.mrf.mxu0
        %v1265 = vadd.f32 0.0, %v1264
        %1266 = vdwg.mxu0
        %1267 = vrot.lane.b32.xlu0 %v684, 104
        %v1268 = vpop.permute.xlu0 %1267
        %v1271 = vsel %vm756, %v1240, 0
        %1273 = vmatpush.msra.mxu0 0.0
        %1274 = vmatpush.msra.mxu0 0.0
        %1275 = vmatpush.msra.mxu0 0.0
        %1276 = vmatpush.msra.mxu0 0.0
        %1277 = vmatpush.msra.mxu0 0.0
        %1278 = vmatpush.msra.mxu0 0.0
        %1279 = vmatpush.msra.mxu0 0.0
        %1280 = vmatpush.msra.mxu0 0.0
        %1281 = vmatpush.msra.mxu0 0.0
        %1282 = vmatpush.msra.mxu0 0.0
        %1283 = vmatpush.msra.mxu0 0.0
        %1284 = vmatpush.msra.mxu0 0.0
        %1285 = vmatpush.msra.mxu0 0.0
        %1286 = vmatpush.msra.mxu0 0.0
        %1287 = vmatpush.msra.mxu0 0.0
        %1288 = vmatpush.msra.mxu0 %v1268
        %1289 = vmatmul.f32.gmra.mxu0 %v1271
        %v1290 = vpop.f32.mrf.mxu0
        %v1291 = vadd.f32 0.0, %v1290
        %1292 = vdwg.mxu0
        %1295 = vrot.lane.b32.xlu0 %v1265, 24
        %v1296 = vpop.permute.xlu0 %1295
        %1297 = vrot.lane.b32.xlu0 %v1291, 24
        %v1298 = vpop.permute.xlu0 %1297
        %vm1301 = vcmask 261312
        %1302 = vst.msk [vmem:[#allocation2] sm:$0xff] %vm1301, %v1296
        %1303 = vst.msk [vmem:[#allocation2 + $0x8] sm:$0xff] %vm1301, %v1298
        %v1304 = vld [vmem:[#allocation2] sm:$0xff]
        %v1305 = vld [vmem:[#allocation2 + $0x8] sm:$0xff]
        %v1306 = vld [vmem:[#allocation9] sm:$0xff]
        %v1307 = vld [vmem:[#allocation9 + $0x8] sm:$0xff]
        %v1308 = vld [vmem:[#allocation9 + $0x10] sm:$0xff]
        %v1309 = vld [vmem:[#allocation9 + $0x18] sm:$0xff]
        %v1310 = vld [vmem:[%s7] sm:$0x1]
        %v1312 = vperm.slane %v1310, 0
        %v1315 = vsel %vm656, %v1304, 0
        %v1318 = vsel %vm656, %v1305, 0
        %1320 = vmatpush.msra.mxu0 0.0
        %1321 = vmatpush.msra.mxu0 0.0
        %1322 = vmatpush.msra.mxu0 0.0
        %1323 = vmatpush.msra.mxu0 0.0
        %1324 = vmatpush.msra.mxu0 0.0
        %1325 = vmatpush.msra.mxu0 0.0
        %1326 = vmatpush.msra.mxu0 0.0
        %1327 = vmatpush.msra.mxu0 0.0
        %1328 = vmatpush.msra.mxu0 0.0
        %1329 = vmatpush.msra.mxu0 0.0
        %1330 = vmatpush.msra.mxu0 0.0
        %1331 = vmatpush.msra.mxu0 0.0
        %1332 = vmatpush.msra.mxu0 %v1309
        %1333 = vmatpush.msra.mxu0 %v1308
        %1334 = vmatpush.msra.mxu0 %v1307
        %1335 = vmatpush.msra.mxu0 %v1306
        %1336 = vmatmul.f32.gmra.mxu0 %v1315
        %v1337 = vpop.f32.mrf.mxu0
        %v1338 = vadd.f32 %v1312, %v1337
        %1339 = vmatmul.f32.gmra.mxu0 %v1318
        %v1340 = vpop.f32.mrf.mxu0
        %v1341 = vadd.f32 %v1312, %v1340
        %1342 = vdwg.mxu0
        %v1343 = vsel %vm656, %v1338, 0.0
        %1344 = vadd.xlane.f32.xlu0 %v1343
        %v1345 = vpop.xlane.xlu0 %1344
        %v1346 = vsel %vm656, %v1341, 0.0
        %1347 = vadd.xlane.f32.xlu0 %v1346
        %v1348 = vpop.xlane.xlu0 %1347
        %v1349 = vrcp.pop 32.0
        %v1350 = vmul.f32 32.0, %v1349
        %v1351 = vsub.f32 1.0, %v1350
        %v1352 = vmul.f32 %v1349, %v1351
        %v1353 = vadd.f32 %v1349, %v1352
        %vm1354 = vweird.f32 %v1349
        %v1355 = vsel %vm1354, %v1349, %v1353
        %v1356 = vmul.f32 %v1345, %v1355
        %v1357 = vmul.f32 %v1348, %v1355
        %v1358 = vsub.f32 %v1338, %v1356
        %v1359 = vsub.f32 %v1341, %v1357
        %v1360 = vmul.f32 %v1358, %v1358
        %v1361 = vmul.f32 %v1359, %v1359
        %v1362 = vsel %vm656, %v1360, 0.0
        %1363 = vadd.xlane.f32.xlu0 %v1362
        %v1364 = vpop.xlane.xlu0 %1363
        %v1365 = vsel %vm656, %v1361, 0.0
        %1366 = vadd.xlane.f32.xlu0 %v1365
        %v1367 = vpop.xlane.xlu0 %1366
        %v1368 = vmul.f32 %v1364, %v1355
        %v1369 = vmul.f32 %v1367, %v1355
        %v1370 = vadd.f32 %v1368, 1e-05
        %v1371 = vadd.f32 %v1369, 1e-05
        %v1372 = vrsqrt.pop %v1370
        %v1373 = vmul.f32 %v1372, %v1370
        %v1374 = vmul.f32 %v1373, %v1372
        %v1375 = vmul.f32 0.5, %v1374
        %v1376 = vsub.f32 1.5, %v1375
        %v1377 = vmul.f32 %v1372, %v1376
        %vm1378 = vweird.f32 %v1370
        %vm1379 = vweird.f32 %v1372
        %vm1380 = vmor %vm1378, %vm1379
        %v1381 = vsel %vm1380, %v1372, %v1377
        %v1382 = vrsqrt.pop %v1371
        %v1383 = vmul.f32 %v1382, %v1371
        %v1384 = vmul.f32 %v1383, %v1382
        %v1385 = vmul.f32 0.5, %v1384
        %v1386 = vsub.f32 1.5, %v1385
        %v1387 = vmul.f32 %v1382, %v1386
        %vm1388 = vweird.f32 %v1371
        %vm1389 = vweird.f32 %v1382
        %vm1390 = vmor %vm1388, %vm1389
        %v1391 = vsel %vm1390, %v1382, %v1387
        %v1392 = vmul.f32 %v1358, %v1381
        %v1393 = vmul.f32 %v1359, %v1391
        %v1394 = vld [vmem:[%s8] sm:$0x1]
        %v1396 = vperm.slane %v1394, 0
        %v1398 = vmul.f32 %v1392, %v1396
        %v1399 = vmul.f32 %v1393, %v1396
        %v1400 = vld [vmem:[%s9] sm:$0x1]
        %v1402 = vperm.slane %v1400, 0
        %v1404 = vadd.f32 %v1398, %v1402
        %v1405 = vadd.f32 %v1399, %v1402
        %v1406 = vld [vmem:[#allocation11] sm:$0xff]
        %v1407 = vld [vmem:[#allocation11 + $0x8] sm:$0xff]
        %v1408 = vld [vmem:[#allocation11 + $0x10] sm:$0xff]
        %v1409 = vld [vmem:[#allocation11 + $0x18] sm:$0xff]
        %v1410 = vld [vmem:[%s11] sm:$0x1]
        %v1412 = vperm.slane %v1410, 0
        %v1415 = vsel %vm656, %v1404, 0
        %v1418 = vsel %vm656, %v1405, 0
        %1420 = vmatpush.msra.mxu0 0.0
        %1421 = vmatpush.msra.mxu0 0.0
        %1422 = vmatpush.msra.mxu0 0.0
        %1423 = vmatpush.msra.mxu0 0.0
        %1424 = vmatpush.msra.mxu0 0.0
        %1425 = vmatpush.msra.mxu0 0.0
        %1426 = vmatpush.msra.mxu0 0.0
        %1427 = vmatpush.msra.mxu0 0.0
        %1428 = vmatpush.msra.mxu0 0.0
        %1429 = vmatpush.msra.mxu0 0.0
        %1430 = vmatpush.msra.mxu0 0.0
        %1431 = vmatpush.msra.mxu0 0.0
        %1432 = vmatpush.msra.mxu0 %v1409
        %1433 = vmatpush.msra.mxu0 %v1408
        %1434 = vmatpush.msra.mxu0 %v1407
        %1435 = vmatpush.msra.mxu0 %v1406
        %1436 = vmatmul.f32.gmra.mxu0 %v1415
        %v1437 = vpop.f32.mrf.mxu0
        %v1438 = vadd.f32 %v1412, %v1437
        %1439 = vmatmul.f32.gmra.mxu0 %v1418
        %v1440 = vpop.f32.mrf.mxu0
        %v1441 = vadd.f32 %v1412, %v1440
        %1442 = vdwg.mxu0
        %v1443 = vmax.f32 %v1438, 0.0
        %v1444 = vmax.f32 %v1441, 0.0
        %v1445 = vld [vmem:[%s12] sm:$0xff]
        %v1446 = vld [vmem:[%s12 + $0x8] sm:$0xff]
        %v1447 = vld [vmem:[%s12 + $0x10] sm:$0xff]
        %v1448 = vld [vmem:[%s12 + $0x18] sm:$0xff]
        %v1449 = vld [vmem:[%s12 + $0x20] sm:$0xff]
        %v1450 = vld [vmem:[%s12 + $0x28] sm:$0xff]
        %v1451 = vld [vmem:[%s12 + $0x30] sm:$0xff]
        %v1452 = vld [vmem:[%s12 + $0x38] sm:$0xff]
        %v1453 = vld [vmem:[%s13] sm:$0x1]
        %v1455 = vperm.slane %v1453, 0
        %vm1457 = vcmask 523264
        %v1459 = vsel %vm1457, %v1443, 0
        %v1462 = vsel %vm1457, %v1444, 0
        %1464 = vmatpush.msra.mxu0 0.0
        %1465 = vmatpush.msra.mxu0 0.0
        %1466 = vmatpush.msra.mxu0 0.0
        %1467 = vmatpush.msra.mxu0 0.0
        %1468 = vmatpush.msra.mxu0 0.0
        %1469 = vmatpush.msra.mxu0 0.0
        %1470 = vmatpush.msra.mxu0 0.0
        %1471 = vmatpush.msra.mxu0 0.0
        %1472 = vmatpush.msra.mxu0 %v1452
        %1473 = vmatpush.msra.mxu0 %v1451
        %1474 = vmatpush.msra.mxu0 %v1450
        %1475 = vmatpush.msra.mxu0 %v1449
        %1476 = vmatpush.msra.mxu0 %v1448
        %1477 = vmatpush.msra.mxu0 %v1447
        %1478 = vmatpush.msra.mxu0 %v1446
        %1479 = vmatpush.msra.mxu0 %v1445
        %1480 = vmatmul.f32.gmra.mxu0 %v1459
        %v1481 = vpop.f32.mrf.mxu0
        %v1482 = vadd.f32 %v1455, %v1481
        %1483 = vmatmul.f32.gmra.mxu0 %v1462
        %v1484 = vpop.f32.mrf.mxu0
        %v1485 = vadd.f32 %v1455, %v1484
        %1486 = vdwg.mxu0
        %v1487 = vsel %vm656, %v1482, 0.0
        %1488 = vadd.xlane.f32.xlu0 %v1487
        %v1489 = vpop.xlane.xlu0 %1488
        %v1490 = vsel %vm656, %v1485, 0.0
        %1491 = vadd.xlane.f32.xlu0 %v1490
        %v1492 = vpop.xlane.xlu0 %1491
        %v1493 = vmul.f32 %v1489, %v1355
        %v1494 = vmul.f32 %v1492, %v1355
        %v1495 = vsub.f32 %v1482, %v1493
        %v1496 = vsub.f32 %v1485, %v1494
        %v1497 = vmul.f32 %v1495, %v1495
        %v1498 = vmul.f32 %v1496, %v1496
        %v1499 = vsel %vm656, %v1497, 0.0
        %1500 = vadd.xlane.f32.xlu0 %v1499
        %v1501 = vpop.xlane.xlu0 %1500
        %v1502 = vsel %vm656, %v1498, 0.0
        %1503 = vadd.xlane.f32.xlu0 %v1502
        %v1504 = vpop.xlane.xlu0 %1503
        %v1505 = vmul.f32 %v1501, %v1355
        %v1506 = vmul.f32 %v1504, %v1355
        %v1507 = vadd.f32 %v1505, 1e-05
        %v1508 = vadd.f32 %v1506, 1e-05
        %v1509 = vrsqrt.pop %v1507
        %v1510 = vmul.f32 %v1509, %v1507
        %v1511 = vmul.f32 %v1510, %v1509
        %v1512 = vmul.f32 0.5, %v1511
        %v1513 = vsub.f32 1.5, %v1512
        %v1514 = vmul.f32 %v1509, %v1513
        %vm1515 = vweird.f32 %v1507
        %vm1516 = vweird.f32 %v1509
        %vm1517 = vmor %vm1515, %vm1516
        %v1518 = vsel %vm1517, %v1509, %v1514
        %v1519 = vrsqrt.pop %v1508
        %v1520 = vmul.f32 %v1519, %v1508
        %v1521 = vmul.f32 %v1520, %v1519
        %v1522 = vmul.f32 0.5, %v1521
        %v1523 = vsub.f32 1.5, %v1522
        %v1524 = vmul.f32 %v1519, %v1523
        %vm1525 = vweird.f32 %v1508
        %vm1526 = vweird.f32 %v1519
        %vm1527 = vmor %vm1525, %vm1526
        %v1528 = vsel %vm1527, %v1519, %v1524
        %v1529 = vmul.f32 %v1495, %v1518
        %v1530 = vmul.f32 %v1496, %v1528
        %v1531 = vld [vmem:[%s14] sm:$0x1]
        %v1533 = vperm.slane %v1531, 0
        %v1535 = vmul.f32 %v1529, %v1533
        %v1536 = vmul.f32 %v1530, %v1533
        %v1537 = vld [vmem:[%s15] sm:$0x1]
        %v1539 = vperm.slane %v1537, 0
        %v1541 = vadd.f32 %v1535, %v1539
        %v1542 = vadd.f32 %v1536, %v1539
        %1543 = vst.msk [vmem:[%s630] sm:$0xff] %vm656, %v1541
        %1544 = vst.msk [vmem:[%s630 + $0x8] sm:$0xff] %vm656, %v1542
        %s1545 = sand.u32 %s392, 1
        %s1546 = scalar_lea.sflag [#allocation5], %s1545
        %s1547 = sand.u32 %s392, 1
        %s1548 = smul.addr %s1547, 16
        %s1549 = scalar_lea.vmem [#allocation12], %s1548
        // Predicated region
        $region105: #{tpu_custom_call.1} parent=83 // pred_check
          %p1550 = pneg %p402
        $region106: #{tpu_custom_call.1} parent=83 // pred_check_branch
          %1552 = sbr.rel (%p1550) target = $region108
        $region107: #{tpu_custom_call.1} parent=83 // pred_region
          %s1553 = smul.u32 2, %s33
          %1555 = vsyncadd %s1546, 0
          %s1556 = smul.addr %s1553, 8
          %s1557 = scalar_lea.hbm %s16, %s1556
          %s1558 = sshll.u32 %s1549, 4
          %s1559 = int_to_ptr.vmem [resolvable:$true] %s1558
          %s1560 = sshll.u32 %s1557, 4
          %s1561 = int_to_ptr.hbm [resolvable:$true] %s1560
          %1566 = dma.vmem_to_hbm [thread:$0]  %s1559, 256, %s1561, %s1546, 128, 128, 8
        $region108: #{tpu_custom_call.1} parent=83 // pred_fallthru
          _
      $region84: #{tpu_custom_call.1} parent=5 // pred_fallthru
        _
      %p1567 = scmp.le.s32.totalorder 2, %s28
      // Predicated region
      $region109: #{tpu_custom_call.1} parent=5 // pred_check
        %p1568 = pneg %p1567
      $region110: #{tpu_custom_call.1} parent=5 // pred_check_branch
        %1570 = sbr.rel (%p1568) target = $region112
      $region111: #{tpu_custom_call.1} parent=5 // pred_region
        %s1571 = ssub.s32 %s28, 2
        // Predicated region
        $region113: #{tpu_custom_call.1} parent=111 // pred_check
          %p1572 = pneg %p408
        $region114: #{tpu_custom_call.1} parent=111 // pred_check_branch
          %1574 = sbr.rel (%p1572) target = $region116
        $region115: #{tpu_custom_call.1} parent=111 // pred_region
          %s1575 = sand.u32 %s393, 1
          %s1576 = scalar_lea.sflag [#allocation5], %s1575
          %s1577 = sand.u32 %s393, 1
          %s1578 = smul.addr %s1577, 16
          %s1579 = scalar_lea.vmem [#allocation12], %s1578
          %1581 = dma.done %s1576, 256
        $region116: #{tpu_custom_call.1} parent=111 // pred_fallthru
          _
      $region112: #{tpu_custom_call.1} parent=5 // pred_fallthru
        _
    $region6: #{tpu_custom_call.1} parent=1 // loop_footer
      %s32 = sadd.s32 1, %s28
    $region7: #{tpu_custom_call.1} parent=1 // loop_footer_branch
      %27 = sbr.rel target = $region3
    $region8: #{tpu_custom_call.1} parent=1 // loop_exit
      _
    %1582 = vsyncpa [#allocation4], 1
    %s1583 = scalar_lea.sflag [#allocation4], 1
    %1584 = vsyncpa %s1583, 1
    %1585 = vsyncpa [#allocation7], 1
    %1586 = vsyncpa [#allocation10], 1
    %1587 = vsyncpa [#allocation5], 1
    %s1588 = scalar_lea.sflag [#allocation5], 1
    %1589 = vsyncpa %s1588, 1

// kernel: tpu_custom_call.1
$region0: #{tpu_custom_call.1}
  #allocation0 [shape = 'u32[]', space=smem, size = 0x4, offset = 0x4, fixed_abs, tag = 'smem constant byte address 0x4 - core index']
  #allocation1 [shape = 'u32[72,128]{1,0:T(1,128)}', space=vmem, size = 0x9000, scoped, tag = 'internal scratch']
  #allocation2 [shape = 'f32[16,32]{1,0:T(8,128)}', space=vmem, size = 0x2000, scoped, tag = 'scratch operand']
  %s0 = inlined_call_operand.vmem [shape: f32[32,32], index: 0, kind: input, shape index: {}]
  %s1 = inlined_call_operand.vmem [shape: f32[32,32], index: 1, kind: input, shape index: {}]
  %s2 = inlined_call_operand.vmem [shape: f32[32,32], index: 2, kind: input, shape index: {}]
  %s3 = inlined_call_operand.hbm [shape: f32[32,32], index: 3, kind: input, shape index: {}]
  %s4 = inlined_call_operand.hbm [shape: f32[32,32], index: 4, kind: input, shape index: {}]
  %s5 = inlined_call_operand.hbm [shape: f32[32,32], index: 5, kind: input, shape index: {}]
  %s6 = inlined_call_operand.hbm [shape: f32[32,32], index: 6, kind: input, shape index: {}]
  %s7 = inlined_call_operand.vmem [shape: f32[1,32], index: 7, kind: input, shape index: {}]
  %s8 = inlined_call_operand.vmem [shape: f32[1,32], index: 8, kind: input, shape index: {}]
  %s9 = inlined_call_operand.vmem [shape: f32[1,32], index: 9, kind: input, shape index: {}]
  %s10 = inlined_call_operand.hbm [shape: f32[32,64], index: 10, kind: input, shape index: {}]
  %s11 = inlined_call_operand.vmem [shape: f32[1,64], index: 11, kind: input, shape index: {}]
  %s12 = inlined_call_operand.vmem [shape: f32[64,32], index: 12, kind: input, shape index: {}]
  %s13 = inlined_call_operand.vmem [shape: f32[1,32], index: 13, kind: input, shape index: {}]
  %s14 = inlined_call_operand.vmem [shape: f32[1,32], index: 14, kind: input, shape index: {}]
  %s15 = inlined_call_operand.vmem [shape: f32[1,32], index: 15, kind: input, shape index: {}]
  %s16 = inlined_call_operand.hbm [shape: f32[32,32], index: 16, kind: output, shape index: {}]
  %s17 = sld [smem:[#allocation0]]
  $region117: #{tpu_custom_call.1} parent=0
    _
  %s19 = ssub.s32 1, %s17
  %s20 = scalar_select 0, %s19, %s17
  $region1: #{tpu_custom_call.1} parent=0
    #allocation3 [shape = 'u8[16384]{0}', space=vmem, size = 0x4000, scoped, tag = 'input window, operand 3, single buffered']
    #allocation4 [shape = 's32[2]{0}', space=sflag, size = 0x8, scoped, tag = 'scoped memory for tpu_custom_call.1']
    #allocation5 [shape = 's32[2]{0}', space=sflag, size = 0x8, scoped, tag = 'scoped memory for tpu_custom_call.1']
    #allocation6 [shape = 'u8[16384]{0}', space=vmem, size = 0x4000, scoped, tag = 'input window, operand 4, single buffered']
    #allocation7 [shape = 's32[1]{0}', space=sflag, size = 0x4, scoped, tag = 'scoped memory for tpu_custom_call.1']
    #allocation8 [shape = 'u8[16384]{0}', space=vmem, size = 0x4000, scoped, tag = 'input window, operand 5, single buffered']
    #allocation9 [shape = 'u8[16384]{0}', space=vmem, size = 0x4000, scoped, tag = 'input window, operand 6, single buffered']
    #allocation10 [shape = 's32[1]{0}', space=sflag, size = 0x4, scoped, tag = 'scoped memory for tpu_custom_call.1']
    #allocation11 [shape = 'u8[16384]{0}', space=vmem, size = 0x4000, scoped, tag = 'input window, operand 10, single buffered']
    #allocation12 [shape = 'u8[16384]{0}', space=vmem, size = 0x4000, scoped, tag = 'output window, operand 0']
    %21 = vsyncpa [#allocation4], 0
    %22 = vsyncpa [#allocation7], 0
    %23 = vsyncpa [#allocation10], 0
    %24 = vsyncpa [#allocation5], 0
    %s25 = scalar_lea.sflag [#allocation5], 1
    %26 = vsyncpa %s25, 0
    loop: start=0, step=1, limit=4
    $region2: #{tpu_custom_call.1} parent=1 // loop_pre_header
      _
    $region3: #{tpu_custom_call.1} parent=1 // loop_header
      %s28 = sphi 0, %s32
      %p29 = scmp.ge.s32.totalorder %s28, 4
      %s38 = sphi 0, %s40
      %s41 = sphi 0, %s38
      %s42 = sphi 0, %s41
      %s58 = sphi 0, %s42
      %s64 = sphi 0, %s66
      %s67 = sphi 0, %s64
      %s68 = sphi 0, %s67
      %s84 = sphi 0, %s68
      %s90 = sphi 0, %s92
      %s93 = sphi 0, %s90
      %s94 = sphi 0, %s93
      %s110 = sphi 0, %s94
      %s114 = sphi 0, %s114
      %s116 = sphi 0, %s114
      %s117 = sphi 0, %s116
      %s131 = sphi 0, %s117
      %s135 = sphi 0, %s135
      %s137 = sphi 0, %s135
      %s138 = sphi 0, %s137
      %s152 = sphi 0, %s138
      %s156 = sphi 0, %s156
      %s158 = sphi 0, %s156
      %s159 = sphi 0, %s158
      %s173 = sphi 0, %s159
      %s177 = sphi 0, %s177
      %s179 = sphi 0, %s177
      %s180 = sphi 0, %s179
      %s194 = sphi 0, %s180
      %s198 = sphi 0, %s198
      %s200 = sphi 0, %s198
      %s201 = sphi 0, %s200
      %s215 = sphi 0, %s201
      %s219 = sphi 0, %s219
      %s221 = sphi 0, %s219
      %s222 = sphi 0, %s221
      %s236 = sphi 0, %s222
      %s240 = sphi 0, %s240
      %s242 = sphi 0, %s240
      %s243 = sphi 0, %s242
      %s257 = sphi 0, %s243
      %s261 = sphi 0, %s261
      %s263 = sphi 0, %s261
      %s264 = sphi 0, %s263
      %s278 = sphi 0, %s264
      %s282 = sphi 0, %s282
      %s284 = sphi 0, %s282
      %s285 = sphi 0, %s284
      %s299 = sphi 0, %s285
      %s303 = sphi 0, %s303
      %s305 = sphi 0, %s303
      %s306 = sphi 0, %s305
      %s320 = sphi 0, %s306
      %s324 = sphi 0, %s324
      %s326 = sphi 0, %s324
      %s327 = sphi 0, %s326
      %s341 = sphi 0, %s327
      %s345 = sphi 0, %s345
      %s347 = sphi 0, %s345
      %s348 = sphi 0, %s347
      %s362 = sphi 0, %s348
      %s366 = sphi 0, %s366
      %s368 = sphi 0, %s366
      %s369 = sphi 0, %s368
      %s383 = sphi 0, %s369
      %s389 = sphi 0, %s391
      %s392 = sphi 0, %s389
      %s393 = sphi 0, %s392
      %s409 = sphi 0, %s393
    $region4: #{tpu_custom_call.1} parent=1 // loop_header_branch
      %31 = sbr.rel (%p29) target = $region8
    $region5: #{tpu_custom_call.1} parent=1 // loop_body
      %s33 = ssub.s32 %s28, 1
      %s34 = ssub.s32 %s28, 2
      %s35 = sadd.s32 %s28, 1
      %s36 = ssub.s32 %s28, %s35
      %p37 = scmp.eq.s32.totalorder %s36, 0
      %s39 = sadd.s32 %s38, 1
      %s40 = scalar_select %p37, %s38, %s39
      %p43 = pneg %p37
      %p44 = scmp.eq.s32.totalorder %s28, 1
      %p45 = por %p43, %p44
      %p46 = scmp.ne.s32.totalorder %s38, %s41
      %p47 = scmp.eq.s32.totalorder %s28, 0
      %p48 = por %p46, %p47
      %p49 = scmp.ne.s32.totalorder %s38, %s41
      %p50 = scmp.eq.s32.totalorder %s33, 1
      %p51 = por %p49, %p50
      %p52 = scmp.ne.s32.totalorder %s41, %s42
      %p53 = scmp.eq.s32.totalorder %s33, 0
      %p54 = por %p52, %p53
      %p55 = scmp.ne.s32.totalorder %s41, %s42
      %p56 = scmp.eq.s32.totalorder %s34, 1
      %p57 = por %p55, %p56
      %p59 = scmp.ne.s32.totalorder %s42, %s58
      %p60 = scmp.eq.s32.totalorder %s34, 0
      %p61 = por %p59, %p60
      %s62 = ssub.s32 %s28, %s35
      %p63 = scmp.eq.s32.totalorder %s62, 0
      %s65 = sadd.s32 %s64, 1
      %s66 = scalar_select %p63, %s64, %s65
      %p69 = pneg %p63
      %p70 = scmp.eq.s32.totalorder %s28, 1
      %p71 = por %p69, %p70
      %p72 = scmp.ne.s32.totalorder %s64, %s67
      %p73 = scmp.eq.s32.totalorder %s28, 0
      %p74 = por %p72, %p73
      %p75 = scmp.ne.s32.totalorder %s64, %s67
      %p76 = scmp.eq.s32.totalorder %s33, 1
      %p77 = por %p75, %p76
      %p78 = scmp.ne.s32.totalorder %s67, %s68
      %p79 = scmp.eq.s32.totalorder %s33, 0
      %p80 = por %p78, %p79
      %p81 = scmp.ne.s32.totalorder %s67, %s68
      %p82 = scmp.eq.s32.totalorder %s34, 1
      %p83 = por %p81, %p82
      %p85 = scmp.ne.s32.totalorder %s68, %s84
      %p86 = scmp.eq.s32.totalorder %s34, 0
      %p87 = por %p85, %p86
      %s88 = ssub.s32 %s28, %s35
      %p89 = scmp.eq.s32.totalorder %s88, 0
      %s91 = sadd.s32 %s90, 1
      %s92 = scalar_select %p89, %s90, %s91
      %p95 = pneg %p89
      %p96 = scmp.eq.s32.totalorder %s28, 1
      %p97 = por %p95, %p96
      %p98 = scmp.ne.s32.totalorder %s90, %s93
      %p99 = scmp.eq.s32.totalorder %s28, 0
      %p100 = por %p98, %p99
      %p101 = scmp.ne.s32.totalorder %s90, %s93
      %p102 = scmp.eq.s32.totalorder %s33, 1
      %p103 = por %p101, %p102
      %p104 = scmp.ne.s32.totalorder %s93, %s94
      %p105 = scmp.eq.s32.totalorder %s33, 0
      %p106 = por %p104, %p105
      %p107 = scmp.ne.s32.totalorder %s93, %s94
      %p108 = scmp.eq.s32.totalorder %s34, 1
      %p109 = por %p107, %p108
      %p111 = scmp.ne.s32.totalorder %s94, %s110
      %p112 = scmp.eq.s32.totalorder %s34, 0
      %p113 = por %p111, %p112
      %s115 = sadd.s32 %s114, 1
      %p118 = scmp.eq.s32.totalorder %s28, 1
      %p119 = scmp.ne.s32.totalorder %s114, %s116
      %p120 = scmp.eq.s32.totalorder %s28, 0
      %p121 = por %p119, %p120
      %p122 = scmp.ne.s32.totalorder %s114, %s116
      %p123 = scmp.eq.s32.totalorder %s33, 1
      %p124 = por %p122, %p123
      %p125 = scmp.ne.s32.totalorder %s116, %s117
      %p126 = scmp.eq.s32.totalorder %s33, 0
      %p127 = por %p125, %p126
      %p128 = scmp.ne.s32.totalorder %s116, %s117
      %p129 = scmp.eq.s32.totalorder %s34, 1
      %p130 = por %p128, %p129
      %p132 = scmp.ne.s32.totalorder %s117, %s131
      %p133 = scmp.eq.s32.totalorder %s34, 0
      %p134 = por %p132, %p133
      %s136 = sadd.s32 %s135, 1
      %p139 = scmp.eq.s32.totalorder %s28, 1
      %p140 = scmp.ne.s32.totalorder %s135, %s137
      %p141 = scmp.eq.s32.totalorder %s28, 0
      %p142 = por %p140, %p141
      %p143 = scmp.ne.s32.totalorder %s135, %s137
      %p144 = scmp.eq.s32.totalorder %s33, 1
      %p145 = por %p143, %p144
      %p146 = scmp.ne.s32.totalorder %s137, %s138
      %p147 = scmp.eq.s32.totalorder %s33, 0
      %p148 = por %p146, %p147
      %p149 = scmp.ne.s32.totalorder %s137, %s138
      %p150 = scmp.eq.s32.totalorder %s34, 1
      %p151 = por %p149, %p150
      %p153 = scmp.ne.s32.totalorder %s138, %s152
      %p154 = scmp.eq.s32.totalorder %s34, 0
      %p155 = por %p153, %p154
      %s157 = sadd.s32 %s156, 1
      %p160 = scmp.eq.s32.totalorder %s28, 1
      %p161 = scmp.ne.s32.totalorder %s156, %s158
      %p162 = scmp.eq.s32.totalorder %s28, 0
      %p163 = por %p161, %p162
      %p164 = scmp.ne.s32.totalorder %s156, %s158
      %p165 = scmp.eq.s32.totalorder %s33, 1
      %p166 = por %p164, %p165
      %p167 = scmp.ne.s32.totalorder %s158, %s159
      %p168 = scmp.eq.s32.totalorder %s33, 0
      %p169 = por %p167, %p168
      %p170 = scmp.ne.s32.totalorder %s158, %s159
      %p171 = scmp.eq.s32.totalorder %s34, 1
      %p172 = por %p170, %p171
      %p174 = scmp.ne.s32.totalorder %s159, %s173
      %p175 = scmp.eq.s32.totalorder %s34, 0
      %p176 = por %p174, %p175
      %s178 = sadd.s32 %s177, 1
      %p181 = scmp.eq.s32.totalorder %s28, 1
      %p182 = scmp.ne.s32.totalorder %s177, %s179
      %p183 = scmp.eq.s32.totalorder %s28, 0
      %p184 = por %p182, %p183
      %p185 = scmp.ne.s32.totalorder %s177, %s179
      %p186 = scmp.eq.s32.totalorder %s33, 1
      %p187 = por %p185, %p186
      %p188 = scmp.ne.s32.totalorder %s179, %s180
      %p189 = scmp.eq.s32.totalorder %s33, 0
      %p190 = por %p188, %p189
      %p191 = scmp.ne.s32.totalorder %s179, %s180
      %p192 = scmp.eq.s32.totalorder %s34, 1
      %p193 = por %p191, %p192
      %p195 = scmp.ne.s32.totalorder %s180, %s194
      %p196 = scmp.eq.s32.totalorder %s34, 0
      %p197 = por %p195, %p196
      %s199 = sadd.s32 %s198, 1
      %p202 = scmp.eq.s32.totalorder %s28, 1
      %p203 = scmp.ne.s32.totalorder %s198, %s200
      %p204 = scmp.eq.s32.totalorder %s28, 0
      %p205 = por %p203, %p204
      %p206 = scmp.ne.s32.totalorder %s198, %s200
      %p207 = scmp.eq.s32.totalorder %s33, 1
      %p208 = por %p206, %p207
      %p209 = scmp.ne.s32.totalorder %s200, %s201
      %p210 = scmp.eq.s32.totalorder %s33, 0
      %p211 = por %p209, %p210
      %p212 = scmp.ne.s32.totalorder %s200, %s201
      %p213 = scmp.eq.s32.totalorder %s34, 1
      %p214 = por %p212, %p213
      %p216 = scmp.ne.s32.totalorder %s201, %s215
      %p217 = scmp.eq.s32.totalorder %s34, 0
      %p218 = por %p216, %p217
      %s220 = sadd.s32 %s219, 1
      %p223 = scmp.eq.s32.totalorder %s28, 1
      %p224 = scmp.ne.s32.totalorder %s219, %s221
      %p225 = scmp.eq.s32.totalorder %s28, 0
      %p226 = por %p224, %p225
      %p227 = scmp.ne.s32.totalorder %s219, %s221
      %p228 = scmp.eq.s32.totalorder %s33, 1
      %p229 = por %p227, %p228
      %p230 = scmp.ne.s32.totalorder %s221, %s222
      %p231 = scmp.eq.s32.totalorder %s33, 0
      %p232 = por %p230, %p231
      %p233 = scmp.ne.s32.totalorder %s221, %s222
      %p234 = scmp.eq.s32.totalorder %s34, 1
      %p235 = por %p233, %p234
      %p237 = scmp.ne.s32.totalorder %s222, %s236
      %p238 = scmp.eq.s32.totalorder %s34, 0
      %p239 = por %p237, %p238
      %s241 = sadd.s32 %s240, 1
      %p244 = scmp.eq.s32.totalorder %s28, 1
      %p245 = scmp.ne.s32.totalorder %s240, %s242
      %p246 = scmp.eq.s32.totalorder %s28, 0
      %p247 = por %p245, %p246
      %p248 = scmp.ne.s32.totalorder %s240, %s242
      %p249 = scmp.eq.s32.totalorder %s33, 1
      %p250 = por %p248, %p249
      %p251 = scmp.ne.s32.totalorder %s242, %s243
      %p252 = scmp.eq.s32.totalorder %s33, 0
      %p253 = por %p251, %p252
      %p254 = scmp.ne.s32.totalorder %s242, %s243
      %p255 = scmp.eq.s32.totalorder %s34, 1
      %p256 = por %p254, %p255
      %p258 = scmp.ne.s32.totalorder %s243, %s257
      %p259 = scmp.eq.s32.totalorder %s34, 0
      %p260 = por %p258, %p259
      %s262 = sadd.s32 %s261, 1
      %p265 = scmp.eq.s32.totalorder %s28, 1
      %p266 = scmp.ne.s32.totalorder %s261, %s263
      %p267 = scmp.eq.s32.totalorder %s28, 0
      %p268 = por %p266, %p267
      %p269 = scmp.ne.s32.totalorder %s261, %s263
      %p270 = scmp.eq.s32.totalorder %s33, 1
      %p271 = por %p269, %p270
      %p272 = scmp.ne.s32.totalorder %s263, %s264
      %p273 = scmp.eq.s32.totalorder %s33, 0
      %p274 = por %p272, %p273
      %p275 = scmp.ne.s32.totalorder %s263, %s264
      %p276 = scmp.eq.s32.totalorder %s34, 1
      %p277 = por %p275, %p276
      %p279 = scmp.ne.s32.totalorder %s264, %s278
      %p280 = scmp.eq.s32.totalorder %s34, 0
      %p281 = por %p279, %p280
      %s283 = sadd.s32 %s282, 1
      %p286 = scmp.eq.s32.totalorder %s28, 1
      %p287 = scmp.ne.s32.totalorder %s282, %s284
      %p288 = scmp.eq.s32.totalorder %s28, 0
      %p289 = por %p287, %p288
      %p290 = scmp.ne.s32.totalorder %s282, %s284
      %p291 = scmp.eq.s32.totalorder %s33, 1
      %p292 = por %p290, %p291
      %p293 = scmp.ne.s32.totalorder %s284, %s285
      %p294 = scmp.eq.s32.totalorder %s33, 0
      %p295 = por %p293, %p294
      %p296 = scmp.ne.s32.totalorder %s284, %s285
      %p297 = scmp.eq.s32.totalorder %s34, 1
      %p298 = por %p296, %p297
      %p300 = scmp.ne.s32.totalorder %s285, %s299
      %p301 = scmp.eq.s32.totalorder %s34, 0
      %p302 = por %p300, %p301
      %s304 = sadd.s32 %s303, 1
      %p307 = scmp.eq.s32.totalorder %s28, 1
      %p308 = scmp.ne.s32.totalorder %s303, %s305
      %p309 = scmp.eq.s32.totalorder %s28, 0
      %p310 = por %p308, %p309
      %p311 = scmp.ne.s32.totalorder %s303, %s305
      %p312 = scmp.eq.s32.totalorder %s33, 1
      %p313 = por %p311, %p312
      %p314 = scmp.ne.s32.totalorder %s305, %s306
      %p315 = scmp.eq.s32.totalorder %s33, 0
      %p316 = por %p314, %p315
      %p317 = scmp.ne.s32.totalorder %s305, %s306
      %p318 = scmp.eq.s32.totalorder %s34, 1
      %p319 = por %p317, %p318
      %p321 = scmp.ne.s32.totalorder %s306, %s320
      %p322 = scmp.eq.s32.totalorder %s34, 0
      %p323 = por %p321, %p322
      %s325 = sadd.s32 %s324, 1
      %p328 = scmp.eq.s32.totalorder %s28, 1
      %p329 = scmp.ne.s32.totalorder %s324, %s326
      %p330 = scmp.eq.s32.totalorder %s28, 0
      %p331 = por %p329, %p330
      %p332 = scmp.ne.s32.totalorder %s324, %s326
      %p333 = scmp.eq.s32.totalorder %s33, 1
      %p334 = por %p332, %p333
      %p335 = scmp.ne.s32.totalorder %s326, %s327
      %p336 = scmp.eq.s32.totalorder %s33, 0
      %p337 = por %p335, %p336
      %p338 = scmp.ne.s32.totalorder %s326, %s327
      %p339 = scmp.eq.s32.totalorder %s34, 1
      %p340 = por %p338, %p339
      %p342 = scmp.ne.s32.totalorder %s327, %s341
      %p343 = scmp.eq.s32.totalorder %s34, 0
      %p344 = por %p342, %p343
      %s346 = sadd.s32 %s345, 1
      %p349 = scmp.eq.s32.totalorder %s28, 1
      %p350 = scmp.ne.s32.totalorder %s345, %s347
      %p351 = scmp.eq.s32.totalorder %s28, 0
      %p352 = por %p350, %p351
      %p353 = scmp.ne.s32.totalorder %s345, %s347
      %p354 = scmp.eq.s32.totalorder %s33, 1
      %p355 = por %p353, %p354
      %p356 = scmp.ne.s32.totalorder %s347, %s348
      %p357 = scmp.eq.s32.totalorder %s33, 0
      %p358 = por %p356, %p357
      %p359 = scmp.ne.s32.totalorder %s347, %s348
      %p360 = scmp.eq.s32.totalorder %s34, 1
      %p361 = por %p359, %p360
      %p363 = scmp.ne.s32.totalorder %s348, %s362
      %p364 = scmp.eq.s32.totalorder %s34, 0
      %p365 = por %p363, %p364
      %s367 = sadd.s32 %s366, 1
      %p370 = scmp.eq.s32.totalorder %s28, 1
      %p371 = scmp.ne.s32.totalorder %s366, %s368
      %p372 = scmp.eq.s32.totalorder %s28, 0
      %p373 = por %p371, %p372
      %p374 = scmp.ne.s32.totalorder %s366, %s368
      %p375 = scmp.eq.s32.totalorder %s33, 1
      %p376 = por %p374, %p375
      %p377 = scmp.ne.s32.totalorder %s368, %s369
      %p378 = scmp.eq.s32.totalorder %s33, 0
      %p379 = por %p377, %p378
      %p380 = scmp.ne.s32.totalorder %s368, %s369
      %p381 = scmp.eq.s32.totalorder %s34, 1
      %p382 = por %p380, %p381
      %p384 = scmp.ne.s32.totalorder %s369, %s383
      %p385 = scmp.eq.s32.totalorder %s34, 0
      %p386 = por %p384, %p385
      %s387 = ssub.s32 %s28, %s35
      %p388 = scmp.eq.s32.totalorder %s387, 0
      %s390 = sadd.s32 %s389, 1
      %s391 = scalar_select %p388, %s389, %s390
      %p394 = pneg %p388
      %p395 = scmp.eq.s32.totalorder %s28, 1
      %p396 = por %p394, %p395
      %p397 = scmp.ne.s32.totalorder %s389, %s392
      %p398 = scmp.eq.s32.totalorder %s28, 0
      %p399 = por %p397, %p398
      %p400 = scmp.ne.s32.totalorder %s389, %s392
      %p401 = scmp.eq.s32.totalorder %s33, 1
      %p402 = por %p400, %p401
      %p403 = scmp.ne.s32.totalorder %s392, %s393
      %p404 = scmp.eq.s32.totalorder %s33, 0
      %p405 = por %p403, %p404
      %p406 = scmp.ne.s32.totalorder %s392, %s393
      %p407 = scmp.eq.s32.totalorder %s34, 1
      %p408 = por %p406, %p407
      %p410 = scmp.ne.s32.totalorder %s393, %s409
      %p411 = scmp.eq.s32.totalorder %s34, 0
      %p412 = por %p410, %p411
      %p413 = scmp.le.s32.totalorder 1, %s28
      %p414 = scmp.lt.s32.totalorder %s28, 3
      %p415 = pnand %p413, %p414
      %p416 = pneg %p415
      // Predicated region
      $region9: #{tpu_custom_call.1} parent=5 // pred_check
        _
      $region10: #{tpu_custom_call.1} parent=5 // pred_check_branch
        %418 = sbr.rel (%p415) target = $region12
      $region11: #{tpu_custom_call.1} parent=5 // pred_region
        %s419 = ssub.s32 %s28, 1
        // Predicated region
        $region13: #{tpu_custom_call.1} parent=11 // pred_check
          %p420 = pneg %p127
        $region14: #{tpu_custom_call.1} parent=11 // pred_check_branch
          %422 = sbr.rel (%p420) target = $region16
        $region15: #{tpu_custom_call.1} parent=11 // pred_region
          %424 = vsyncadd [#allocation4], 0
          %s425 = sshll.u32 %s3, 4
          %s426 = int_to_ptr.hbm [resolvable:$true] %s425
          %s427 = sshll.u32 [#allocation3], 4
          %s428 = int_to_ptr.vmem [resolvable:$true] %s427
          %433 = dma.hbm_to_vmem [thread:$0]  %s426, 512, %s428, [#allocation4], 128, 128, 8
        $region16: #{tpu_custom_call.1} parent=11 // pred_fallthru
          _
        // Predicated region
        $region17: #{tpu_custom_call.1} parent=11 // pred_check
          %p434 = pneg %p148
        $region18: #{tpu_custom_call.1} parent=11 // pred_check_branch
          %436 = sbr.rel (%p434) target = $region20
        $region19: #{tpu_custom_call.1} parent=11 // pred_region
          %438 = vsyncadd [#allocation7], 0
          %s439 = sshll.u32 %s4, 4
          %s440 = int_to_ptr.hbm [resolvable:$true] %s439
          %s441 = sshll.u32 [#allocation6], 4
          %s442 = int_to_ptr.vmem [resolvable:$true] %s441
          %447 = dma.hbm_to_vmem [thread:$0]  %s440, 512, %s442, [#allocation7], 128, 128, 8
        $region20: #{tpu_custom_call.1} parent=11 // pred_fallthru
          _
        // Predicated region
        $region21: #{tpu_custom_call.1} parent=11 // pred_check
          %p448 = pneg %p169
        $region22: #{tpu_custom_call.1} parent=11 // pred_check_branch
          %450 = sbr.rel (%p448) target = $region24
        $region23: #{tpu_custom_call.1} parent=11 // pred_region
          %452 = vsyncadd [#allocation7], 0
          %s453 = sshll.u32 %s5, 4
          %s454 = int_to_ptr.hbm [resolvable:$true] %s453
          %s455 = sshll.u32 [#allocation8], 4
          %s456 = int_to_ptr.vmem [resolvable:$true] %s455
          %461 = dma.hbm_to_vmem [thread:$0]  %s454, 512, %s456, [#allocation7], 128, 128, 8
        $region24: #{tpu_custom_call.1} parent=11 // pred_fallthru
          _
        // Predicated region
        $region25: #{tpu_custom_call.1} parent=11 // pred_check
          %p462 = pneg %p190
        $region26: #{tpu_custom_call.1} parent=11 // pred_check_branch
          %464 = sbr.rel (%p462) target = $region28
        $region27: #{tpu_custom_call.1} parent=11 // pred_region
          %466 = vsyncadd [#allocation10], 0
          %s467 = sshll.u32 %s6, 4
          %s468 = int_to_ptr.hbm [resolvable:$true] %s467
          %s469 = sshll.u32 [#allocation9], 4
          %s470 = int_to_ptr.vmem [resolvable:$true] %s469
          %475 = dma.hbm_to_vmem [thread:$0]  %s468, 512, %s470, [#allocation10], 128, 128, 8
        $region28: #{tpu_custom_call.1} parent=11 // pred_fallthru
          _
        // Predicated region
        $region29: #{tpu_custom_call.1} parent=11 // pred_check
          %p476 = pneg %p211
        $region30: #{tpu_custom_call.1} parent=11 // pred_check_branch
          %478 = sbr.rel (%p476) target = $region32
        $region31: #{tpu_custom_call.1} parent=11 // pred_region
          _
        $region32: #{tpu_custom_call.1} parent=11 // pred_fallthru
          _
        // Predicated region
        $region33: #{tpu_custom_call.1} parent=11 // pred_check
          %p479 = pneg %p232
        $region34: #{tpu_custom_call.1} parent=11 // pred_check_branch
          %481 = sbr.rel (%p479) target = $region36
        $region35: #{tpu_custom_call.1} parent=11 // pred_region
          _
        $region36: #{tpu_custom_call.1} parent=11 // pred_fallthru
          _
        // Predicated region
        $region37: #{tpu_custom_call.1} parent=11 // pred_check
          %p482 = pneg %p253
        $region38: #{tpu_custom_call.1} parent=11 // pred_check_branch
          %484 = sbr.rel (%p482) target = $region40
        $region39: #{tpu_custom_call.1} parent=11 // pred_region
          _
        $region40: #{tpu_custom_call.1} parent=11 // pred_fallthru
          _
        // Predicated region
        $region41: #{tpu_custom_call.1} parent=11 // pred_check
          %p485 = pneg %p274
        $region42: #{tpu_custom_call.1} parent=11 // pred_check_branch
          %487 = sbr.rel (%p485) target = $region44
        $region43: #{tpu_custom_call.1} parent=11 // pred_region
          %489 = vsyncadd [#allocation10], 0
          %s490 = sshll.u32 %s10, 4
          %s491 = int_to_ptr.hbm [resolvable:$true] %s490
          %s492 = sshll.u32 [#allocation11], 4
          %s493 = int_to_ptr.vmem [resolvable:$true] %s492
          %498 = dma.hbm_to_vmem [thread:$0]  %s491, 512, %s493, [#allocation10], 128, 128, 8
        $region44: #{tpu_custom_call.1} parent=11 // pred_fallthru
          _
        // Predicated region
        $region45: #{tpu_custom_call.1} parent=11 // pred_check
          %p499 = pneg %p295
        $region46: #{tpu_custom_call.1} parent=11 // pred_check_branch
          %501 = sbr.rel (%p499) target = $region48
        $region47: #{tpu_custom_call.1} parent=11 // pred_region
          _
        $region48: #{tpu_custom_call.1} parent=11 // pred_fallthru
          _
        // Predicated region
        $region49: #{tpu_custom_call.1} parent=11 // pred_check
          %p502 = pneg %p316
        $region50: #{tpu_custom_call.1} parent=11 // pred_check_branch
          %504 = sbr.rel (%p502) target = $region52
        $region51: #{tpu_custom_call.1} parent=11 // pred_region
          _
        $region52: #{tpu_custom_call.1} parent=11 // pred_fallthru
          _
        // Predicated region
        $region53: #{tpu_custom_call.1} parent=11 // pred_check
          %p505 = pneg %p337
        $region54: #{tpu_custom_call.1} parent=11 // pred_check_branch
          %507 = sbr.rel (%p505) target = $region56
        $region55: #{tpu_custom_call.1} parent=11 // pred_region
          _
        $region56: #{tpu_custom_call.1} parent=11 // pred_fallthru
          _
        // Predicated region
        $region57: #{tpu_custom_call.1} parent=11 // pred_check
          %p508 = pneg %p358
        $region58: #{tpu_custom_call.1} parent=11 // pred_check_branch
          %510 = sbr.rel (%p508) target = $region60
        $region59: #{tpu_custom_call.1} parent=11 // pred_region
          _
        $region60: #{tpu_custom_call.1} parent=11 // pred_fallthru
          _
        // Predicated region
        $region61: #{tpu_custom_call.1} parent=11 // pred_check
          %p511 = pneg %p379
        $region62: #{tpu_custom_call.1} parent=11 // pred_check_branch
          %513 = sbr.rel (%p511) target = $region64
        $region63: #{tpu_custom_call.1} parent=11 // pred_region
          _
        $region64: #{tpu_custom_call.1} parent=11 // pred_fallthru
          _
      $region12: #{tpu_custom_call.1} parent=5 // pred_fallthru
        _
      %p514 = scmp.lt.s32.totalorder %s28, 2
      // Predicated region
      $region65: #{tpu_custom_call.1} parent=5 // pred_check
        %p515 = pneg %p514
      $region66: #{tpu_custom_call.1} parent=5 // pred_check_branch
        %517 = sbr.rel (%p515) target = $region68
      $region67: #{tpu_custom_call.1} parent=5 // pred_region
        // Predicated region
        $region69: #{tpu_custom_call.1} parent=67 // pred_check
          %p518 = pneg %p48
        $region70: #{tpu_custom_call.1} parent=67 // pred_check_branch
          %520 = sbr.rel (%p518) target = $region72
        $region71: #{tpu_custom_call.1} parent=67 // pred_region
          %s521 = smul.u32 2, %s28
          %p522 = scmp.lt.s32.totalorder %s521, 3
          %s523 = scalar_select %p522, %s521, 3
          %s524 = smul.addr %s523, 8
          %s525 = scalar_lea.vmem %s0, %s524
          %s526 = smul.u32 2, %s28
        $region72: #{tpu_custom_call.1} parent=67 // pred_fallthru
          _
        // Predicated region
        $region73: #{tpu_custom_call.1} parent=67 // pred_check
          %p527 = pneg %p74
        $region74: #{tpu_custom_call.1} parent=67 // pred_check_branch
          %529 = sbr.rel (%p527) target = $region76
        $region75: #{tpu_custom_call.1} parent=67 // pred_region
          %s530 = smul.u32 2, %s28
          %p531 = scmp.lt.s32.totalorder %s530, 3
          %s532 = scalar_select %p531, %s530, 3
          %s533 = smul.addr %s532, 8
          %s534 = scalar_lea.vmem %s1, %s533
          %s535 = smul.u32 2, %s28
        $region76: #{tpu_custom_call.1} parent=67 // pred_fallthru
          _
        // Predicated region
        $region77: #{tpu_custom_call.1} parent=67 // pred_check
          %p536 = pneg %p100
        $region78: #{tpu_custom_call.1} parent=67 // pred_check_branch
          %538 = sbr.rel (%p536) target = $region80
        $region79: #{tpu_custom_call.1} parent=67 // pred_region
          %s539 = smul.u32 2, %s28
          %p540 = scmp.lt.s32.totalorder %s539, 3
          %s541 = scalar_select %p540, %s539, 3
          %s542 = smul.addr %s541, 8
          %s543 = scalar_lea.vmem %s2, %s542
          %s544 = smul.u32 2, %s28
        $region80: #{tpu_custom_call.1} parent=67 // pred_fallthru
          _
      $region68: #{tpu_custom_call.1} parent=5 // pred_fallthru
        _
      %p545 = scmp.le.s32.totalorder 1, %s28
      %p546 = scmp.lt.s32.totalorder %s28, 3
      %p547 = pnand %p545, %p546
      %p548 = pneg %p547
      // Predicated region
      $region81: #{tpu_custom_call.1} parent=5 // pred_check
        _
      $region82: #{tpu_custom_call.1} parent=5 // pred_check_branch
        %550 = sbr.rel (%p547) target = $region84
      $region83: #{tpu_custom_call.1} parent=5 // pred_region
        %s551 = ssub.s32 %s28, 1
        // Predicated region
        $region85: #{tpu_custom_call.1} parent=83 // pred_check
          %p552 = pneg %p127
        $region86: #{tpu_custom_call.1} parent=83 // pred_check_branch
          %554 = sbr.rel (%p552) target = $region88
        $region87: #{tpu_custom_call.1} parent=83 // pred_region
          %556 = dma.done [#allocation4], 512
        $region88: #{tpu_custom_call.1} parent=83 // pred_fallthru
          _
        // Predicated region
        $region89: #{tpu_custom_call.1} parent=83 // pred_check
          %p557 = pneg %p148
        $region90: #{tpu_custom_call.1} parent=83 // pred_check_branch
          %559 = sbr.rel (%p557) target = $region92
        $region91: #{tpu_custom_call.1} parent=83 // pred_region
          %561 = dma.done [#allocation7], 512
        $region92: #{tpu_custom_call.1} parent=83 // pred_fallthru
          _
        // Predicated region
        $region93: #{tpu_custom_call.1} parent=83 // pred_check
          %p562 = pneg %p169
        $region94: #{tpu_custom_call.1} parent=83 // pred_check_branch
          %564 = sbr.rel (%p562) target = $region96
        $region95: #{tpu_custom_call.1} parent=83 // pred_region
          %566 = dma.done [#allocation7], 512
        $region96: #{tpu_custom_call.1} parent=83 // pred_fallthru
          _
        // Predicated region
        $region97: #{tpu_custom_call.1} parent=83 // pred_check
          %p567 = pneg %p190
        $region98: #{tpu_custom_call.1} parent=83 // pred_check_branch
          %569 = sbr.rel (%p567) target = $region100
        $region99: #{tpu_custom_call.1} parent=83 // pred_region
          %571 = dma.done [#allocation10], 512
        $region100: #{tpu_custom_call.1} parent=83 // pred_fallthru
          _
        // Predicated region
        $region101: #{tpu_custom_call.1} parent=83 // pred_check
          %p572 = pneg %p274
        $region102: #{tpu_custom_call.1} parent=83 // pred_check_branch
          %574 = sbr.rel (%p572) target = $region104
        $region103: #{tpu_custom_call.1} parent=83 // pred_region
          %576 = dma.done [#allocation10], 512
        $region104: #{tpu_custom_call.1} parent=83 // pred_fallthru
          _
        %s577 = smul.u32 2, %s33
        %p578 = scmp.lt.s32.totalorder %s577, 3
        %s579 = scalar_select %p578, %s577, 3
        %s580 = smul.addr %s579, 8
        %s581 = scalar_lea.vmem %s0, %s580
        %p582 = pneg %p54
        %p583 = pneg %p51
        %s584 = smul.u32 2, %s33
        %p585 = scmp.lt.s32.totalorder %s584, 3
        %s586 = scalar_select %p585, %s584, 3
        %s587 = smul.addr %s586, 8
        %s588 = scalar_lea.vmem %s1, %s587
        %p589 = pneg %p80
        %p590 = pneg %p77
        %s591 = smul.u32 2, %s33
        %p592 = scmp.lt.s32.totalorder %s591, 3
        %s593 = scalar_select %p592, %s591, 3
        %s594 = smul.addr %s593, 8
        %s595 = scalar_lea.vmem %s2, %s594
        %p596 = pneg %p106
        %p597 = pneg %p103
        %p598 = pneg %p127
        %p599 = pneg %p124
        %p600 = pneg %p148
        %p601 = pneg %p145
        %p602 = pneg %p169
        %p603 = pneg %p166
        %p604 = pneg %p190
        %p605 = pneg %p187
        %p606 = pneg %p211
        %p607 = pneg %p208
        %p608 = pneg %p232
        %p609 = pneg %p229
        %p610 = pneg %p253
        %p611 = pneg %p250
        %p612 = pneg %p274
        %p613 = pneg %p271
        %p614 = pneg %p295
        %p615 = pneg %p292
        %p616 = pneg %p316
        %p617 = pneg %p313
        %p618 = pneg %p337
        %p619 = pneg %p334
        %p620 = pneg %p358
        %p621 = pneg %p355
        %p622 = pneg %p379
        %p623 = pneg %p376
        %p624 = pneg %p405
        %p625 = pneg %p402
        %s626 = sand.u32 %s392, 1
        %s627 = scalar_lea.sflag [#allocation5], %s626
        %s628 = sand.u32 %s392, 1
        %s629 = smul.addr %s628, 16
        %s630 = scalar_lea.vmem [#allocation12], %s629
        %s631 = smul.u32 2, %s33
        %p632 = scmp.lt.s32.totalorder %s631, 3
        %s633 = scalar_select %p632, %s631, 3
        %s634 = smul.addr %s633, 8
        %s635 = scalar_lea.vmem %s0, %s634
        %s636 = smul.u32 2, %s33
        %s637 = smul.u32 2, %s33
        %p638 = scmp.lt.s32.totalorder %s637, 3
        %s639 = scalar_select %p638, %s637, 3
        %s640 = smul.addr %s639, 8
        %s641 = scalar_lea.vmem %s1, %s640
        %s642 = smul.u32 2, %s33
        %s643 = smul.u32 2, %s33
        %p644 = scmp.lt.s32.totalorder %s643, 3
        %s645 = scalar_select %p644, %s643, 3
        %s646 = smul.addr %s645, 8
        %s647 = scalar_lea.vmem %s2, %s646
        %s648 = smul.u32 2, %s33
        %s649 = smul.u32 2, %s33
        %v650 = vld [vmem:[%s635] sm:$0xff]
        %v651 = vld [vmem:[%s635 + $0x8] sm:$0xff]
        %v652 = vld [vmem:[#allocation3] sm:$0xff]
        %v653 = vld [vmem:[#allocation3 + $0x8] sm:$0xff]
        %v654 = vld [vmem:[#allocation3 + $0x10] sm:$0xff]
        %v655 = vld [vmem:[#allocation3 + $0x18] sm:$0xff]
        %vm656 = vcmask 261120
        %v658 = vsel %vm656, %v650, 0
        %v661 = vsel %vm656, %v651, 0
        %663 = vmatpush.msra.mxu0 0.0
        %664 = vmatpush.msra.mxu0 0.0
        %665 = vmatpush.msra.mxu0 0.0
        %666 = vmatpush.msra.mxu0 0.0
        %667 = vmatpush.msra.mxu0 0.0
        %668 = vmatpush.msra.mxu0 0.0
        %669 = vmatpush.msra.mxu0 0.0
        %670 = vmatpush.msra.mxu0 0.0
        %671 = vmatpush.msra.mxu0 0.0
        %672 = vmatpush.msra.mxu0 0.0
        %673 = vmatpush.msra.mxu0 0.0
        %674 = vmatpush.msra.mxu0 0.0
        %675 = vmatpush.msra.mxu0 %v655
        %676 = vmatpush.msra.mxu0 %v654
        %677 = vmatpush.msra.mxu0 %v653
        %678 = vmatpush.msra.mxu0 %v652
        %679 = vmatmul.f32.gmra.mxu0 %v658
        %v680 = vpop.f32.mrf.mxu0
        %v681 = vadd.f32 0.0, %v680
        %682 = vmatmul.f32.gmra.mxu0 %v661
        %v683 = vpop.f32.mrf.mxu0
        %v684 = vadd.f32 0.0, %v683
        %685 = vdwg.mxu0
        %v686 = vld [vmem:[%s641] sm:$0xff]
        %v687 = vld [vmem:[%s641 + $0x8] sm:$0xff]
        %v688 = vld [vmem:[#allocation6] sm:$0xff]
        %v689 = vld [vmem:[#allocation6 + $0x8] sm:$0xff]
        %v690 = vld [vmem:[#allocation6 + $0x10] sm:$0xff]
        %v691 = vld [vmem:[#allocation6 + $0x18] sm:$0xff]
        %v693 = vsel %vm656, %v686, 0
        %v696 = vsel %vm656, %v687, 0
        %698 = vmatpush.msra.mxu0 0.0
        %699 = vmatpush.msra.mxu0 0.0
        %700 = vmatpush.msra.mxu0 0.0
        %701 = vmatpush.msra.mxu0 0.0
        %702 = vmatpush.msra.mxu0 0.0
        %703 = vmatpush.msra.mxu0 0.0
        %704 = vmatpush.msra.mxu0 0.0
        %705 = vmatpush.msra.mxu0 0.0
        %706 = vmatpush.msra.mxu0 0.0
        %707 = vmatpush.msra.mxu0 0.0
        %708 = vmatpush.msra.mxu0 0.0
        %709 = vmatpush.msra.mxu0 0.0
        %710 = vmatpush.msra.mxu0 %v691
        %711 = vmatpush.msra.mxu0 %v690
        %712 = vmatpush.msra.mxu0 %v689
        %713 = vmatpush.msra.mxu0 %v688
        %714 = vmatmul.f32.gmra.mxu0 %v693
        %v715 = vpop.f32.mrf.mxu0
        %v716 = vadd.f32 0.0, %v715
        %717 = vmatmul.f32.gmra.mxu0 %v696
        %v718 = vpop.f32.mrf.mxu0
        %v719 = vadd.f32 0.0, %v718
        %720 = vdwg.mxu0
        %v721 = vld [vmem:[%s647] sm:$0xff]
        %v722 = vld [vmem:[%s647 + $0x8] sm:$0xff]
        %v723 = vld [vmem:[#allocation8] sm:$0xff]
        %v724 = vld [vmem:[#allocation8 + $0x8] sm:$0xff]
        %v725 = vld [vmem:[#allocation8 + $0x10] sm:$0xff]
        %v726 = vld [vmem:[#allocation8 + $0x18] sm:$0xff]
        %v728 = vsel %vm656, %v721, 0
        %v731 = vsel %vm656, %v722, 0
        %733 = vmatpush.msra.mxu0 0.0
        %734 = vmatpush.msra.mxu0 0.0
        %735 = vmatpush.msra.mxu0 0.0
        %736 = vmatpush.msra.mxu0 0.0
        %737 = vmatpush.msra.mxu0 0.0
        %738 = vmatpush.msra.mxu0 0.0
        %739 = vmatpush.msra.mxu0 0.0
        %740 = vmatpush.msra.mxu0 0.0
        %741 = vmatpush.msra.mxu0 0.0
        %742 = vmatpush.msra.mxu0 0.0
        %743 = vmatpush.msra.mxu0 0.0
        %744 = vmatpush.msra.mxu0 0.0
        %745 = vmatpush.msra.mxu0 %v726
        %746 = vmatpush.msra.mxu0 %v725
        %747 = vmatpush.msra.mxu0 %v724
        %748 = vmatpush.msra.mxu0 %v723
        %749 = vmatmul.f32.gmra.mxu0 %v728
        %v750 = vpop.f32.mrf.mxu0
        %v751 = vadd.f32 0.0, %v750
        %752 = vmatmul.f32.gmra.mxu0 %v731
        %v753 = vpop.f32.mrf.mxu0
        %v754 = vadd.f32 0.0, %v753
        %755 = vdwg.mxu0
        %vm756 = vcmask 64512
        %v758 = vsel %vm756, %v751, 0
        %v761 = vsel %vm756, %v716, 0
        %763 = vmatpush.xpose.msra.mxu0 0.0
        %764 = vmatpush.xpose.msra.mxu0 0.0
        %765 = vmatpush.xpose.msra.mxu0 0.0
        %766 = vmatpush.xpose.msra.mxu0 0.0
        %767 = vmatpush.xpose.msra.mxu0 0.0
        %768 = vmatpush.xpose.msra.mxu0 0.0
        %769 = vmatpush.xpose.msra.mxu0 0.0
        %770 = vmatpush.xpose.msra.mxu0 0.0
        %771 = vmatpush.xpose.msra.mxu0 0.0
        %772 = vmatpush.xpose.msra.mxu0 0.0
        %773 = vmatpush.xpose.msra.mxu0 0.0
        %774 = vmatpush.xpose.msra.mxu0 0.0
        %775 = vmatpush.xpose.msra.mxu0 0.0
        %776 = vmatpush.xpose.msra.mxu0 0.0
        %777 = vmatpush.xpose.msra.mxu0 0.0
        %778 = vmatpush.xpose.msra.mxu0 %v761
        %779 = vmatmul.f32.gmra.mxu0 %v758
        %v780 = vpop.f32.mrf.mxu0
        %v781 = vadd.f32 0.0, %v780
        %782 = vdwg.mxu0
        %v784 = vsel %vm756, %v754, 0
        %v787 = vsel %vm756, %v719, 0
        %789 = vmatpush.xpose.msra.mxu0 0.0
        %790 = vmatpush.xpose.msra.mxu0 0.0
        %791 = vmatpush.xpose.msra.mxu0 0.0
        %792 = vmatpush.xpose.msra.mxu0 0.0
        %793 = vmatpush.xpose.msra.mxu0 0.0
        %794 = vmatpush.xpose.msra.mxu0 0.0
        %795 = vmatpush.xpose.msra.mxu0 0.0
        %796 = vmatpush.xpose.msra.mxu0 0.0
        %797 = vmatpush.xpose.msra.mxu0 0.0
        %798 = vmatpush.xpose.msra.mxu0 0.0
        %799 = vmatpush.xpose.msra.mxu0 0.0
        %800 = vmatpush.xpose.msra.mxu0 0.0
        %801 = vmatpush.xpose.msra.mxu0 0.0
        %802 = vmatpush.xpose.msra.mxu0 0.0
        %803 = vmatpush.xpose.msra.mxu0 0.0
        %804 = vmatpush.xpose.msra.mxu0 %v787
        %805 = vmatmul.f32.gmra.mxu0 %v784
        %v806 = vpop.f32.mrf.mxu0
        %v807 = vadd.f32 0.0, %v806
        %808 = vdwg.mxu0
        %v809 = vsel %vm756, %v781, -inf
        %810 = vmax.xlane.f32.xlu0 %v809
        %v811 = vpop.xlane.xlu0 %810
        %v812 = vsel %vm756, %v807, -inf
        %813 = vmax.xlane.f32.xlu0 %v812
        %v814 = vpop.xlane.xlu0 %813
        %v815 = vsub.f32 %v781, %v811
        %v816 = vsub.f32 %v807, %v814
        %v817 = vmul.f32 %v815, 1.442695
        %v818 = vpow.pop %v817
        %v819 = vmul.f32 %v816, 1.442695
        %v820 = vpow.pop %v819
        %v821 = vsel %vm756, %v818, 0.0
        %822 = vadd.xlane.f32.xlu0 %v821
        %v823 = vpop.xlane.xlu0 %822
        %v824 = vsel %vm756, %v820, 0.0
        %825 = vadd.xlane.f32.xlu0 %v824
        %v826 = vpop.xlane.xlu0 %825
        %v827 = vrcp.pop %v823
        %v828 = vrcp.pop %v826
        %v829 = vmul.f32 %v818, %v827
        %v830 = vmul.f32 %v820, %v828
        %v832 = vsel %vm756, %v829, 0
        %834 = vmatpush.msra.mxu0 0.0
        %835 = vmatpush.msra.mxu0 0.0
        %836 = vmatpush.msra.mxu0 0.0
        %837 = vmatpush.msra.mxu0 0.0
        %838 = vmatpush.msra.mxu0 0.0
        %839 = vmatpush.msra.mxu0 0.0
        %840 = vmatpush.msra.mxu0 0.0
        %841 = vmatpush.msra.mxu0 0.0
        %842 = vmatpush.msra.mxu0 0.0
        %843 = vmatpush.msra.mxu0 0.0
        %844 = vmatpush.msra.mxu0 0.0
        %845 = vmatpush.msra.mxu0 0.0
        %846 = vmatpush.msra.mxu0 0.0
        %847 = vmatpush.msra.mxu0 0.0
        %848 = vmatpush.msra.mxu0 0.0
        %849 = vmatpush.msra.mxu0 %v681
        %850 = vmatmul.f32.gmra.mxu0 %v832
        %v851 = vpop.f32.mrf.mxu0
        %v852 = vadd.f32 0.0, %v851
        %853 = vdwg.mxu0
        %v855 = vsel %vm756, %v830, 0
        %857 = vmatpush.msra.mxu0 0.0
        %858 = vmatpush.msra.mxu0 0.0
        %859 = vmatpush.msra.mxu0 0.0
        %860 = vmatpush.msra.mxu0 0.0
        %861 = vmatpush.msra.mxu0 0.0
        %862 = vmatpush.msra.mxu0 0.0
        %863 = vmatpush.msra.mxu0 0.0
        %864 = vmatpush.msra.mxu0 0.0
        %865 = vmatpush.msra.mxu0 0.0
        %866 = vmatpush.msra.mxu0 0.0
        %867 = vmatpush.msra.mxu0 0.0
        %868 = vmatpush.msra.mxu0 0.0
        %869 = vmatpush.msra.mxu0 0.0
        %870 = vmatpush.msra.mxu0 0.0
        %871 = vmatpush.msra.mxu0 0.0
        %872 = vmatpush.msra.mxu0 %v684
        %873 = vmatmul.f32.gmra.mxu0 %v855
        %v874 = vpop.f32.mrf.mxu0
        %v875 = vadd.f32 0.0, %v874
        %876 = vdwg.mxu0
        %877 = vst.msk [vmem:[#allocation2] sm:$0xff] %vm756, %v852
        %878 = vst.msk [vmem:[#allocation2 + $0x8] sm:$0xff] %vm756, %v875
        %879 = vrot.lane.b32.xlu0 %v751, 120
        %v880 = vpop.permute.xlu0 %879
        %881 = vrot.lane.b32.xlu0 %v716, 120
        %v882 = vpop.permute.xlu0 %881
        %v883 = vsel %vm756, %v880, 0
        %v885 = vsel %vm756, %v882, 0
        %887 = vmatpush.xpose.msra.mxu0 0.0
        %888 = vmatpush.xpose.msra.mxu0 0.0
        %889 = vmatpush.xpose.msra.mxu0 0.0
        %890 = vmatpush.xpose.msra.mxu0 0.0
        %891 = vmatpush.xpose.msra.mxu0 0.0
        %892 = vmatpush.xpose.msra.mxu0 0.0
        %893 = vmatpush.xpose.msra.mxu0 0.0
        %894 = vmatpush.xpose.msra.mxu0 0.0
        %895 = vmatpush.xpose.msra.mxu0 0.0
        %896 = vmatpush.xpose.msra.mxu0 0.0
        %897 = vmatpush.xpose.msra.mxu0 0.0
        %898 = vmatpush.xpose.msra.mxu0 0.0
        %899 = vmatpush.xpose.msra.mxu0 0.0
        %900 = vmatpush.xpose.msra.mxu0 0.0
        %901 = vmatpush.xpose.msra.mxu0 0.0
        %902 = vmatpush.xpose.msra.mxu0 %v885
        %903 = vmatmul.f32.gmra.mxu0 %v883
        %v904 = vpop.f32.mrf.mxu0
        %v905 = vadd.f32 0.0, %v904
        %906 = vdwg.mxu0
        %907 = vrot.lane.b32.xlu0 %v754, 120
        %v908 = vpop.permute.xlu0 %907
        %909 = vrot.lane.b32.xlu0 %v719, 120
        %v910 = vpop.permute.xlu0 %909
        %v911 = vsel %vm756, %v908, 0
        %v913 = vsel %vm756, %v910, 0
        %915 = vmatpush.xpose.msra.mxu0 0.0
        %916 = vmatpush.xpose.msra.mxu0 0.0
        %917 = vmatpush.xpose.msra.mxu0 0.0
        %918 = vmatpush.xpose.msra.mxu0 0.0
        %919 = vmatpush.xpose.msra.mxu0 0.0
        %920 = vmatpush.xpose.msra.mxu0 0.0
        %921 = vmatpush.xpose.msra.mxu0 0.0
        %922 = vmatpush.xpose.msra.mxu0 0.0
        %923 = vmatpush.xpose.msra.mxu0 0.0
        %924 = vmatpush.xpose.msra.mxu0 0.0
        %925 = vmatpush.xpose.msra.mxu0 0.0
        %926 = vmatpush.xpose.msra.mxu0 0.0
        %927 = vmatpush.xpose.msra.mxu0 0.0
        %928 = vmatpush.xpose.msra.mxu0 0.0
        %929 = vmatpush.xpose.msra.mxu0 0.0
        %930 = vmatpush.xpose.msra.mxu0 %v913
        %931 = vmatmul.f32.gmra.mxu0 %v911
        %v932 = vpop.f32.mrf.mxu0
        %v933 = vadd.f32 0.0, %v932
        %934 = vdwg.mxu0
        %v935 = vsel %vm756, %v905, -inf
        %936 = vmax.xlane.f32.xlu0 %v935
        %v937 = vpop.xlane.xlu0 %936
        %v938 = vsel %vm756, %v933, -inf
        %939 = vmax.xlane.f32.xlu0 %v938
        %v940 = vpop.xlane.xlu0 %939
        %v941 = vsub.f32 %v905, %v937
        %v942 = vsub.f32 %v933, %v940
        %v943 = vmul.f32 %v941, 1.442695
        %v944 = vpow.pop %v943
        %v945 = vmul.f32 %v942, 1.442695
        %v946 = vpow.pop %v945
        %v947 = vsel %vm756, %v944, 0.0
        %948 = vadd.xlane.f32.xlu0 %v947
        %v949 = vpop.xlane.xlu0 %948
        %v950 = vsel %vm756, %v946, 0.0
        %951 = vadd.xlane.f32.xlu0 %v950
        %v952 = vpop.xlane.xlu0 %951
        %v953 = vrcp.pop %v949
        %v954 = vrcp.pop %v952
        %v955 = vmul.f32 %v944, %v953
        %v956 = vmul.f32 %v946, %v954
        %958 = vrot.lane.b32.xlu0 %v681, 120
        %v959 = vpop.permute.xlu0 %958
        %v962 = vsel %vm756, %v955, 0
        %964 = vmatpush.msra.mxu0 0.0
        %965 = vmatpush.msra.mxu0 0.0
        %966 = vmatpush.msra.mxu0 0.0
        %967 = vmatpush.msra.mxu0 0.0
        %968 = vmatpush.msra.mxu0 0.0
        %969 = vmatpush.msra.mxu0 0.0
        %970 = vmatpush.msra.mxu0 0.0
        %971 = vmatpush.msra.mxu0 0.0
        %972 = vmatpush.msra.mxu0 0.0
        %973 = vmatpush.msra.mxu0 0.0
        %974 = vmatpush.msra.mxu0 0.0
        %975 = vmatpush.msra.mxu0 0.0
        %976 = vmatpush.msra.mxu0 0.0
        %977 = vmatpush.msra.mxu0 0.0
        %978 = vmatpush.msra.mxu0 0.0
        %979 = vmatpush.msra.mxu0 %v959
        %980 = vmatmul.f32.gmra.mxu0 %v962
        %v981 = vpop.f32.mrf.mxu0
        %v982 = vadd.f32 0.0, %v981
        %983 = vdwg.mxu0
        %985 = vrot.lane.b32.xlu0 %v684, 120
        %v986 = vpop.permute.xlu0 %985
        %v989 = vsel %vm756, %v956, 0
        %991 = vmatpush.msra.mxu0 0.0
        %992 = vmatpush.msra.mxu0 0.0
        %993 = vmatpush.msra.mxu0 0.0
        %994 = vmatpush.msra.mxu0 0.0
        %995 = vmatpush.msra.mxu0 0.0
        %996 = vmatpush.msra.mxu0 0.0
        %997 = vmatpush.msra.mxu0 0.0
        %998 = vmatpush.msra.mxu0 0.0
        %999 = vmatpush.msra.mxu0 0.0
        %1000 = vmatpush.msra.mxu0 0.0
        %1001 = vmatpush.msra.mxu0 0.0
        %1002 = vmatpush.msra.mxu0 0.0
        %1003 = vmatpush.msra.mxu0 0.0
        %1004 = vmatpush.msra.mxu0 0.0
        %1005 = vmatpush.msra.mxu0 0.0
        %1006 = vmatpush.msra.mxu0 %v986
        %1007 = vmatmul.f32.gmra.mxu0 %v989
        %v1008 = vpop.f32.mrf.mxu0
        %v1009 = vadd.f32 0.0, %v1008
        %1010 = vdwg.mxu0
        %1013 = vrot.lane.b32.xlu0 %v982, 8
        %v1014 = vpop.permute.xlu0 %1013
        %1015 = vrot.lane.b32.xlu0 %v1009, 8
        %v1016 = vpop.permute.xlu0 %1015
        %vm1019 = vcmask 130112
        %1020 = vst.msk [vmem:[#allocation2] sm:$0xff] %vm1019, %v1014
        %1021 = vst.msk [vmem:[#allocation2 + $0x8] sm:$0xff] %vm1019, %v1016
        %1022 = vrot.lane.b32.xlu0 %v751, 112
        %v1023 = vpop.permute.xlu0 %1022
        %1024 = vrot.lane.b32.xlu0 %v716, 112
        %v1025 = vpop.permute.xlu0 %1024
        %v1026 = vsel %vm756, %v1023, 0
        %v1028 = vsel %vm756, %v1025, 0
        %1030 = vmatpush.xpose.msra.mxu0 0.0
        %1031 = vmatpush.xpose.msra.mxu0 0.0
        %1032 = vmatpush.xpose.msra.mxu0 0.0
        %1033 = vmatpush.xpose.msra.mxu0 0.0
        %1034 = vmatpush.xpose.msra.mxu0 0.0
        %1035 = vmatpush.xpose.msra.mxu0 0.0
        %1036 = vmatpush.xpose.msra.mxu0 0.0
        %1037 = vmatpush.xpose.msra.mxu0 0.0
        %1038 = vmatpush.xpose.msra.mxu0 0.0
        %1039 = vmatpush.xpose.msra.mxu0 0.0
        %1040 = vmatpush.xpose.msra.mxu0 0.0
        %1041 = vmatpush.xpose.msra.mxu0 0.0
        %1042 = vmatpush.xpose.msra.mxu0 0.0
        %1043 = vmatpush.xpose.msra.mxu0 0.0
        %1044 = vmatpush.xpose.msra.mxu0 0.0
        %1045 = vmatpush.xpose.msra.mxu0 %v1028
        %1046 = vmatmul.f32.gmra.mxu0 %v1026
        %v1047 = vpop.f32.mrf.mxu0
        %v1048 = vadd.f32 0.0, %v1047
        %1049 = vdwg.mxu0
        %1050 = vrot.lane.b32.xlu0 %v754, 112
        %v1051 = vpop.permute.xlu0 %1050
        %1052 = vrot.lane.b32.xlu0 %v719, 112
        %v1053 = vpop.permute.xlu0 %1052
        %v1054 = vsel %vm756, %v1051, 0
        %v1056 = vsel %vm756, %v1053, 0
        %1058 = vmatpush.xpose.msra.mxu0 0.0
        %1059 = vmatpush.xpose.msra.mxu0 0.0
        %1060 = vmatpush.xpose.msra.mxu0 0.0
        %1061 = vmatpush.xpose.msra.mxu0 0.0
        %1062 = vmatpush.xpose.msra.mxu0 0.0
        %1063 = vmatpush.xpose.msra.mxu0 0.0
        %1064 = vmatpush.xpose.msra.mxu0 0.0
        %1065 = vmatpush.xpose.msra.mxu0 0.0
        %1066 = vmatpush.xpose.msra.mxu0 0.0
        %1067 = vmatpush.xpose.msra.mxu0 0.0
        %1068 = vmatpush.xpose.msra.mxu0 0.0
        %1069 = vmatpush.xpose.msra.mxu0 0.0
        %1070 = vmatpush.xpose.msra.mxu0 0.0
        %1071 = vmatpush.xpose.msra.mxu0 0.0
        %1072 = vmatpush.xpose.msra.mxu0 0.0
        %1073 = vmatpush.xpose.msra.mxu0 %v1056
        %1074 = vmatmul.f32.gmra.mxu0 %v1054
        %v1075 = vpop.f32.mrf.mxu0
        %v1076 = vadd.f32 0.0, %v1075
        %1077 = vdwg.mxu0
        %v1078 = vsel %vm756, %v1048, -inf
        %1079 = vmax.xlane.f32.xlu0 %v1078
        %v1080 = vpop.xlane.xlu0 %1079
        %v1081 = vsel %vm756, %v1076, -inf
        %1082 = vmax.xlane.f32.xlu0 %v1081
        %v1083 = vpop.xlane.xlu0 %1082
        %v1084 = vsub.f32 %v1048, %v1080
        %v1085 = vsub.f32 %v1076, %v1083
        %v1086 = vmul.f32 %v1084, 1.442695
        %v1087 = vpow.pop %v1086
        %v1088 = vmul.f32 %v1085, 1.442695
        %v1089 = vpow.pop %v1088
        %v1090 = vsel %vm756, %v1087, 0.0
        %1091 = vadd.xlane.f32.xlu0 %v1090
        %v1092 = vpop.xlane.xlu0 %1091
        %v1093 = vsel %vm756, %v1089, 0.0
        %1094 = vadd.xlane.f32.xlu0 %v1093
        %v1095 = vpop.xlane.xlu0 %1094
        %v1096 = vrcp.pop %v1092
        %v1097 = vrcp.pop %v1095
        %v1098 = vmul.f32 %v1087, %v1096
        %v1099 = vmul.f32 %v1089, %v1097
        %1100 = vrot.lane.b32.xlu0 %v681, 112
        %v1101 = vpop.permute.xlu0 %1100
        %v1104 = vsel %vm756, %v1098, 0
        %1106 = vmatpush.msra.mxu0 0.0
        %1107 = vmatpush.msra.mxu0 0.0
        %1108 = vmatpush.msra.mxu0 0.0
        %1109 = vmatpush.msra.mxu0 0.0
        %1110 = vmatpush.msra.mxu0 0.0
        %1111 = vmatpush.msra.mxu0 0.0
        %1112 = vmatpush.msra.mxu0 0.0
        %1113 = vmatpush.msra.mxu0 0.0
        %1114 = vmatpush.msra.mxu0 0.0
        %1115 = vmatpush.msra.mxu0 0.0
        %1116 = vmatpush.msra.mxu0 0.0
        %1117 = vmatpush.msra.mxu0 0.0
        %1118 = vmatpush.msra.mxu0 0.0
        %1119 = vmatpush.msra.mxu0 0.0
        %1120 = vmatpush.msra.mxu0 0.0
        %1121 = vmatpush.msra.mxu0 %v1101
        %1122 = vmatmul.f32.gmra.mxu0 %v1104
        %v1123 = vpop.f32.mrf.mxu0
        %v1124 = vadd.f32 0.0, %v1123
        %1125 = vdwg.mxu0
        %1126 = vrot.lane.b32.xlu0 %v684, 112
        %v1127 = vpop.permute.xlu0 %1126
        %v1130 = vsel %vm756, %v1099, 0
        %1132 = vmatpush.msra.mxu0 0.0
        %1133 = vmatpush.msra.mxu0 0.0
        %1134 = vmatpush.msra.mxu0 0.0
        %1135 = vmatpush.msra.mxu0 0.0
        %1136 = vmatpush.msra.mxu0 0.0
        %1137 = vmatpush.msra.mxu0 0.0
        %1138 = vmatpush.msra.mxu0 0.0
        %1139 = vmatpush.msra.mxu0 0.0
        %1140 = vmatpush.msra.mxu0 0.0
        %1141 = vmatpush.msra.mxu0 0.0
        %1142 = vmatpush.msra.mxu0 0.0
        %1143 = vmatpush.msra.mxu0 0.0
        %1144 = vmatpush.msra.mxu0 0.0
        %1145 = vmatpush.msra.mxu0 0.0
        %1146 = vmatpush.msra.mxu0 0.0
        %1147 = vmatpush.msra.mxu0 %v1127
        %1148 = vmatmul.f32.gmra.mxu0 %v1130
        %v1149 = vpop.f32.mrf.mxu0
        %v1150 = vadd.f32 0.0, %v1149
        %1151 = vdwg.mxu0
        %1154 = vrot.lane.b32.xlu0 %v1124, 16
        %v1155 = vpop.permute.xlu0 %1154
        %1156 = vrot.lane.b32.xlu0 %v1150, 16
        %v1157 = vpop.permute.xlu0 %1156
        %vm1160 = vcmask 195712
        %1161 = vst.msk [vmem:[#allocation2] sm:$0xff] %vm1160, %v1155
        %1162 = vst.msk [vmem:[#allocation2 + $0x8] sm:$0xff] %vm1160, %v1157
        %1163 = vrot.lane.b32.xlu0 %v751, 104
        %v1164 = vpop.permute.xlu0 %1163
        %1165 = vrot.lane.b32.xlu0 %v716, 104
        %v1166 = vpop.permute.xlu0 %1165
        %v1167 = vsel %vm756, %v1164, 0
        %v1169 = vsel %vm756, %v1166, 0
        %1171 = vmatpush.xpose.msra.mxu0 0.0
        %1172 = vmatpush.xpose.msra.mxu0 0.0
        %1173 = vmatpush.xpose.msra.mxu0 0.0
        %1174 = vmatpush.xpose.msra.mxu0 0.0
        %1175 = vmatpush.xpose.msra.mxu0 0.0
        %1176 = vmatpush.xpose.msra.mxu0 0.0
        %1177 = vmatpush.xpose.msra.mxu0 0.0
        %1178 = vmatpush.xpose.msra.mxu0 0.0
        %1179 = vmatpush.xpose.msra.mxu0 0.0
        %1180 = vmatpush.xpose.msra.mxu0 0.0
        %1181 = vmatpush.xpose.msra.mxu0 0.0
        %1182 = vmatpush.xpose.msra.mxu0 0.0
        %1183 = vmatpush.xpose.msra.mxu0 0.0
        %1184 = vmatpush.xpose.msra.mxu0 0.0
        %1185 = vmatpush.xpose.msra.mxu0 0.0
        %1186 = vmatpush.xpose.msra.mxu0 %v1169
        %1187 = vmatmul.f32.gmra.mxu0 %v1167
        %v1188 = vpop.f32.mrf.mxu0
        %v1189 = vadd.f32 0.0, %v1188
        %1190 = vdwg.mxu0
        %1191 = vrot.lane.b32.xlu0 %v754, 104
        %v1192 = vpop.permute.xlu0 %1191
        %1193 = vrot.lane.b32.xlu0 %v719, 104
        %v1194 = vpop.permute.xlu0 %1193
        %v1195 = vsel %vm756, %v1192, 0
        %v1197 = vsel %vm756, %v1194, 0
        %1199 = vmatpush.xpose.msra.mxu0 0.0
        %1200 = vmatpush.xpose.msra.mxu0 0.0
        %1201 = vmatpush.xpose.msra.mxu0 0.0
        %1202 = vmatpush.xpose.msra.mxu0 0.0
        %1203 = vmatpush.xpose.msra.mxu0 0.0
        %1204 = vmatpush.xpose.msra.mxu0 0.0
        %1205 = vmatpush.xpose.msra.mxu0 0.0
        %1206 = vmatpush.xpose.msra.mxu0 0.0
        %1207 = vmatpush.xpose.msra.mxu0 0.0
        %1208 = vmatpush.xpose.msra.mxu0 0.0
        %1209 = vmatpush.xpose.msra.mxu0 0.0
        %1210 = vmatpush.xpose.msra.mxu0 0.0
        %1211 = vmatpush.xpose.msra.mxu0 0.0
        %1212 = vmatpush.xpose.msra.mxu0 0.0
        %1213 = vmatpush.xpose.msra.mxu0 0.0
        %1214 = vmatpush.xpose.msra.mxu0 %v1197
        %1215 = vmatmul.f32.gmra.mxu0 %v1195
        %v1216 = vpop.f32.mrf.mxu0
        %v1217 = vadd.f32 0.0, %v1216
        %1218 = vdwg.mxu0
        %v1219 = vsel %vm756, %v1189, -inf
        %1220 = vmax.xlane.f32.xlu0 %v1219
        %v1221 = vpop.xlane.xlu0 %1220
        %v1222 = vsel %vm756, %v1217, -inf
        %1223 = vmax.xlane.f32.xlu0 %v1222
        %v1224 = vpop.xlane.xlu0 %1223
        %v1225 = vsub.f32 %v1189, %v1221
        %v1226 = vsub.f32 %v1217, %v1224
        %v1227 = vmul.f32 %v1225, 1.442695
        %v1228 = vpow.pop %v1227
        %v1229 = vmul.f32 %v1226, 1.442695
        %v1230 = vpow.pop %v1229
        %v1231 = vsel %vm756, %v1228, 0.0
        %1232 = vadd.xlane.f32.xlu0 %v1231
        %v1233 = vpop.xlane.xlu0 %1232
        %v1234 = vsel %vm756, %v1230, 0.0
        %1235 = vadd.xlane.f32.xlu0 %v1234
        %v1236 = vpop.xlane.xlu0 %1235
        %v1237 = vrcp.pop %v1233
        %v1238 = vrcp.pop %v1236
        %v1239 = vmul.f32 %v1228, %v1237
        %v1240 = vmul.f32 %v1230, %v1238
        %1241 = vrot.lane.b32.xlu0 %v681, 104
        %v1242 = vpop.permute.xlu0 %1241
        %v1245 = vsel %vm756, %v1239, 0
        %1247 = vmatpush.msra.mxu0 0.0
        %1248 = vmatpush.msra.mxu0 0.0
        %1249 = vmatpush.msra.mxu0 0.0
        %1250 = vmatpush.msra.mxu0 0.0
        %1251 = vmatpush.msra.mxu0 0.0
        %1252 = vmatpush.msra.mxu0 0.0
        %1253 = vmatpush.msra.mxu0 0.0
        %1254 = vmatpush.msra.mxu0 0.0
        %1255 = vmatpush.msra.mxu0 0.0
        %1256 = vmatpush.msra.mxu0 0.0
        %1257 = vmatpush.msra.mxu0 0.0
        %1258 = vmatpush.msra.mxu0 0.0
        %1259 = vmatpush.msra.mxu0 0.0
        %1260 = vmatpush.msra.mxu0 0.0
        %1261 = vmatpush.msra.mxu0 0.0
        %1262 = vmatpush.msra.mxu0 %v1242
        %1263 = vmatmul.f32.gmra.mxu0 %v1245
        %v1264 = vpop.f32.mrf.mxu0
        %v1265 = vadd.f32 0.0, %v1264
        %1266 = vdwg.mxu0
        %1267 = vrot.lane.b32.xlu0 %v684, 104
        %v1268 = vpop.permute.xlu0 %1267
        %v1271 = vsel %vm756, %v1240, 0
        %1273 = vmatpush.msra.mxu0 0.0
        %1274 = vmatpush.msra.mxu0 0.0
        %1275 = vmatpush.msra.mxu0 0.0
        %1276 = vmatpush.msra.mxu0 0.0
        %1277 = vmatpush.msra.mxu0 0.0
        %1278 = vmatpush.msra.mxu0 0.0
        %1279 = vmatpush.msra.mxu0 0.0
        %1280 = vmatpush.msra.mxu0 0.0
        %1281 = vmatpush.msra.mxu0 0.0
        %1282 = vmatpush.msra.mxu0 0.0
        %1283 = vmatpush.msra.mxu0 0.0
        %1284 = vmatpush.msra.mxu0 0.0
        %1285 = vmatpush.msra.mxu0 0.0
        %1286 = vmatpush.msra.mxu0 0.0
        %1287 = vmatpush.msra.mxu0 0.0
        %1288 = vmatpush.msra.mxu0 %v1268
        %1289 = vmatmul.f32.gmra.mxu0 %v1271
        %v1290 = vpop.f32.mrf.mxu0
        %v1291 = vadd.f32 0.0, %v1290
        %1292 = vdwg.mxu0
        %1295 = vrot.lane.b32.xlu0 %v1265, 24
        %v1296 = vpop.permute.xlu0 %1295
        %1297 = vrot.lane.b32.xlu0 %v1291, 24
        %v1298 = vpop.permute.xlu0 %1297
        %vm1301 = vcmask 261312
        %1302 = vst.msk [vmem:[#allocation2] sm:$0xff] %vm1301, %v1296
        %1303 = vst.msk [vmem:[#allocation2 + $0x8] sm:$0xff] %vm1301, %v1298
        %v1304 = vld [vmem:[#allocation2] sm:$0xff]
        %v1305 = vld [vmem:[#allocation2 + $0x8] sm:$0xff]
        %v1306 = vld [vmem:[#allocation9] sm:$0xff]
        %v1307 = vld [vmem:[#allocation9 + $0x8] sm:$0xff]
        %v1308 = vld [vmem:[#allocation9 + $0x10] sm:$0xff]
        %v1309 = vld [vmem:[#allocation9 + $0x18] sm:$0xff]
        %v1310 = vld [vmem:[%s7] sm:$0x1]
        %v1312 = vperm.slane %v1310, 0
        %v1315 = vsel %vm656, %v1304, 0
        %v1318 = vsel %vm656, %v1305, 0
        %1320 = vmatpush.msra.mxu0 0.0
        %1321 = vmatpush.msra.mxu0 0.0
        %1322 = vmatpush.msra.mxu0 0.0
        %1323 = vmatpush.msra.mxu0 0.0
        %1324 = vmatpush.msra.mxu0 0.0
        %1325 = vmatpush.msra.mxu0 0.0
        %1326 = vmatpush.msra.mxu0 0.0
        %1327 = vmatpush.msra.mxu0 0.0
        %1328 = vmatpush.msra.mxu0 0.0
        %1329 = vmatpush.msra.mxu0 0.0
        %1330 = vmatpush.msra.mxu0 0.0
        %1331 = vmatpush.msra.mxu0 0.0
        %1332 = vmatpush.msra.mxu0 %v1309
        %1333 = vmatpush.msra.mxu0 %v1308
        %1334 = vmatpush.msra.mxu0 %v1307
        %1335 = vmatpush.msra.mxu0 %v1306
        %1336 = vmatmul.f32.gmra.mxu0 %v1315
        %v1337 = vpop.f32.mrf.mxu0
        %v1338 = vadd.f32 %v1312, %v1337
        %1339 = vmatmul.f32.gmra.mxu0 %v1318
        %v1340 = vpop.f32.mrf.mxu0
        %v1341 = vadd.f32 %v1312, %v1340
        %1342 = vdwg.mxu0
        %v1343 = vsel %vm656, %v1338, 0.0
        %1344 = vadd.xlane.f32.xlu0 %v1343
        %v1345 = vpop.xlane.xlu0 %1344
        %v1346 = vsel %vm656, %v1341, 0.0
        %1347 = vadd.xlane.f32.xlu0 %v1346
        %v1348 = vpop.xlane.xlu0 %1347
        %v1349 = vrcp.pop 32.0
        %v1350 = vmul.f32 32.0, %v1349
        %v1351 = vsub.f32 1.0, %v1350
        %v1352 = vmul.f32 %v1349, %v1351
        %v1353 = vadd.f32 %v1349, %v1352
        %vm1354 = vweird.f32 %v1349
        %v1355 = vsel %vm1354, %v1349, %v1353
        %v1356 = vmul.f32 %v1345, %v1355
        %v1357 = vmul.f32 %v1348, %v1355
        %v1358 = vsub.f32 %v1338, %v1356
        %v1359 = vsub.f32 %v1341, %v1357
        %v1360 = vmul.f32 %v1358, %v1358
        %v1361 = vmul.f32 %v1359, %v1359
        %v1362 = vsel %vm656, %v1360, 0.0
        %1363 = vadd.xlane.f32.xlu0 %v1362
        %v1364 = vpop.xlane.xlu0 %1363
        %v1365 = vsel %vm656, %v1361, 0.0
        %1366 = vadd.xlane.f32.xlu0 %v1365
        %v1367 = vpop.xlane.xlu0 %1366
        %v1368 = vmul.f32 %v1364, %v1355
        %v1369 = vmul.f32 %v1367, %v1355
        %v1370 = vadd.f32 %v1368, 1e-05
        %v1371 = vadd.f32 %v1369, 1e-05
        %v1372 = vrsqrt.pop %v1370
        %v1373 = vmul.f32 %v1372, %v1370
        %v1374 = vmul.f32 %v1373, %v1372
        %v1375 = vmul.f32 0.5, %v1374
        %v1376 = vsub.f32 1.5, %v1375
        %v1377 = vmul.f32 %v1372, %v1376
        %vm1378 = vweird.f32 %v1370
        %vm1379 = vweird.f32 %v1372
        %vm1380 = vmor %vm1378, %vm1379
        %v1381 = vsel %vm1380, %v1372, %v1377
        %v1382 = vrsqrt.pop %v1371
        %v1383 = vmul.f32 %v1382, %v1371
        %v1384 = vmul.f32 %v1383, %v1382
        %v1385 = vmul.f32 0.5, %v1384
        %v1386 = vsub.f32 1.5, %v1385
        %v1387 = vmul.f32 %v1382, %v1386
        %vm1388 = vweird.f32 %v1371
        %vm1389 = vweird.f32 %v1382
        %vm1390 = vmor %vm1388, %vm1389
        %v1391 = vsel %vm1390, %v1382, %v1387
        %v1392 = vmul.f32 %v1358, %v1381
        %v1393 = vmul.f32 %v1359, %v1391
        %v1394 = vld [vmem:[%s8] sm:$0x1]
        %v1396 = vperm.slane %v1394, 0
        %v1398 = vmul.f32 %v1392, %v1396
        %v1399 = vmul.f32 %v1393, %v1396
        %v1400 = vld [vmem:[%s9] sm:$0x1]
        %v1402 = vperm.slane %v1400, 0
        %v1404 = vadd.f32 %v1398, %v1402
        %v1405 = vadd.f32 %v1399, %v1402
        %v1406 = vld [vmem:[#allocation11] sm:$0xff]
        %v1407 = vld [vmem:[#allocation11 + $0x8] sm:$0xff]
        %v1408 = vld [vmem:[#allocation11 + $0x10] sm:$0xff]
        %v1409 = vld [vmem:[#allocation11 + $0x18] sm:$0xff]
        %v1410 = vld [vmem:[%s11] sm:$0x1]
        %v1412 = vperm.slane %v1410, 0
        %v1415 = vsel %vm656, %v1404, 0
        %v1418 = vsel %vm656, %v1405, 0
        %1420 = vmatpush.msra.mxu0 0.0
        %1421 = vmatpush.msra.mxu0 0.0
        %1422 = vmatpush.msra.mxu0 0.0
        %1423 = vmatpush.msra.mxu0 0.0
        %1424 = vmatpush.msra.mxu0 0.0
        %1425 = vmatpush.msra.mxu0 0.0
        %1426 = vmatpush.msra.mxu0 0.0
        %1427 = vmatpush.msra.mxu0 0.0
        %1428 = vmatpush.msra.mxu0 0.0
        %1429 = vmatpush.msra.mxu0 0.0
        %1430 = vmatpush.msra.mxu0 0.0
        %1431 = vmatpush.msra.mxu0 0.0
        %1432 = vmatpush.msra.mxu0 %v1409
        %1433 = vmatpush.msra.mxu0 %v1408
        %1434 = vmatpush.msra.mxu0 %v1407
        %1435 = vmatpush.msra.mxu0 %v1406
        %1436 = vmatmul.f32.gmra.mxu0 %v1415
        %v1437 = vpop.f32.mrf.mxu0
        %v1438 = vadd.f32 %v1412, %v1437
        %1439 = vmatmul.f32.gmra.mxu0 %v1418
        %v1440 = vpop.f32.mrf.mxu0
        %v1441 = vadd.f32 %v1412, %v1440
        %1442 = vdwg.mxu0
        %v1443 = vmax.f32 %v1438, 0.0
        %v1444 = vmax.f32 %v1441, 0.0
        %v1445 = vld [vmem:[%s12] sm:$0xff]
        %v1446 = vld [vmem:[%s12 + $0x8] sm:$0xff]
        %v1447 = vld [vmem:[%s12 + $0x10] sm:$0xff]
        %v1448 = vld [vmem:[%s12 + $0x18] sm:$0xff]
        %v1449 = vld [vmem:[%s12 + $0x20] sm:$0xff]
        %v1450 = vld [vmem:[%s12 + $0x28] sm:$0xff]
        %v1451 = vld [vmem:[%s12 + $0x30] sm:$0xff]
        %v1452 = vld [vmem:[%s12 + $0x38] sm:$0xff]
        %v1453 = vld [vmem:[%s13] sm:$0x1]
        %v1455 = vperm.slane %v1453, 0
        %vm1457 = vcmask 523264
        %v1459 = vsel %vm1457, %v1443, 0
        %v1462 = vsel %vm1457, %v1444, 0
        %1464 = vmatpush.msra.mxu0 0.0
        %1465 = vmatpush.msra.mxu0 0.0
        %1466 = vmatpush.msra.mxu0 0.0
        %1467 = vmatpush.msra.mxu0 0.0
        %1468 = vmatpush.msra.mxu0 0.0
        %1469 = vmatpush.msra.mxu0 0.0
        %1470 = vmatpush.msra.mxu0 0.0
        %1471 = vmatpush.msra.mxu0 0.0
        %1472 = vmatpush.msra.mxu0 %v1452
        %1473 = vmatpush.msra.mxu0 %v1451
        %1474 = vmatpush.msra.mxu0 %v1450
        %1475 = vmatpush.msra.mxu0 %v1449
        %1476 = vmatpush.msra.mxu0 %v1448
        %1477 = vmatpush.msra.mxu0 %v1447
        %1478 = vmatpush.msra.mxu0 %v1446
        %1479 = vmatpush.msra.mxu0 %v1445
        %1480 = vmatmul.f32.gmra.mxu0 %v1459
        %v1481 = vpop.f32.mrf.mxu0
        %v1482 = vadd.f32 %v1455, %v1481
        %1483 = vmatmul.f32.gmra.mxu0 %v1462
        %v1484 = vpop.f32.mrf.mxu0
        %v1485 = vadd.f32 %v1455, %v1484
        %1486 = vdwg.mxu0
        %v1487 = vsel %vm656, %v1482, 0.0
        %1488 = vadd.xlane.f32.xlu0 %v1487
        %v1489 = vpop.xlane.xlu0 %1488
        %v1490 = vsel %vm656, %v1485, 0.0
        %1491 = vadd.xlane.f32.xlu0 %v1490
        %v1492 = vpop.xlane.xlu0 %1491
        %v1493 = vmul.f32 %v1489, %v1355
        %v1494 = vmul.f32 %v1492, %v1355
        %v1495 = vsub.f32 %v1482, %v1493
        %v1496 = vsub.f32 %v1485, %v1494
        %v1497 = vmul.f32 %v1495, %v1495
        %v1498 = vmul.f32 %v1496, %v1496
        %v1499 = vsel %vm656, %v1497, 0.0
        %1500 = vadd.xlane.f32.xlu0 %v1499
        %v1501 = vpop.xlane.xlu0 %1500
        %v1502 = vsel %vm656, %v1498, 0.0
        %1503 = vadd.xlane.f32.xlu0 %v1502
        %v1504 = vpop.xlane.xlu0 %1503
        %v1505 = vmul.f32 %v1501, %v1355
        %v1506 = vmul.f32 %v1504, %v1355
        %v1507 = vadd.f32 %v1505, 1e-05
        %v1508 = vadd.f32 %v1506, 1e-05
        %v1509 = vrsqrt.pop %v1507
        %v1510 = vmul.f32 %v1509, %v1507
        %v1511 = vmul.f32 %v1510, %v1509
        %v1512 = vmul.f32 0.5, %v1511
        %v1513 = vsub.f32 1.5, %v1512
        %v1514 = vmul.f32 %v1509, %v1513
        %vm1515 = vweird.f32 %v1507
        %vm1516 = vweird.f32 %v1509
        %vm1517 = vmor %vm1515, %vm1516
        %v1518 = vsel %vm1517, %v1509, %v1514
        %v1519 = vrsqrt.pop %v1508
        %v1520 = vmul.f32 %v1519, %v1508
        %v1521 = vmul.f32 %v1520, %v1519
        %v1522 = vmul.f32 0.5, %v1521
        %v1523 = vsub.f32 1.5, %v1522
        %v1524 = vmul.f32 %v1519, %v1523
        %vm1525 = vweird.f32 %v1508
        %vm1526 = vweird.f32 %v1519
        %vm1527 = vmor %vm1525, %vm1526
        %v1528 = vsel %vm1527, %v1519, %v1524
        %v1529 = vmul.f32 %v1495, %v1518
        %v1530 = vmul.f32 %v1496, %v1528
        %v1531 = vld [vmem:[%s14] sm:$0x1]
        %v1533 = vperm.slane %v1531, 0
        %v1535 = vmul.f32 %v1529, %v1533
        %v1536 = vmul.f32 %v1530, %v1533
        %v1537 = vld [vmem:[%s15] sm:$0x1]
        %v1539 = vperm.slane %v1537, 0
        %v1541 = vadd.f32 %v1535, %v1539
        %v1542 = vadd.f32 %v1536, %v1539
        %1543 = vst.msk [vmem:[%s630] sm:$0xff] %vm656, %v1541
        %1544 = vst.msk [vmem:[%s630 + $0x8] sm:$0xff] %vm656, %v1542
        %s1545 = sand.u32 %s392, 1
        %s1546 = scalar_lea.sflag [#allocation5], %s1545
        %s1547 = sand.u32 %s392, 1
        %s1548 = smul.addr %s1547, 16
        %s1549 = scalar_lea.vmem [#allocation12], %s1548
        // Predicated region
        $region105: #{tpu_custom_call.1} parent=83 // pred_check
          %p1550 = pneg %p402
        $region106: #{tpu_custom_call.1} parent=83 // pred_check_branch
          %1552 = sbr.rel (%p1550) target = $region108
        $region107: #{tpu_custom_call.1} parent=83 // pred_region
          %s1553 = smul.u32 2, %s33
          %1555 = vsyncadd %s1546, 0
          %s1556 = smul.addr %s1553, 8
          %s1557 = scalar_lea.hbm %s16, %s1556
          %s1558 = sshll.u32 %s1549, 4
          %s1559 = int_to_ptr.vmem [resolvable:$true] %s1558
          %s1560 = sshll.u32 %s1557, 4
          %s1561 = int_to_ptr.hbm [resolvable:$true] %s1560
          %1566 = dma.vmem_to_hbm [thread:$0]  %s1559, 256, %s1561, %s1546, 128, 128, 8
        $region108: #{tpu_custom_call.1} parent=83 // pred_fallthru
          _
      $region84: #{tpu_custom_call.1} parent=5 // pred_fallthru
        _
      %p1567 = scmp.le.s32.totalorder 2, %s28
      // Predicated region
      $region109: #{tpu_custom_call.1} parent=5 // pred_check
        %p1568 = pneg %p1567
      $region110: #{tpu_custom_call.1} parent=5 // pred_check_branch
        %1570 = sbr.rel (%p1568) target = $region112
      $region111: #{tpu_custom_call.1} parent=5 // pred_region
        %s1571 = ssub.s32 %s28, 2
        // Predicated region
        $region113: #{tpu_custom_call.1} parent=111 // pred_check
          %p1572 = pneg %p408
        $region114: #{tpu_custom_call.1} parent=111 // pred_check_branch
          %1574 = sbr.rel (%p1572) target = $region116
        $region115: #{tpu_custom_call.1} parent=111 // pred_region
          %s1575 = sand.u32 %s393, 1
          %s1576 = scalar_lea.sflag [#allocation5], %s1575
          %s1577 = sand.u32 %s393, 1
          %s1578 = smul.addr %s1577, 16
          %s1579 = scalar_lea.vmem [#allocation12], %s1578
          %1581 = dma.done %s1576, 256
        $region116: #{tpu_custom_call.1} parent=111 // pred_fallthru
          _
      $region112: #{tpu_custom_call.1} parent=5 // pred_fallthru
        _
    $region6: #{tpu_custom_call.1} parent=1 // loop_footer
      %s32 = sadd.s32 1, %s28
    $region7: #{tpu_custom_call.1} parent=1 // loop_footer_branch
      %27 = sbr.rel target = $region3
    $region8: #{tpu_custom_call.1} parent=1 // loop_exit
      _
    %1582 = vsyncpa [#allocation4], 1
    %s1583 = scalar_lea.sflag [#allocation4], 1
    %1584 = vsyncpa %s1583, 1
    %1585 = vsyncpa [#allocation7], 1
    %1586 = vsyncpa [#allocation10], 1
    %1587 = vsyncpa [#allocation5], 1
    %s1588 = scalar_lea.sflag [#allocation5], 1
    %1589 = vsyncpa %s1588, 1

</llo_original>
